<compile_context>
chip_gen: v6e
topology: v6e:2x2x1
jax: 0.10.0
libtpu: 0.0.40
codegen_flags: <defaults>
</compile_context>

<pallas_src>
import jax
import jax.numpy as jnp
import numpy as np
from jax import lax
from jax.experimental import pallas as pl
from jax.experimental.pallas import tpu as pltpu


# ---------------------------------------------------------------------------
# Kernel
# ---------------------------------------------------------------------------
def _make_kernel(cfg):
    Hp = cfg["H_pad"]
    depth = cfg["control_rnn_depth"]
    n_enc = cfg["n_enc_linears"]
    n_dec = cfg["n_dec_linears"]
    T = cfg["T"]
    TB = cfg["TB"]
    G = 4 * Hp
    cdt = jnp.bfloat16          # MXU input dtype; accumulation stays f32

    def lstm_cell(gates, c):
        # gate columns packed (i, f, o | g): one sigmoid + one tanh per cell
        sfo = jax.nn.sigmoid(gates[:, :3 * Hp])
        g = jnp.tanh(gates[:, 3 * Hp:])
        i_g = sfo[:, :Hp]
        f_g = sfo[:, Hp:2 * Hp]
        o_g = sfo[:, 2 * Hp:]
        c_new = f_g * c + i_g * g
        h_new = o_g * jnp.tanh(c_new)
        return h_new, c_new

    def kernel(*refs):
        it = iter(refs)
        x_ref = next(it)                                   # (TB, state_dim)
        u_ref = next(it)                                   # (T, TB, Din) time-major
        d_ref = next(it)                                   # (T, TB, 1)   time-major
        lens_ref = next(it)                                # (TB, 1) int32
        enc_W = [next(it) for _ in range(n_enc)]
        enc_b = [next(it) for _ in range(n_enc)]
        w0_in = next(it)                                   # (Din, 4Hp)
        w0_h = next(it)                                    # (Hp, 4Hp)
        wcat = [next(it) for _ in range(depth - 1)]        # (2Hp, 4Hp)
        lstm_b = [next(it) for _ in range(depth)]          # (1, 4Hp)
        dec_W = [next(it) for _ in range(n_dec)]
        dec_b = [next(it) for _ in range(n_dec)]
        out_ref = next(it)                                 # (TB, OUT_PAD)
        uproj_ref = next(it)                               # (T, TB, 4Hp) f32 scratch

        # ---- x_dnn encoder: Linear -> tanh -> ... -> Linear ----
        h = x_ref[...]
        for i in range(n_enc):
            h = jnp.dot(h.astype(cdt), enc_W[i][...],
                        preferred_element_type=jnp.float32) + enc_b[i][...]
            if i < n_enc - 1:
                h = jnp.tanh(h)
        # h0 split per LSTM layer, c0 = 0 (padded hidden columns are exact zeros)
        hs0 = tuple(h[:, l * Hp:(l + 1) * Hp] for l in range(depth))
        cs0 = tuple(jnp.zeros((TB, Hp), jnp.float32) for _ in range(depth))

        # ---- hoisted layer-0 input projection over ALL timesteps (one matmul) ----
        u_all = u_ref[...]                                 # (T, TB, Din)
        din = u_all.shape[-1]
        up = jnp.dot(u_all.reshape(T * TB, din).astype(cdt), w0_in[...],
                     preferred_element_type=jnp.float32) + lstm_b[0][...]
        uproj_ref[...] = up.reshape(T, TB, G)

        lens_col = lens_ref[...]                           # (TB, 1) int32

        # ---- LSTM recurrence + streaming interp / length-select ----
        def step(t, carry):
            hs, cs, sel = carry
            hs = list(hs)
            cs = list(cs)
            h_prev_top = hs[-1]                            # h[:, t-1] (or h0[-1] at t=0)

            # layer 0: input projection precomputed, only recurrent matmul left
            gates = uproj_ref[t] + jnp.dot(
                hs[0].astype(cdt), w0_h[...], preferred_element_type=jnp.float32)
            hs[0], cs[0] = lstm_cell(gates, cs[0])

            # deeper layers: fused [h_below, h_self] @ [Wih; Whh]
            for l in range(1, depth):
                xin = jnp.concatenate([hs[l - 1], hs[l]], axis=1).astype(cdt)
                gates = jnp.dot(xin, wcat[l - 1][...],
                                preferred_element_type=jnp.float32) + lstm_b[l][...]
                hs[l], cs[l] = lstm_cell(gates, cs[l])

            h_top = hs[-1]
            d_t = d_ref[t]                                 # (TB, 1)
            enc_t = (1.0 - d_t) * h_prev_top + d_t * h_top
            sel = sel + jnp.where(lens_col - 1 == t, enc_t, 0.0)
            return tuple(hs), tuple(cs), sel

        init = (hs0, cs0, jnp.zeros((TB, Hp), jnp.float32))
        _, _, sel = lax.fori_loop(0, T, step, init, unroll=(T <= 16))

        # ---- u_dnn decoder ----
        y = sel
        for i in range(n_dec):
            y = jnp.dot(y.astype(cdt), dec_W[i][...],
                        preferred_element_type=jnp.float32) + dec_b[i][...]
            if i < n_dec - 1:
                y = jnp.tanh(y)
        out_ref[...] = y                                   # lane-dense (TB, 128) store

    return kernel


# ---------------------------------------------------------------------------
# Parameter packing: gate reorder (i,f,g,o)->(i,f,o,g), H->H_pad zero padding,
# Wih/Whh fusion for layers > 0, bf16 weights, lane-padded decoder output.
# All padding is with exact zeros, so the math is unchanged.
# ---------------------------------------------------------------------------
def pack_params(params, cfg):
    H = cfg["control_rnn_size"]
    Hp = cfg["H_pad"]
    depth = cfg["control_rnn_depth"]
    OUT_PAD = cfg["out_pad"]
    wdt = jnp.bfloat16

    def pad_last_blocks(a, blk, blk_pad, nblk):
        parts = []
        for k in range(nblk):
            piece = a[..., k * blk:(k + 1) * blk]
            zpad = jnp.zeros(a.shape[:-1] + (blk_pad - blk,), a.dtype)
            parts.append(jnp.concatenate([piece, zpad], axis=-1))
        return jnp.concatenate(parts, axis=-1)

    def pad_rows(a, rows_pad):
        return jnp.pad(a, ((0, rows_pad - a.shape[0]), (0, 0)))

    def reorder_pad_gates(a):
        # (..., 4H) in PyTorch order (i, f, g, o) -> (i, f, o, g), each block H->Hp
        blocks = [a[..., k * H:(k + 1) * H] for k in range(4)]
        blocks = [blocks[0], blocks[1], blocks[3], blocks[2]]
        out = []
        for b in blocks:
            zpad = jnp.zeros(a.shape[:-1] + (Hp - H,), a.dtype)
            out.append(jnp.concatenate([b, zpad], axis=-1))
        return jnp.concatenate(out, axis=-1)

    # encoder: only the final layer's output columns get per-layer-block padding
    enc_W = list(params["enc_W"])
    enc_b = list(params["enc_b"])
    enc_W[-1] = pad_last_blocks(enc_W[-1], H, Hp, depth)
    enc_b[-1] = pad_last_blocks(enc_b[-1], H, Hp, depth)
    enc_W = [w.astype(wdt) for w in enc_W]
    enc_b = [b.astype(jnp.float32) for b in enc_b]

    # LSTM
    w0_in = reorder_pad_gates(params["lstm_Wih"][0]).astype(wdt)
    w0_h = reorder_pad_gates(pad_rows(params["lstm_Whh"][0], Hp)).astype(wdt)
    lstm_b = [reorder_pad_gates(b).astype(jnp.float32) for b in params["lstm_b"]]
    wcat = []
    for l in range(1, depth):
        wih = reorder_pad_gates(pad_rows(params["lstm_Wih"][l], Hp))
        whh = reorder_pad_gates(pad_rows(params["lstm_Whh"][l], Hp))
        wcat.append(jnp.concatenate([wih, whh], axis=0).astype(wdt))

    # decoder: first layer input rows H->Hp, last layer output cols -> OUT_PAD
    dec_W = list(params["dec_W"])
    dec_b = list(params["dec_b"])
    dec_W[0] = pad_rows(dec_W[0], Hp)
    dec_W[-1] = jnp.pad(dec_W[-1], ((0, 0), (0, OUT_PAD - dec_W[-1].shape[1])))
    dec_b[-1] = jnp.pad(dec_b[-1], ((0, 0), (0, OUT_PAD - dec_b[-1].shape[1])))
    dec_W = [w.astype(wdt) for w in dec_W]
    dec_b = [b.astype(jnp.float32) for b in dec_b]

    return dict(enc_W=enc_W, enc_b=enc_b, w0_in=w0_in, w0_h=w0_h,
                wcat=wcat, lstm_b=lstm_b, dec_W=dec_W, dec_b=dec_b)


# ---------------------------------------------------------------------------
# Wrapper
# ---------------------------------------------------------------------------
def causal_flow_forward(packed, x, rnn_input, deltas, lens, cfg):
    B, T, _ = rnn_input.shape
    assert T == cfg["T"]
    TB = cfg["TB"]
    Hp = cfg["H_pad"]
    OUT_PAD = cfg["out_pad"]
    B_pad = ((B + TB - 1) // TB) * TB
    nb = B_pad // TB

    def pad_b(a):
        return jnp.pad(a, [(0, B_pad - B)] + [(0, 0)] * (a.ndim - 1))

    x_p = pad_b(x)                                          # (B_pad, S)
    u_tm = jnp.transpose(pad_b(rnn_input), (1, 0, 2))       # (T, B_pad, Din)
    d_tm = jnp.transpose(pad_b(deltas), (1, 0, 2))          # (T, B_pad, 1)
    lens_c = jnp.clip(lens.astype(jnp.int32), 1, T)         # guard lens==0 / lens>T
    lens_p = jnp.pad(lens_c, (0, B_pad - B),
                     constant_values=1).reshape(B_pad, 1)   # (B_pad, 1)

    flat_params = (list(packed["enc_W"]) + list(packed["enc_b"])
                   + [packed["w0_in"], packed["w0_h"]] + list(packed["wcat"])
                   + list(packed["lstm_b"])
                   + list(packed["dec_W"]) + list(packed["dec_b"]))

    in_specs = [
        pl.BlockSpec((TB, x_p.shape[1]), lambda i: (i, 0)),
        pl.BlockSpec((T, TB, u_tm.shape[2]), lambda i: (0, i, 0)),
        pl.BlockSpec((T, TB, 1), lambda i: (0, i, 0)),
        pl.BlockSpec((TB, 1), lambda i: (i, 0)),
    ] + [pl.BlockSpec(w.shape, lambda i: (0, 0)) for w in flat_params]

    out = pl.pallas_call(
        _make_kernel(cfg),
        out_shape=jax.ShapeDtypeStruct((B_pad, OUT_PAD), jnp.float32),
        grid_spec=pltpu.PrefetchScalarGridSpec(
            num_scalar_prefetch=0,
            grid=(nb,),
            in_specs=in_specs,
            out_specs=pl.BlockSpec((TB, OUT_PAD), lambda i: (i, 0)),
            scratch_shapes=[pltpu.VMEM((T, TB, 4 * Hp), jnp.float32)],
        ),
        compiler_params=pltpu.CompilerParams(
            dimension_semantics=("parallel",)),
    )(x_p, u_tm, d_tm, lens_p, *flat_params)

    return out[:B, :cfg["state_dim"]]


# ---------------------------------------------------------------------------
# Synthetic parameters (shapes follow the PyTorch __init__) and reference
# ---------------------------------------------------------------------------
def init_params(key, cfg):
    state_dim = cfg["state_dim"]
    control_dim = cfg["control_dim"]
    output_dim = cfg["output_dim"]
    H = cfg["control_rnn_size"]
    depth = cfg["control_rnn_depth"]
    enc_size, enc_depth = cfg["encoder_size"], cfg["encoder_depth"]
    dec_size, dec_depth = cfg["decoder_size"], cfg["decoder_depth"]

    x_dnn_osz = H * depth
    u_dnn_isz = H

    def dense(k, fan_in, fan_out):
        k1, k2 = jax.random.split(k)
        W = jax.random.normal(k1, (fan_in, fan_out), jnp.float32) * 0.2
        b = jax.random.normal(k2, (1, fan_out), jnp.float32) * 0.1
        return W, b

    keys = iter(jax.random.split(key, 64))

    enc_sizes = [state_dim] + [enc_size * x_dnn_osz] * enc_depth + [x_dnn_osz]
    enc_W, enc_b = [], []
    for fi, fo in zip(enc_sizes[:-1], enc_sizes[1:]):
        W, b = dense(next(keys), fi, fo)
        enc_W.append(W); enc_b.append(b)

    lstm_Wih, lstm_Whh, lstm_b = [], [], []
    for l in range(depth):
        in_l = (control_dim + 1) if l == 0 else H
        Wih, _ = dense(next(keys), in_l, 4 * H)
        Whh, _ = dense(next(keys), H, 4 * H)
        b = jax.random.normal(next(keys), (1, 4 * H), jnp.float32) * 0.1
        lstm_Wih.append(Wih); lstm_Whh.append(Whh); lstm_b.append(b)

    dec_sizes = [u_dnn_isz] + [dec_size * u_dnn_isz] * dec_depth + [output_dim]
    dec_W, dec_b = [], []
    for fi, fo in zip(dec_sizes[:-1], dec_sizes[1:]):
        W, b = dense(next(keys), fi, fo)
        dec_W.append(W); dec_b.append(b)

    return {"enc_W": enc_W, "enc_b": enc_b,
            "lstm_Wih": lstm_Wih, "lstm_Whh": lstm_Whh, "lstm_b": lstm_b,
            "dec_W": dec_W, "dec_b": dec_b}


def reference_forward(params, x, rnn_input, deltas, lens, cfg):
    """Pure-JAX reference mirroring the PyTorch forward (bf16 MXU inputs,
    f32 accumulation — same numerics as the kernel)."""
    H = cfg["control_rnn_size"]
    depth = cfg["control_rnn_depth"]
    T = cfg["T"]
    c = jnp.bfloat16

    def mm(a, W):
        return jnp.dot(a.astype(c), W.astype(c), preferred_element_type=jnp.float32)

    h = x
    for i, (W, b) in enumerate(zip(params["enc_W"], params["enc_b"])):
        h = mm(h, W) + b
        if i < len(params["enc_W"]) - 1:
            h = jnp.tanh(h)
    hs = [h[:, l * H:(l + 1) * H] for l in range(depth)]
    cs = [jnp.zeros_like(hs[l]) for l in range(depth)]
    h0_last = hs[-1]

    outs = []
    for t in range(T):
        inp = rnn_input[:, t, :]
        for l in range(depth):
            g = (mm(inp, params["lstm_Wih"][l]) + mm(hs[l], params["lstm_Whh"][l])
                 + params["lstm_b"][l])
            i_g = jax.nn.sigmoid(g[:, :H]); f_g = jax.nn.sigmoid(g[:, H:2 * H])
            g_g = jnp.tanh(g[:, 2 * H:3 * H]); o_g = jax.nn.sigmoid(g[:, 3 * H:])
            cs[l] = f_g * cs[l] + i_g * g_g
            hs[l] = o_g * jnp.tanh(cs[l])
            inp = hs[l]
        outs.append(hs[-1])
    h_seq = jnp.stack(outs, axis=1)
    h_shift = jnp.concatenate([h0_last[:, None, :], h_seq[:, :-1, :]], axis=1)
    encoded = (1.0 - deltas) * h_shift + deltas * h_seq
    lens_c = jnp.clip(lens, 1, T)
    sel = encoded[jnp.arange(encoded.shape[0]), lens_c - 1, :]

    y = sel
    for i, (W, b) in enumerate(zip(params["dec_W"], params["dec_b"])):
        y = mm(y, W) + b
        if i < len(params["dec_W"]) - 1:
            y = jnp.tanh(y)
    return y[:, :cfg["state_dim"]]


if __name__ == "__main__":
    cfg = dict(
        state_dim=4,
        control_dim=3,
        output_dim=6,
        control_rnn_size=16,
        control_rnn_depth=2,
        encoder_size=2,
        encoder_depth=2,
        decoder_size=2,
        decoder_depth=2,
        T=8,
    )
    cfg["n_enc_linears"] = cfg["encoder_depth"] + 1
    cfg["n_dec_linears"] = cfg["decoder_depth"] + 1
    cfg["H_pad"] = ((cfg["control_rnn_size"] + 31) // 32) * 32   # 4*H_pad % 128 == 0
    cfg["out_pad"] = ((cfg["output_dim"] + 127) // 128) * 128    # lane-dense output
    cfg["TB"] = 8                                                # batch tile (sublanes)

    B, T = 2, cfg["T"]
    key = jax.random.PRNGKey(0)
    kp, kx, ku, kd = jax.random.split(key, 4)

    params = init_params(kp, cfg)
    packed = pack_params(params, cfg)

    x = jax.random.normal(kx, (B, cfg["state_dim"]), jnp.float32)
    rnn_input = jax.random.normal(ku, (B, T, cfg["control_dim"] + 1), jnp.float32)
    deltas = jax.random.uniform(kd, (B, T, 1), jnp.float32)
    lens = jnp.array([T, T - 3], dtype=jnp.int32)   # variable sequence lengths

    out = causal_flow_forward(packed, x, rnn_input, deltas, lens, cfg)
    out = jax.block_until_ready(out)

    ref = reference_forward(params, x, rnn_input, deltas, lens, cfg)
    assert out.shape == (B, cfg["state_dim"])
    assert np.all(np.isfinite(np.asarray(out)))
    np.testing.assert_allclose(np.asarray(out), np.asarray(ref), atol=5e-3, rtol=5e-3)

    print("KERNEL_OK")
</pallas_src>

<mosaic_0001>
module attributes {stable_mosaic.version = 11 : i64} {
  func.func @kernel(%arg0: i32, %arg1: memref<8x4xf32, #tpu.memory_space<vmem>>, %arg2: memref<8x8x4xf32, #tpu.memory_space<vmem>>, %arg3: memref<8x8x1xf32, #tpu.memory_space<vmem>>, %arg4: memref<8x1xi32, #tpu.memory_space<vmem>>, %arg5: memref<4x64xbf16, #tpu.memory_space<vmem>>, %arg6: memref<64x64xbf16, #tpu.memory_space<vmem>>, %arg7: memref<64x64xbf16, #tpu.memory_space<vmem>>, %arg8: memref<1x64xf32, #tpu.memory_space<vmem>>, %arg9: memref<1x64xf32, #tpu.memory_space<vmem>>, %arg10: memref<1x64xf32, #tpu.memory_space<vmem>>, %arg11: memref<4x128xbf16, #tpu.memory_space<vmem>>, %arg12: memref<32x128xbf16, #tpu.memory_space<vmem>>, %arg13: memref<64x128xbf16, #tpu.memory_space<vmem>>, %arg14: memref<1x128xf32, #tpu.memory_space<vmem>>, %arg15: memref<1x128xf32, #tpu.memory_space<vmem>>, %arg16: memref<32x32xbf16, #tpu.memory_space<vmem>>, %arg17: memref<32x32xbf16, #tpu.memory_space<vmem>>, %arg18: memref<32x128xbf16, #tpu.memory_space<vmem>>, %arg19: memref<1x32xf32, #tpu.memory_space<vmem>>, %arg20: memref<1x32xf32, #tpu.memory_space<vmem>>, %arg21: memref<1x128xf32, #tpu.memory_space<vmem>>, %arg22: memref<8x128xf32, #tpu.memory_space<vmem>>, %arg23: memref<8x8x128xf32, #tpu.memory_space<vmem>>) attributes {dimension_semantics = [#tpu.dimension_semantics<parallel>], iteration_bounds = array<i64: 1>, scalar_prefetch = 0 : i64, scratch_operands = 1 : i64, tpu.core_type = #tpu.core_type<tc>, window_params = [{transform_indices = @transform_0, window_bounds = array<i64: 8, 4>}, {transform_indices = @transform_1, window_bounds = array<i64: 8, 8, 4>}, {transform_indices = @transform_2, window_bounds = array<i64: 8, 8, 1>}, {transform_indices = @transform_3, window_bounds = array<i64: 8, 1>}, {pipeline_mode = #tpu.pipeline_mode<synchronous>, transform_indices = @transform_4, window_bounds = array<i64: 4, 64>}, {pipeline_mode = #tpu.pipeline_mode<synchronous>, transform_indices = @transform_5, window_bounds = array<i64: 64, 64>}, {pipeline_mode = #tpu.pipeline_mode<synchronous>, transform_indices = @transform_6, window_bounds = array<i64: 64, 64>}, {pipeline_mode = #tpu.pipeline_mode<synchronous>, transform_indices = @transform_7, window_bounds = array<i64: 1, 64>}, {pipeline_mode = #tpu.pipeline_mode<synchronous>, transform_indices = @transform_8, window_bounds = array<i64: 1, 64>}, {pipeline_mode = #tpu.pipeline_mode<synchronous>, transform_indices = @transform_9, window_bounds = array<i64: 1, 64>}, {pipeline_mode = #tpu.pipeline_mode<synchronous>, transform_indices = @transform_10, window_bounds = array<i64: 4, 128>}, {pipeline_mode = #tpu.pipeline_mode<synchronous>, transform_indices = @transform_11, window_bounds = array<i64: 32, 128>}, {pipeline_mode = #tpu.pipeline_mode<synchronous>, transform_indices = @transform_12, window_bounds = array<i64: 64, 128>}, {pipeline_mode = #tpu.pipeline_mode<synchronous>, transform_indices = @transform_13, window_bounds = array<i64: 1, 128>}, {pipeline_mode = #tpu.pipeline_mode<synchronous>, transform_indices = @transform_14, window_bounds = array<i64: 1, 128>}, {pipeline_mode = #tpu.pipeline_mode<synchronous>, transform_indices = @transform_15, window_bounds = array<i64: 32, 32>}, {pipeline_mode = #tpu.pipeline_mode<synchronous>, transform_indices = @transform_16, window_bounds = array<i64: 32, 32>}, {pipeline_mode = #tpu.pipeline_mode<synchronous>, transform_indices = @transform_17, window_bounds = array<i64: 32, 128>}, {pipeline_mode = #tpu.pipeline_mode<synchronous>, transform_indices = @transform_18, window_bounds = array<i64: 1, 32>}, {pipeline_mode = #tpu.pipeline_mode<synchronous>, transform_indices = @transform_19, window_bounds = array<i64: 1, 32>}, {pipeline_mode = #tpu.pipeline_mode<synchronous>, transform_indices = @transform_20, window_bounds = array<i64: 1, 128>}, {transform_indices = @transform_21, window_bounds = array<i64: 8, 128>}]} {
    %c0 = arith.constant 0 : index
    %c0_0 = arith.constant 0 : index
    %0 = vector.load %arg1[%c0, %c0_0] : memref<8x4xf32, #tpu.memory_space<vmem>>, vector<8x4xf32>
    %1 = arith.truncf %0 : vector<8x4xf32> to vector<8x4xbf16>
    %c0_1 = arith.constant 0 : index
    %c0_2 = arith.constant 0 : index
    %2 = vector.load %arg5[%c0_1, %c0_2] : memref<4x64xbf16, #tpu.memory_space<vmem>>, vector<4x64xbf16>
    %cst = arith.constant dense<0.000000e+00> : vector<8x64xf32>
    %3 = tpu.matmul %1, %2, %cst {dimension_numbers = #tpu.dot_dimension_numbers<[1], [0], [0], [1], [0, 0, 1, 1], [], []>} : vector<8x4xbf16>, vector<4x64xbf16>, vector<8x64xf32> -> vector<8x64xf32>
    %c0_3 = arith.constant 0 : index
    %c0_4 = arith.constant 0 : index
    %4 = vector.load %arg8[%c0_3, %c0_4] : memref<1x64xf32, #tpu.memory_space<vmem>>, vector<1x64xf32>
    %5 = vector.broadcast %4 : vector<1x64xf32> to vector<8x64xf32>
    %6 = arith.addf %3, %5 : vector<8x64xf32>
    %7 = math.tanh %6 : vector<8x64xf32>
    %8 = arith.truncf %7 : vector<8x64xf32> to vector<8x64xbf16>
    %c0_5 = arith.constant 0 : index
    %c0_6 = arith.constant 0 : index
    %9 = vector.load %arg6[%c0_5, %c0_6] : memref<64x64xbf16, #tpu.memory_space<vmem>>, vector<64x64xbf16>
    %cst_7 = arith.constant dense<0.000000e+00> : vector<8x64xf32>
    %10 = tpu.matmul %8, %9, %cst_7 {dimension_numbers = #tpu.dot_dimension_numbers<[1], [0], [0], [1], [0, 0, 1, 1], [], []>} : vector<8x64xbf16>, vector<64x64xbf16>, vector<8x64xf32> -> vector<8x64xf32>
    %c0_8 = arith.constant 0 : index
    %c0_9 = arith.constant 0 : index
    %11 = vector.load %arg9[%c0_8, %c0_9] : memref<1x64xf32, #tpu.memory_space<vmem>>, vector<1x64xf32>
    %12 = vector.broadcast %11 : vector<1x64xf32> to vector<8x64xf32>
    %13 = arith.addf %10, %12 : vector<8x64xf32>
    %14 = math.tanh %13 : vector<8x64xf32>
    %15 = arith.truncf %14 : vector<8x64xf32> to vector<8x64xbf16>
    %c0_10 = arith.constant 0 : index
    %c0_11 = arith.constant 0 : index
    %16 = vector.load %arg7[%c0_10, %c0_11] : memref<64x64xbf16, #tpu.memory_space<vmem>>, vector<64x64xbf16>
    %cst_12 = arith.constant dense<0.000000e+00> : vector<8x64xf32>
    %17 = tpu.matmul %15, %16, %cst_12 {dimension_numbers = #tpu.dot_dimension_numbers<[1], [0], [0], [1], [0, 0, 1, 1], [], []>} : vector<8x64xbf16>, vector<64x64xbf16>, vector<8x64xf32> -> vector<8x64xf32>
    %c0_13 = arith.constant 0 : index
    %c0_14 = arith.constant 0 : index
    %18 = vector.load %arg10[%c0_13, %c0_14] : memref<1x64xf32, #tpu.memory_space<vmem>>, vector<1x64xf32>
    %19 = vector.broadcast %18 : vector<1x64xf32> to vector<8x64xf32>
    %20 = arith.addf %17, %19 : vector<8x64xf32>
    %21 = vector.extract_strided_slice %20 {offsets = [0, 0], sizes = [8, 32], strides = [1, 1]} : vector<8x64xf32> to vector<8x32xf32>
    %22 = vector.extract_strided_slice %20 {offsets = [0, 32], sizes = [8, 32], strides = [1, 1]} : vector<8x64xf32> to vector<8x32xf32>
    %cst_15 = arith.constant 0.000000e+00 : f32
    %23 = vector.broadcast %cst_15 : f32 to vector<8x32xf32>
    %cst_16 = arith.constant 0.000000e+00 : f32
    %24 = vector.broadcast %cst_16 : f32 to vector<8x32xf32>
    %c0_17 = arith.constant 0 : index
    %c0_18 = arith.constant 0 : index
    %c0_19 = arith.constant 0 : index
    %25 = vector.load %arg2[%c0_17, %c0_18, %c0_19] : memref<8x8x4xf32, #tpu.memory_space<vmem>>, vector<8x8x4xf32>
    %26 = vector.shape_cast %25 : vector<8x8x4xf32> to vector<64x4xf32>
    %27 = arith.truncf %26 : vector<64x4xf32> to vector<64x4xbf16>
    %c0_20 = arith.constant 0 : index
    %c0_21 = arith.constant 0 : index
    %28 = vector.load %arg11[%c0_20, %c0_21] : memref<4x128xbf16, #tpu.memory_space<vmem>>, vector<4x128xbf16>
    %cst_22 = arith.constant dense<0.000000e+00> : vector<64x128xf32>
    %29 = tpu.matmul %27, %28, %cst_22 {dimension_numbers = #tpu.dot_dimension_numbers<[1], [0], [0], [1], [0, 0, 1, 1], [], []>} : vector<64x4xbf16>, vector<4x128xbf16>, vector<64x128xf32> -> vector<64x128xf32>
    %c0_23 = arith.constant 0 : index
    %c0_24 = arith.constant 0 : index
    %30 = vector.load %arg14[%c0_23, %c0_24] : memref<1x128xf32, #tpu.memory_space<vmem>>, vector<1x128xf32>
    %31 = vector.broadcast %30 : vector<1x128xf32> to vector<64x128xf32>
    %32 = arith.addf %29, %31 : vector<64x128xf32>
    %33 = vector.shape_cast %32 : vector<64x128xf32> to vector<8x8x128xf32>
    %c0_25 = arith.constant 0 : index
    %c0_26 = arith.constant 0 : index
    %c0_27 = arith.constant 0 : index
    %34 = vector.load %arg23[%c0_25, %c0_26, %c0_27] : memref<8x8x128xf32, #tpu.memory_space<vmem>>, vector<8x8x128xf32>
    tpu.vector_store %arg23[%c0_25, %c0_26, %c0_27], %33 {strides = array<i32>} : memref<8x8x128xf32, #tpu.memory_space<vmem>>, vector<8x8x128xf32>,
    %c0_28 = arith.constant 0 : index
    %c0_29 = arith.constant 0 : index
    %35 = vector.load %arg4[%c0_28, %c0_29] : memref<8x1xi32, #tpu.memory_space<vmem>>, vector<8x1xi32>
    %cst_30 = arith.constant 0.000000e+00 : f32
    %36 = vector.broadcast %cst_30 : f32 to vector<8x32xf32>
    %c0_i32 = arith.constant 0 : i32
    %37 = arith.index_cast %c0_i32 : i32 to index
    %c0_31 = arith.constant 0 : index
    %c0_32 = arith.constant 0 : index
    %38 = vector.load %arg23[%37, %c0_31, %c0_32] : memref<8x8x128xf32, #tpu.memory_space<vmem>>, vector<1x8x128xf32>
    %39 = vector.shape_cast %38 : vector<1x8x128xf32> to vector<8x128xf32>
    %40 = arith.truncf %21 : vector<8x32xf32> to vector<8x32xbf16>
    %c0_33 = arith.constant 0 : index
    %c0_34 = arith.constant 0 : index
    %41 = vector.load %arg12[%c0_33, %c0_34] : memref<32x128xbf16, #tpu.memory_space<vmem>>, vector<32x128xbf16>
    %cst_35 = arith.constant dense<0.000000e+00> : vector<8x128xf32>
    %42 = tpu.matmul %40, %41, %cst_35 {dimension_numbers = #tpu.dot_dimension_numbers<[1], [0], [0], [1], [0, 0, 1, 1], [], []>} : vector<8x32xbf16>, vector<32x128xbf16>, vector<8x128xf32> -> vector<8x128xf32>
    %43 = arith.addf %39, %42 : vector<8x128xf32>
    %44 = vector.extract_strided_slice %43 {offsets = [0, 0], sizes = [8, 96], strides = [1, 1]} : vector<8x128xf32> to vector<8x96xf32>
    %45 = arith.negf %44 : vector<8x96xf32>
    %46 = math.exp %45 : vector<8x96xf32>
    %cst_36 = arith.constant 1.000000e+00 : f32
    %47 = vector.broadcast %cst_36 : f32 to vector<8x96xf32>
    %48 = arith.addf %47, %46 : vector<8x96xf32>
    %49 = arith.divf %47, %48 : vector<8x96xf32>
    %50 = vector.extract_strided_slice %43 {offsets = [0, 96], sizes = [8, 32], strides = [1, 1]} : vector<8x128xf32> to vector<8x32xf32>
    %51 = math.tanh %50 : vector<8x32xf32>
    %52 = vector.extract_strided_slice %49 {offsets = [0, 0], sizes = [8, 32], strides = [1, 1]} : vector<8x96xf32> to vector<8x32xf32>
    %53 = vector.extract_strided_slice %49 {offsets = [0, 32], sizes = [8, 32], strides = [1, 1]} : vector<8x96xf32> to vector<8x32xf32>
    %54 = vector.extract_strided_slice %49 {offsets = [0, 64], sizes = [8, 32], strides = [1, 1]} : vector<8x96xf32> to vector<8x32xf32>
    %55 = arith.mulf %53, %23 : vector<8x32xf32>
    %56 = arith.mulf %52, %51 : vector<8x32xf32>
    %57 = arith.addf %55, %56 : vector<8x32xf32>
    %58 = math.tanh %57 : vector<8x32xf32>
    %59 = arith.mulf %54, %58 : vector<8x32xf32>
    %60 = tpu.concatenate %59, %22 in 1 : vector<8x32xf32>, vector<8x32xf32> -> vector<8x64xf32>
    %61 = arith.truncf %60 : vector<8x64xf32> to vector<8x64xbf16>
    %c0_37 = arith.constant 0 : index
    %c0_38 = arith.constant 0 : index
    %62 = vector.load %arg13[%c0_37, %c0_38] : memref<64x128xbf16, #tpu.memory_space<vmem>>, vector<64x128xbf16>
    %cst_39 = arith.constant dense<0.000000e+00> : vector<8x128xf32>
    %63 = tpu.matmul %61, %62, %cst_39 {dimension_numbers = #tpu.dot_dimension_numbers<[1], [0], [0], [1], [0, 0, 1, 1], [], []>} : vector<8x64xbf16>, vector<64x128xbf16>, vector<8x128xf32> -> vector<8x128xf32>
    %c0_40 = arith.constant 0 : index
    %c0_41 = arith.constant 0 : index
    %64 = vector.load %arg15[%c0_40, %c0_41] : memref<1x128xf32, #tpu.memory_space<vmem>>, vector<1x128xf32>
    %65 = vector.broadcast %64 : vector<1x128xf32> to vector<8x128xf32>
    %66 = arith.addf %63, %65 : vector<8x128xf32>
    %67 = vector.extract_strided_slice %66 {offsets = [0, 0], sizes = [8, 96], strides = [1, 1]} : vector<8x128xf32> to vector<8x96xf32>
    %68 = arith.negf %67 : vector<8x96xf32>
    %69 = math.exp %68 : vector<8x96xf32>
    %cst_42 = arith.constant 1.000000e+00 : f32
    %70 = vector.broadcast %cst_42 : f32 to vector<8x96xf32>
    %71 = arith.addf %70, %69 : vector<8x96xf32>
    %72 = arith.divf %70, %71 : vector<8x96xf32>
    %73 = vector.extract_strided_slice %66 {offsets = [0, 96], sizes = [8, 32], strides = [1, 1]} : vector<8x128xf32> to vector<8x32xf32>
    %74 = math.tanh %73 : vector<8x32xf32>
    %75 = vector.extract_strided_slice %72 {offsets = [0, 0], sizes = [8, 32], strides = [1, 1]} : vector<8x96xf32> to vector<8x32xf32>
    %76 = vector.extract_strided_slice %72 {offsets = [0, 32], sizes = [8, 32], strides = [1, 1]} : vector<8x96xf32> to vector<8x32xf32>
    %77 = vector.extract_strided_slice %72 {offsets = [0, 64], sizes = [8, 32], strides = [1, 1]} : vector<8x96xf32> to vector<8x32xf32>
    %78 = arith.mulf %76, %24 : vector<8x32xf32>
    %79 = arith.mulf %75, %74 : vector<8x32xf32>
    %80 = arith.addf %78, %79 : vector<8x32xf32>
    %81 = math.tanh %80 : vector<8x32xf32>
    %82 = arith.mulf %77, %81 : vector<8x32xf32>
    %83 = arith.index_cast %c0_i32 : i32 to index
    %c0_43 = arith.constant 0 : index
    %c0_44 = arith.constant 0 : index
    %84 = vector.load %arg3[%83, %c0_43, %c0_44] : memref<8x8x1xf32, #tpu.memory_space<vmem>>, vector<1x8x1xf32>
    %85 = vector.shape_cast %84 : vector<1x8x1xf32> to vector<8x1xf32>
    %cst_45 = arith.constant 1.000000e+00 : f32
    %86 = vector.broadcast %cst_45 : f32 to vector<8x1xf32>
    %87 = arith.subf %86, %85 : vector<8x1xf32>
    %88 = vector.broadcast %87 : vector<8x1xf32> to vector<8x32xf32>
    %89 = arith.mulf %88, %22 : vector<8x32xf32>
    %90 = vector.broadcast %85 : vector<8x1xf32> to vector<8x32xf32>
    %91 = arith.mulf %90, %82 : vector<8x32xf32>
    %92 = arith.addf %89, %91 : vector<8x32xf32>
    %c1_i32 = arith.constant 1 : i32
    %93 = vector.broadcast %c1_i32 : i32 to vector<8x1xi32>
    %94 = arith.subi %35, %93 : vector<8x1xi32>
    %95 = vector.broadcast %c0_i32 : i32 to vector<8x1xi32>
    %96 = arith.cmpi eq, %94, %95 : vector<8x1xi32>
    %cst_46 = arith.constant 0.000000e+00 : f32
    %97 = vector.shape_cast %96 : vector<8x1xi1> to vector<8x1xi1>
    %98 = vector.broadcast %97 : vector<8x1xi1> to vector<8x32xi1>
    %99 = vector.broadcast %cst_46 : f32 to vector<8x32xf32>
    %100 = arith.select %98, %92, %99 : vector<8x32xi1>, vector<8x32xf32>
    %101 = arith.addf %36, %100 : vector<8x32xf32>
    %c1_i32_47 = arith.constant 1 : i32
    %102 = arith.index_cast %c1_i32_47 : i32 to index
    %c0_48 = arith.constant 0 : index
    %c0_49 = arith.constant 0 : index
    %103 = vector.load %arg23[%102, %c0_48, %c0_49] : memref<8x8x128xf32, #tpu.memory_space<vmem>>, vector<1x8x128xf32>
    %104 = vector.shape_cast %103 : vector<1x8x128xf32> to vector<8x128xf32>
    %105 = arith.truncf %59 : vector<8x32xf32> to vector<8x32xbf16>
    %c0_50 = arith.constant 0 : index
    %c0_51 = arith.constant 0 : index
    %106 = vector.load %arg12[%c0_50, %c0_51] : memref<32x128xbf16, #tpu.memory_space<vmem>>, vector<32x128xbf16>
    %cst_52 = arith.constant dense<0.000000e+00> : vector<8x128xf32>
    %107 = tpu.matmul %105, %106, %cst_52 {dimension_numbers = #tpu.dot_dimension_numbers<[1], [0], [0], [1], [0, 0, 1, 1], [], []>} : vector<8x32xbf16>, vector<32x128xbf16>, vector<8x128xf32> -> vector<8x128xf32>
    %108 = arith.addf %104, %107 : vector<8x128xf32>
    %109 = vector.extract_strided_slice %108 {offsets = [0, 0], sizes = [8, 96], strides = [1, 1]} : vector<8x128xf32> to vector<8x96xf32>
    %110 = arith.negf %109 : vector<8x96xf32>
    %111 = math.exp %110 : vector<8x96xf32>
    %cst_53 = arith.constant 1.000000e+00 : f32
    %112 = vector.broadcast %cst_53 : f32 to vector<8x96xf32>
    %113 = arith.addf %112, %111 : vector<8x96xf32>
    %114 = arith.divf %112, %113 : vector<8x96xf32>
    %115 = vector.extract_strided_slice %108 {offsets = [0, 96], sizes = [8, 32], strides = [1, 1]} : vector<8x128xf32> to vector<8x32xf32>
    %116 = math.tanh %115 : vector<8x32xf32>
    %117 = vector.extract_strided_slice %114 {offsets = [0, 0], sizes = [8, 32], strides = [1, 1]} : vector<8x96xf32> to vector<8x32xf32>
    %118 = vector.extract_strided_slice %114 {offsets = [0, 32], sizes = [8, 32], strides = [1, 1]} : vector<8x96xf32> to vector<8x32xf32>
    %119 = vector.extract_strided_slice %114 {offsets = [0, 64], sizes = [8, 32], strides = [1, 1]} : vector<8x96xf32> to vector<8x32xf32>
    %120 = arith.mulf %118, %57 : vector<8x32xf32>
    %121 = arith.mulf %117, %116 : vector<8x32xf32>
    %122 = arith.addf %120, %121 : vector<8x32xf32>
    %123 = math.tanh %122 : vector<8x32xf32>
    %124 = arith.mulf %119, %123 : vector<8x32xf32>
    %125 = tpu.concatenate %124, %82 in 1 : vector<8x32xf32>, vector<8x32xf32> -> vector<8x64xf32>
    %126 = arith.truncf %125 : vector<8x64xf32> to vector<8x64xbf16>
    %c0_54 = arith.constant 0 : index
    %c0_55 = arith.constant 0 : index
    %127 = vector.load %arg13[%c0_54, %c0_55] : memref<64x128xbf16, #tpu.memory_space<vmem>>, vector<64x128xbf16>
    %cst_56 = arith.constant dense<0.000000e+00> : vector<8x128xf32>
    %128 = tpu.matmul %126, %127, %cst_56 {dimension_numbers = #tpu.dot_dimension_numbers<[1], [0], [0], [1], [0, 0, 1, 1], [], []>} : vector<8x64xbf16>, vector<64x128xbf16>, vector<8x128xf32> -> vector<8x128xf32>
    %c0_57 = arith.constant 0 : index
    %c0_58 = arith.constant 0 : index
    %129 = vector.load %arg15[%c0_57, %c0_58] : memref<1x128xf32, #tpu.memory_space<vmem>>, vector<1x128xf32>
    %130 = vector.broadcast %129 : vector<1x128xf32> to vector<8x128xf32>
    %131 = arith.addf %128, %130 : vector<8x128xf32>
    %132 = vector.extract_strided_slice %131 {offsets = [0, 0], sizes = [8, 96], strides = [1, 1]} : vector<8x128xf32> to vector<8x96xf32>
    %133 = arith.negf %132 : vector<8x96xf32>
    %134 = math.exp %133 : vector<8x96xf32>
    %cst_59 = arith.constant 1.000000e+00 : f32
    %135 = vector.broadcast %cst_59 : f32 to vector<8x96xf32>
    %136 = arith.addf %135, %134 : vector<8x96xf32>
    %137 = arith.divf %135, %136 : vector<8x96xf32>
    %138 = vector.extract_strided_slice %131 {offsets = [0, 96], sizes = [8, 32], strides = [1, 1]} : vector<8x128xf32> to vector<8x32xf32>
    %139 = math.tanh %138 : vector<8x32xf32>
    %140 = vector.extract_strided_slice %137 {offsets = [0, 0], sizes = [8, 32], strides = [1, 1]} : vector<8x96xf32> to vector<8x32xf32>
    %141 = vector.extract_strided_slice %137 {offsets = [0, 32], sizes = [8, 32], strides = [1, 1]} : vector<8x96xf32> to vector<8x32xf32>
    %142 = vector.extract_strided_slice %137 {offsets = [0, 64], sizes = [8, 32], strides = [1, 1]} : vector<8x96xf32> to vector<8x32xf32>
    %143 = arith.mulf %141, %80 : vector<8x32xf32>
    %144 = arith.mulf %140, %139 : vector<8x32xf32>
    %145 = arith.addf %143, %144 : vector<8x32xf32>
    %146 = math.tanh %145 : vector<8x32xf32>
    %147 = arith.mulf %142, %146 : vector<8x32xf32>
    %148 = arith.index_cast %c1_i32_47 : i32 to index
    %c0_60 = arith.constant 0 : index
    %c0_61 = arith.constant 0 : index
    %149 = vector.load %arg3[%148, %c0_60, %c0_61] : memref<8x8x1xf32, #tpu.memory_space<vmem>>, vector<1x8x1xf32>
    %150 = vector.shape_cast %149 : vector<1x8x1xf32> to vector<8x1xf32>
    %cst_62 = arith.constant 1.000000e+00 : f32
    %151 = vector.broadcast %cst_62 : f32 to vector<8x1xf32>
    %152 = arith.subf %151, %150 : vector<8x1xf32>
    %153 = vector.broadcast %152 : vector<8x1xf32> to vector<8x32xf32>
    %154 = arith.mulf %153, %82 : vector<8x32xf32>
    %155 = vector.broadcast %150 : vector<8x1xf32> to vector<8x32xf32>
    %156 = arith.mulf %155, %147 : vector<8x32xf32>
    %157 = arith.addf %154, %156 : vector<8x32xf32>
    %c1_i32_63 = arith.constant 1 : i32
    %158 = vector.broadcast %c1_i32_63 : i32 to vector<8x1xi32>
    %159 = arith.subi %35, %158 : vector<8x1xi32>
    %160 = vector.broadcast %c1_i32_47 : i32 to vector<8x1xi32>
    %161 = arith.cmpi eq, %159, %160 : vector<8x1xi32>
    %cst_64 = arith.constant 0.000000e+00 : f32
    %162 = vector.shape_cast %161 : vector<8x1xi1> to vector<8x1xi1>
    %163 = vector.broadcast %162 : vector<8x1xi1> to vector<8x32xi1>
    %164 = vector.broadcast %cst_64 : f32 to vector<8x32xf32>
    %165 = arith.select %163, %157, %164 : vector<8x32xi1>, vector<8x32xf32>
    %166 = arith.addf %101, %165 : vector<8x32xf32>
    %c2_i32 = arith.constant 2 : i32
    %167 = arith.index_cast %c2_i32 : i32 to index
    %c0_65 = arith.constant 0 : index
    %c0_66 = arith.constant 0 : index
    %168 = vector.load %arg23[%167, %c0_65, %c0_66] : memref<8x8x128xf32, #tpu.memory_space<vmem>>, vector<1x8x128xf32>
    %169 = vector.shape_cast %168 : vector<1x8x128xf32> to vector<8x128xf32>
    %170 = arith.truncf %124 : vector<8x32xf32> to vector<8x32xbf16>
    %c0_67 = arith.constant 0 : index
    %c0_68 = arith.constant 0 : index
    %171 = vector.load %arg12[%c0_67, %c0_68] : memref<32x128xbf16, #tpu.memory_space<vmem>>, vector<32x128xbf16>
    %cst_69 = arith.constant dense<0.000000e+00> : vector<8x128xf32>
    %172 = tpu.matmul %170, %171, %cst_69 {dimension_numbers = #tpu.dot_dimension_numbers<[1], [0], [0], [1], [0, 0, 1, 1], [], []>} : vector<8x32xbf16>, vector<32x128xbf16>, vector<8x128xf32> -> vector<8x128xf32>
    %173 = arith.addf %169, %172 : vector<8x128xf32>
    %174 = vector.extract_strided_slice %173 {offsets = [0, 0], sizes = [8, 96], strides = [1, 1]} : vector<8x128xf32> to vector<8x96xf32>
    %175 = arith.negf %174 : vector<8x96xf32>
    %176 = math.exp %175 : vector<8x96xf32>
    %cst_70 = arith.constant 1.000000e+00 : f32
    %177 = vector.broadcast %cst_70 : f32 to vector<8x96xf32>
    %178 = arith.addf %177, %176 : vector<8x96xf32>
    %179 = arith.divf %177, %178 : vector<8x96xf32>
    %180 = vector.extract_strided_slice %173 {offsets = [0, 96], sizes = [8, 32], strides = [1, 1]} : vector<8x128xf32> to vector<8x32xf32>
    %181 = math.tanh %180 : vector<8x32xf32>
    %182 = vector.extract_strided_slice %179 {offsets = [0, 0], sizes = [8, 32], strides = [1, 1]} : vector<8x96xf32> to vector<8x32xf32>
    %183 = vector.extract_strided_slice %179 {offsets = [0, 32], sizes = [8, 32], strides = [1, 1]} : vector<8x96xf32> to vector<8x32xf32>
    %184 = vector.extract_strided_slice %179 {offsets = [0, 64], sizes = [8, 32], strides = [1, 1]} : vector<8x96xf32> to vector<8x32xf32>
    %185 = arith.mulf %183, %122 : vector<8x32xf32>
    %186 = arith.mulf %182, %181 : vector<8x32xf32>
    %187 = arith.addf %185, %186 : vector<8x32xf32>
    %188 = math.tanh %187 : vector<8x32xf32>
    %189 = arith.mulf %184, %188 : vector<8x32xf32>
    %190 = tpu.concatenate %189, %147 in 1 : vector<8x32xf32>, vector<8x32xf32> -> vector<8x64xf32>
    %191 = arith.truncf %190 : vector<8x64xf32> to vector<8x64xbf16>
    %c0_71 = arith.constant 0 : index
    %c0_72 = arith.constant 0 : index
    %192 = vector.load %arg13[%c0_71, %c0_72] : memref<64x128xbf16, #tpu.memory_space<vmem>>, vector<64x128xbf16>
    %cst_73 = arith.constant dense<0.000000e+00> : vector<8x128xf32>
    %193 = tpu.matmul %191, %192, %cst_73 {dimension_numbers = #tpu.dot_dimension_numbers<[1], [0], [0], [1], [0, 0, 1, 1], [], []>} : vector<8x64xbf16>, vector<64x128xbf16>, vector<8x128xf32> -> vector<8x128xf32>
    %c0_74 = arith.constant 0 : index
    %c0_75 = arith.constant 0 : index
    %194 = vector.load %arg15[%c0_74, %c0_75] : memref<1x128xf32, #tpu.memory_space<vmem>>, vector<1x128xf32>
    %195 = vector.broadcast %194 : vector<1x128xf32> to vector<8x128xf32>
    %196 = arith.addf %193, %195 : vector<8x128xf32>
    %197 = vector.extract_strided_slice %196 {offsets = [0, 0], sizes = [8, 96], strides = [1, 1]} : vector<8x128xf32> to vector<8x96xf32>
    %198 = arith.negf %197 : vector<8x96xf32>
    %199 = math.exp %198 : vector<8x96xf32>
    %cst_76 = arith.constant 1.000000e+00 : f32
    %200 = vector.broadcast %cst_76 : f32 to vector<8x96xf32>
    %201 = arith.addf %200, %199 : vector<8x96xf32>
    %202 = arith.divf %200, %201 : vector<8x96xf32>
    %203 = vector.extract_strided_slice %196 {offsets = [0, 96], sizes = [8, 32], strides = [1, 1]} : vector<8x128xf32> to vector<8x32xf32>
    %204 = math.tanh %203 : vector<8x32xf32>
    %205 = vector.extract_strided_slice %202 {offsets = [0, 0], sizes = [8, 32], strides = [1, 1]} : vector<8x96xf32> to vector<8x32xf32>
    %206 = vector.extract_strided_slice %202 {offsets = [0, 32], sizes = [8, 32], strides = [1, 1]} : vector<8x96xf32> to vector<8x32xf32>
    %207 = vector.extract_strided_slice %202 {offsets = [0, 64], sizes = [8, 32], strides = [1, 1]} : vector<8x96xf32> to vector<8x32xf32>
    %208 = arith.mulf %206, %145 : vector<8x32xf32>
    %209 = arith.mulf %205, %204 : vector<8x32xf32>
    %210 = arith.addf %208, %209 : vector<8x32xf32>
    %211 = math.tanh %210 : vector<8x32xf32>
    %212 = arith.mulf %207, %211 : vector<8x32xf32>
    %213 = arith.index_cast %c2_i32 : i32 to index
    %c0_77 = arith.constant 0 : index
    %c0_78 = arith.constant 0 : index
    %214 = vector.load %arg3[%213, %c0_77, %c0_78] : memref<8x8x1xf32, #tpu.memory_space<vmem>>, vector<1x8x1xf32>
    %215 = vector.shape_cast %214 : vector<1x8x1xf32> to vector<8x1xf32>
    %cst_79 = arith.constant 1.000000e+00 : f32
    %216 = vector.broadcast %cst_79 : f32 to vector<8x1xf32>
    %217 = arith.subf %216, %215 : vector<8x1xf32>
    %218 = vector.broadcast %217 : vector<8x1xf32> to vector<8x32xf32>
    %219 = arith.mulf %218, %147 : vector<8x32xf32>
    %220 = vector.broadcast %215 : vector<8x1xf32> to vector<8x32xf32>
    %221 = arith.mulf %220, %212 : vector<8x32xf32>
    %222 = arith.addf %219, %221 : vector<8x32xf32>
    %c1_i32_80 = arith.constant 1 : i32
    %223 = vector.broadcast %c1_i32_80 : i32 to vector<8x1xi32>
    %224 = arith.subi %35, %223 : vector<8x1xi32>
    %225 = vector.broadcast %c2_i32 : i32 to vector<8x1xi32>
    %226 = arith.cmpi eq, %224, %225 : vector<8x1xi32>
    %cst_81 = arith.constant 0.000000e+00 : f32
    %227 = vector.shape_cast %226 : vector<8x1xi1> to vector<8x1xi1>
    %228 = vector.broadcast %227 : vector<8x1xi1> to vector<8x32xi1>
    %229 = vector.broadcast %cst_81 : f32 to vector<8x32xf32>
    %230 = arith.select %228, %222, %229 : vector<8x32xi1>, vector<8x32xf32>
    %231 = arith.addf %166, %230 : vector<8x32xf32>
    %c3_i32 = arith.constant 3 : i32
    %232 = arith.index_cast %c3_i32 : i32 to index
    %c0_82 = arith.constant 0 : index
    %c0_83 = arith.constant 0 : index
    %233 = vector.load %arg23[%232, %c0_82, %c0_83] : memref<8x8x128xf32, #tpu.memory_space<vmem>>, vector<1x8x128xf32>
    %234 = vector.shape_cast %233 : vector<1x8x128xf32> to vector<8x128xf32>
    %235 = arith.truncf %189 : vector<8x32xf32> to vector<8x32xbf16>
    %c0_84 = arith.constant 0 : index
    %c0_85 = arith.constant 0 : index
    %236 = vector.load %arg12[%c0_84, %c0_85] : memref<32x128xbf16, #tpu.memory_space<vmem>>, vector<32x128xbf16>
    %cst_86 = arith.constant dense<0.000000e+00> : vector<8x128xf32>
    %237 = tpu.matmul %235, %236, %cst_86 {dimension_numbers = #tpu.dot_dimension_numbers<[1], [0], [0], [1], [0, 0, 1, 1], [], []>} : vector<8x32xbf16>, vector<32x128xbf16>, vector<8x128xf32> -> vector<8x128xf32>
    %238 = arith.addf %234, %237 : vector<8x128xf32>
    %239 = vector.extract_strided_slice %238 {offsets = [0, 0], sizes = [8, 96], strides = [1, 1]} : vector<8x128xf32> to vector<8x96xf32>
    %240 = arith.negf %239 : vector<8x96xf32>
    %241 = math.exp %240 : vector<8x96xf32>
    %cst_87 = arith.constant 1.000000e+00 : f32
    %242 = vector.broadcast %cst_87 : f32 to vector<8x96xf32>
    %243 = arith.addf %242, %241 : vector<8x96xf32>
    %244 = arith.divf %242, %243 : vector<8x96xf32>
    %245 = vector.extract_strided_slice %238 {offsets = [0, 96], sizes = [8, 32], strides = [1, 1]} : vector<8x128xf32> to vector<8x32xf32>
    %246 = math.tanh %245 : vector<8x32xf32>
    %247 = vector.extract_strided_slice %244 {offsets = [0, 0], sizes = [8, 32], strides = [1, 1]} : vector<8x96xf32> to vector<8x32xf32>
    %248 = vector.extract_strided_slice %244 {offsets = [0, 32], sizes = [8, 32], strides = [1, 1]} : vector<8x96xf32> to vector<8x32xf32>
    %249 = vector.extract_strided_slice %244 {offsets = [0, 64], sizes = [8, 32], strides = [1, 1]} : vector<8x96xf32> to vector<8x32xf32>
    %250 = arith.mulf %248, %187 : vector<8x32xf32>
    %251 = arith.mulf %247, %246 : vector<8x32xf32>
    %252 = arith.addf %250, %251 : vector<8x32xf32>
    %253 = math.tanh %252 : vector<8x32xf32>
    %254 = arith.mulf %249, %253 : vector<8x32xf32>
    %255 = tpu.concatenate %254, %212 in 1 : vector<8x32xf32>, vector<8x32xf32> -> vector<8x64xf32>
    %256 = arith.truncf %255 : vector<8x64xf32> to vector<8x64xbf16>
    %c0_88 = arith.constant 0 : index
    %c0_89 = arith.constant 0 : index
    %257 = vector.load %arg13[%c0_88, %c0_89] : memref<64x128xbf16, #tpu.memory_space<vmem>>, vector<64x128xbf16>
    %cst_90 = arith.constant dense<0.000000e+00> : vector<8x128xf32>
    %258 = tpu.matmul %256, %257, %cst_90 {dimension_numbers = #tpu.dot_dimension_numbers<[1], [0], [0], [1], [0, 0, 1, 1], [], []>} : vector<8x64xbf16>, vector<64x128xbf16>, vector<8x128xf32> -> vector<8x128xf32>
    %c0_91 = arith.constant 0 : index
    %c0_92 = arith.constant 0 : index
    %259 = vector.load %arg15[%c0_91, %c0_92] : memref<1x128xf32, #tpu.memory_space<vmem>>, vector<1x128xf32>
    %260 = vector.broadcast %259 : vector<1x128xf32> to vector<8x128xf32>
    %261 = arith.addf %258, %260 : vector<8x128xf32>
    %262 = vector.extract_strided_slice %261 {offsets = [0, 0], sizes = [8, 96], strides = [1, 1]} : vector<8x128xf32> to vector<8x96xf32>
    %263 = arith.negf %262 : vector<8x96xf32>
    %264 = math.exp %263 : vector<8x96xf32>
    %cst_93 = arith.constant 1.000000e+00 : f32
    %265 = vector.broadcast %cst_93 : f32 to vector<8x96xf32>
    %266 = arith.addf %265, %264 : vector<8x96xf32>
    %267 = arith.divf %265, %266 : vector<8x96xf32>
    %268 = vector.extract_strided_slice %261 {offsets = [0, 96], sizes = [8, 32], strides = [1, 1]} : vector<8x128xf32> to vector<8x32xf32>
    %269 = math.tanh %268 : vector<8x32xf32>
    %270 = vector.extract_strided_slice %267 {offsets = [0, 0], sizes = [8, 32], strides = [1, 1]} : vector<8x96xf32> to vector<8x32xf32>
    %271 = vector.extract_strided_slice %267 {offsets = [0, 32], sizes = [8, 32], strides = [1, 1]} : vector<8x96xf32> to vector<8x32xf32>
    %272 = vector.extract_strided_slice %267 {offsets = [0, 64], sizes = [8, 32], strides = [1, 1]} : vector<8x96xf32> to vector<8x32xf32>
    %273 = arith.mulf %271, %210 : vector<8x32xf32>
    %274 = arith.mulf %270, %269 : vector<8x32xf32>
    %275 = arith.addf %273, %274 : vector<8x32xf32>
    %276 = math.tanh %275 : vector<8x32xf32>
    %277 = arith.mulf %272, %276 : vector<8x32xf32>
    %278 = arith.index_cast %c3_i32 : i32 to index
    %c0_94 = arith.constant 0 : index
    %c0_95 = arith.constant 0 : index
    %279 = vector.load %arg3[%278, %c0_94, %c0_95] : memref<8x8x1xf32, #tpu.memory_space<vmem>>, vector<1x8x1xf32>
    %280 = vector.shape_cast %279 : vector<1x8x1xf32> to vector<8x1xf32>
    %cst_96 = arith.constant 1.000000e+00 : f32
    %281 = vector.broadcast %cst_96 : f32 to vector<8x1xf32>
    %282 = arith.subf %281, %280 : vector<8x1xf32>
    %283 = vector.broadcast %282 : vector<8x1xf32> to vector<8x32xf32>
    %284 = arith.mulf %283, %212 : vector<8x32xf32>
    %285 = vector.broadcast %280 : vector<8x1xf32> to vector<8x32xf32>
    %286 = arith.mulf %285, %277 : vector<8x32xf32>
    %287 = arith.addf %284, %286 : vector<8x32xf32>
    %c1_i32_97 = arith.constant 1 : i32
    %288 = vector.broadcast %c1_i32_97 : i32 to vector<8x1xi32>
    %289 = arith.subi %35, %288 : vector<8x1xi32>
    %290 = vector.broadcast %c3_i32 : i32 to vector<8x1xi32>
    %291 = arith.cmpi eq, %289, %290 : vector<8x1xi32>
    %cst_98 = arith.constant 0.000000e+00 : f32
    %292 = vector.shape_cast %291 : vector<8x1xi1> to vector<8x1xi1>
    %293 = vector.broadcast %292 : vector<8x1xi1> to vector<8x32xi1>
    %294 = vector.broadcast %cst_98 : f32 to vector<8x32xf32>
    %295 = arith.select %293, %287, %294 : vector<8x32xi1>, vector<8x32xf32>
    %296 = arith.addf %231, %295 : vector<8x32xf32>
    %c4_i32 = arith.constant 4 : i32
    %297 = arith.index_cast %c4_i32 : i32 to index
    %c0_99 = arith.constant 0 : index
    %c0_100 = arith.constant 0 : index
    %298 = vector.load %arg23[%297, %c0_99, %c0_100] : memref<8x8x128xf32, #tpu.memory_space<vmem>>, vector<1x8x128xf32>
    %299 = vector.shape_cast %298 : vector<1x8x128xf32> to vector<8x128xf32>
    %300 = arith.truncf %254 : vector<8x32xf32> to vector<8x32xbf16>
    %c0_101 = arith.constant 0 : index
    %c0_102 = arith.constant 0 : index
    %301 = vector.load %arg12[%c0_101, %c0_102] : memref<32x128xbf16, #tpu.memory_space<vmem>>, vector<32x128xbf16>
    %cst_103 = arith.constant dense<0.000000e+00> : vector<8x128xf32>
    %302 = tpu.matmul %300, %301, %cst_103 {dimension_numbers = #tpu.dot_dimension_numbers<[1], [0], [0], [1], [0, 0, 1, 1], [], []>} : vector<8x32xbf16>, vector<32x128xbf16>, vector<8x128xf32> -> vector<8x128xf32>
    %303 = arith.addf %299, %302 : vector<8x128xf32>
    %304 = vector.extract_strided_slice %303 {offsets = [0, 0], sizes = [8, 96], strides = [1, 1]} : vector<8x128xf32> to vector<8x96xf32>
    %305 = arith.negf %304 : vector<8x96xf32>
    %306 = math.exp %305 : vector<8x96xf32>
    %cst_104 = arith.constant 1.000000e+00 : f32
    %307 = vector.broadcast %cst_104 : f32 to vector<8x96xf32>
    %308 = arith.addf %307, %306 : vector<8x96xf32>
    %309 = arith.divf %307, %308 : vector<8x96xf32>
    %310 = vector.extract_strided_slice %303 {offsets = [0, 96], sizes = [8, 32], strides = [1, 1]} : vector<8x128xf32> to vector<8x32xf32>
    %311 = math.tanh %310 : vector<8x32xf32>
    %312 = vector.extract_strided_slice %309 {offsets = [0, 0], sizes = [8, 32], strides = [1, 1]} : vector<8x96xf32> to vector<8x32xf32>
    %313 = vector.extract_strided_slice %309 {offsets = [0, 32], sizes = [8, 32], strides = [1, 1]} : vector<8x96xf32> to vector<8x32xf32>
    %314 = vector.extract_strided_slice %309 {offsets = [0, 64], sizes = [8, 32], strides = [1, 1]} : vector<8x96xf32> to vector<8x32xf32>
    %315 = arith.mulf %313, %252 : vector<8x32xf32>
    %316 = arith.mulf %312, %311 : vector<8x32xf32>
    %317 = arith.addf %315, %316 : vector<8x32xf32>
    %318 = math.tanh %317 : vector<8x32xf32>
    %319 = arith.mulf %314, %318 : vector<8x32xf32>
    %320 = tpu.concatenate %319, %277 in 1 : vector<8x32xf32>, vector<8x32xf32> -> vector<8x64xf32>
    %321 = arith.truncf %320 : vector<8x64xf32> to vector<8x64xbf16>
    %c0_105 = arith.constant 0 : index
    %c0_106 = arith.constant 0 : index
    %322 = vector.load %arg13[%c0_105, %c0_106] : memref<64x128xbf16, #tpu.memory_space<vmem>>, vector<64x128xbf16>
    %cst_107 = arith.constant dense<0.000000e+00> : vector<8x128xf32>
    %323 = tpu.matmul %321, %322, %cst_107 {dimension_numbers = #tpu.dot_dimension_numbers<[1], [0], [0], [1], [0, 0, 1, 1], [], []>} : vector<8x64xbf16>, vector<64x128xbf16>, vector<8x128xf32> -> vector<8x128xf32>
    %c0_108 = arith.constant 0 : index
    %c0_109 = arith.constant 0 : index
    %324 = vector.load %arg15[%c0_108, %c0_109] : memref<1x128xf32, #tpu.memory_space<vmem>>, vector<1x128xf32>
    %325 = vector.broadcast %324 : vector<1x128xf32> to vector<8x128xf32>
    %326 = arith.addf %323, %325 : vector<8x128xf32>
    %327 = vector.extract_strided_slice %326 {offsets = [0, 0], sizes = [8, 96], strides = [1, 1]} : vector<8x128xf32> to vector<8x96xf32>
    %328 = arith.negf %327 : vector<8x96xf32>
    %329 = math.exp %328 : vector<8x96xf32>
    %cst_110 = arith.constant 1.000000e+00 : f32
    %330 = vector.broadcast %cst_110 : f32 to vector<8x96xf32>
    %331 = arith.addf %330, %329 : vector<8x96xf32>
    %332 = arith.divf %330, %331 : vector<8x96xf32>
    %333 = vector.extract_strided_slice %326 {offsets = [0, 96], sizes = [8, 32], strides = [1, 1]} : vector<8x128xf32> to vector<8x32xf32>
    %334 = math.tanh %333 : vector<8x32xf32>
    %335 = vector.extract_strided_slice %332 {offsets = [0, 0], sizes = [8, 32], strides = [1, 1]} : vector<8x96xf32> to vector<8x32xf32>
    %336 = vector.extract_strided_slice %332 {offsets = [0, 32], sizes = [8, 32], strides = [1, 1]} : vector<8x96xf32> to vector<8x32xf32>
    %337 = vector.extract_strided_slice %332 {offsets = [0, 64], sizes = [8, 32], strides = [1, 1]} : vector<8x96xf32> to vector<8x32xf32>
    %338 = arith.mulf %336, %275 : vector<8x32xf32>
    %339 = arith.mulf %335, %334 : vector<8x32xf32>
    %340 = arith.addf %338, %339 : vector<8x32xf32>
    %341 = math.tanh %340 : vector<8x32xf32>
    %342 = arith.mulf %337, %341 : vector<8x32xf32>
    %343 = arith.index_cast %c4_i32 : i32 to index
    %c0_111 = arith.constant 0 : index
    %c0_112 = arith.constant 0 : index
    %344 = vector.load %arg3[%343, %c0_111, %c0_112] : memref<8x8x1xf32, #tpu.memory_space<vmem>>, vector<1x8x1xf32>
    %345 = vector.shape_cast %344 : vector<1x8x1xf32> to vector<8x1xf32>
    %cst_113 = arith.constant 1.000000e+00 : f32
    %346 = vector.broadcast %cst_113 : f32 to vector<8x1xf32>
    %347 = arith.subf %346, %345 : vector<8x1xf32>
    %348 = vector.broadcast %347 : vector<8x1xf32> to vector<8x32xf32>
    %349 = arith.mulf %348, %277 : vector<8x32xf32>
    %350 = vector.broadcast %345 : vector<8x1xf32> to vector<8x32xf32>
    %351 = arith.mulf %350, %342 : vector<8x32xf32>
    %352 = arith.addf %349, %351 : vector<8x32xf32>
    %c1_i32_114 = arith.constant 1 : i32
    %353 = vector.broadcast %c1_i32_114 : i32 to vector<8x1xi32>
    %354 = arith.subi %35, %353 : vector<8x1xi32>
    %355 = vector.broadcast %c4_i32 : i32 to vector<8x1xi32>
    %356 = arith.cmpi eq, %354, %355 : vector<8x1xi32>
    %cst_115 = arith.constant 0.000000e+00 : f32
    %357 = vector.shape_cast %356 : vector<8x1xi1> to vector<8x1xi1>
    %358 = vector.broadcast %357 : vector<8x1xi1> to vector<8x32xi1>
    %359 = vector.broadcast %cst_115 : f32 to vector<8x32xf32>
    %360 = arith.select %358, %352, %359 : vector<8x32xi1>, vector<8x32xf32>
    %361 = arith.addf %296, %360 : vector<8x32xf32>
    %c5_i32 = arith.constant 5 : i32
    %362 = arith.index_cast %c5_i32 : i32 to index
    %c0_116 = arith.constant 0 : index
    %c0_117 = arith.constant 0 : index
    %363 = vector.load %arg23[%362, %c0_116, %c0_117] : memref<8x8x128xf32, #tpu.memory_space<vmem>>, vector<1x8x128xf32>
    %364 = vector.shape_cast %363 : vector<1x8x128xf32> to vector<8x128xf32>
    %365 = arith.truncf %319 : vector<8x32xf32> to vector<8x32xbf16>
    %c0_118 = arith.constant 0 : index
    %c0_119 = arith.constant 0 : index
    %366 = vector.load %arg12[%c0_118, %c0_119] : memref<32x128xbf16, #tpu.memory_space<vmem>>, vector<32x128xbf16>
    %cst_120 = arith.constant dense<0.000000e+00> : vector<8x128xf32>
    %367 = tpu.matmul %365, %366, %cst_120 {dimension_numbers = #tpu.dot_dimension_numbers<[1], [0], [0], [1], [0, 0, 1, 1], [], []>} : vector<8x32xbf16>, vector<32x128xbf16>, vector<8x128xf32> -> vector<8x128xf32>
    %368 = arith.addf %364, %367 : vector<8x128xf32>
    %369 = vector.extract_strided_slice %368 {offsets = [0, 0], sizes = [8, 96], strides = [1, 1]} : vector<8x128xf32> to vector<8x96xf32>
    %370 = arith.negf %369 : vector<8x96xf32>
    %371 = math.exp %370 : vector<8x96xf32>
    %cst_121 = arith.constant 1.000000e+00 : f32
    %372 = vector.broadcast %cst_121 : f32 to vector<8x96xf32>
    %373 = arith.addf %372, %371 : vector<8x96xf32>
    %374 = arith.divf %372, %373 : vector<8x96xf32>
    %375 = vector.extract_strided_slice %368 {offsets = [0, 96], sizes = [8, 32], strides = [1, 1]} : vector<8x128xf32> to vector<8x32xf32>
    %376 = math.tanh %375 : vector<8x32xf32>
    %377 = vector.extract_strided_slice %374 {offsets = [0, 0], sizes = [8, 32], strides = [1, 1]} : vector<8x96xf32> to vector<8x32xf32>
    %378 = vector.extract_strided_slice %374 {offsets = [0, 32], sizes = [8, 32], strides = [1, 1]} : vector<8x96xf32> to vector<8x32xf32>
    %379 = vector.extract_strided_slice %374 {offsets = [0, 64], sizes = [8, 32], strides = [1, 1]} : vector<8x96xf32> to vector<8x32xf32>
    %380 = arith.mulf %378, %317 : vector<8x32xf32>
    %381 = arith.mulf %377, %376 : vector<8x32xf32>
    %382 = arith.addf %380, %381 : vector<8x32xf32>
    %383 = math.tanh %382 : vector<8x32xf32>
    %384 = arith.mulf %379, %383 : vector<8x32xf32>
    %385 = tpu.concatenate %384, %342 in 1 : vector<8x32xf32>, vector<8x32xf32> -> vector<8x64xf32>
    %386 = arith.truncf %385 : vector<8x64xf32> to vector<8x64xbf16>
    %c0_122 = arith.constant 0 : index
    %c0_123 = arith.constant 0 : index
    %387 = vector.load %arg13[%c0_122, %c0_123] : memref<64x128xbf16, #tpu.memory_space<vmem>>, vector<64x128xbf16>
    %cst_124 = arith.constant dense<0.000000e+00> : vector<8x128xf32>
    %388 = tpu.matmul %386, %387, %cst_124 {dimension_numbers = #tpu.dot_dimension_numbers<[1], [0], [0], [1], [0, 0, 1, 1], [], []>} : vector<8x64xbf16>, vector<64x128xbf16>, vector<8x128xf32> -> vector<8x128xf32>
    %c0_125 = arith.constant 0 : index
    %c0_126 = arith.constant 0 : index
    %389 = vector.load %arg15[%c0_125, %c0_126] : memref<1x128xf32, #tpu.memory_space<vmem>>, vector<1x128xf32>
    %390 = vector.broadcast %389 : vector<1x128xf32> to vector<8x128xf32>
    %391 = arith.addf %388, %390 : vector<8x128xf32>
    %392 = vector.extract_strided_slice %391 {offsets = [0, 0], sizes = [8, 96], strides = [1, 1]} : vector<8x128xf32> to vector<8x96xf32>
    %393 = arith.negf %392 : vector<8x96xf32>
    %394 = math.exp %393 : vector<8x96xf32>
    %cst_127 = arith.constant 1.000000e+00 : f32
    %395 = vector.broadcast %cst_127 : f32 to vector<8x96xf32>
    %396 = arith.addf %395, %394 : vector<8x96xf32>
    %397 = arith.divf %395, %396 : vector<8x96xf32>
    %398 = vector.extract_strided_slice %391 {offsets = [0, 96], sizes = [8, 32], strides = [1, 1]} : vector<8x128xf32> to vector<8x32xf32>
    %399 = math.tanh %398 : vector<8x32xf32>
    %400 = vector.extract_strided_slice %397 {offsets = [0, 0], sizes = [8, 32], strides = [1, 1]} : vector<8x96xf32> to vector<8x32xf32>
    %401 = vector.extract_strided_slice %397 {offsets = [0, 32], sizes = [8, 32], strides = [1, 1]} : vector<8x96xf32> to vector<8x32xf32>
    %402 = vector.extract_strided_slice %397 {offsets = [0, 64], sizes = [8, 32], strides = [1, 1]} : vector<8x96xf32> to vector<8x32xf32>
    %403 = arith.mulf %401, %340 : vector<8x32xf32>
    %404 = arith.mulf %400, %399 : vector<8x32xf32>
    %405 = arith.addf %403, %404 : vector<8x32xf32>
    %406 = math.tanh %405 : vector<8x32xf32>
    %407 = arith.mulf %402, %406 : vector<8x32xf32>
    %408 = arith.index_cast %c5_i32 : i32 to index
    %c0_128 = arith.constant 0 : index
    %c0_129 = arith.constant 0 : index
    %409 = vector.load %arg3[%408, %c0_128, %c0_129] : memref<8x8x1xf32, #tpu.memory_space<vmem>>, vector<1x8x1xf32>
    %410 = vector.shape_cast %409 : vector<1x8x1xf32> to vector<8x1xf32>
    %cst_130 = arith.constant 1.000000e+00 : f32
    %411 = vector.broadcast %cst_130 : f32 to vector<8x1xf32>
    %412 = arith.subf %411, %410 : vector<8x1xf32>
    %413 = vector.broadcast %412 : vector<8x1xf32> to vector<8x32xf32>
    %414 = arith.mulf %413, %342 : vector<8x32xf32>
    %415 = vector.broadcast %410 : vector<8x1xf32> to vector<8x32xf32>
    %416 = arith.mulf %415, %407 : vector<8x32xf32>
    %417 = arith.addf %414, %416 : vector<8x32xf32>
    %c1_i32_131 = arith.constant 1 : i32
    %418 = vector.broadcast %c1_i32_131 : i32 to vector<8x1xi32>
    %419 = arith.subi %35, %418 : vector<8x1xi32>
    %420 = vector.broadcast %c5_i32 : i32 to vector<8x1xi32>
    %421 = arith.cmpi eq, %419, %420 : vector<8x1xi32>
    %cst_132 = arith.constant 0.000000e+00 : f32
    %422 = vector.shape_cast %421 : vector<8x1xi1> to vector<8x1xi1>
    %423 = vector.broadcast %422 : vector<8x1xi1> to vector<8x32xi1>
    %424 = vector.broadcast %cst_132 : f32 to vector<8x32xf32>
    %425 = arith.select %423, %417, %424 : vector<8x32xi1>, vector<8x32xf32>
    %426 = arith.addf %361, %425 : vector<8x32xf32>
    %c6_i32 = arith.constant 6 : i32
    %427 = arith.index_cast %c6_i32 : i32 to index
    %c0_133 = arith.constant 0 : index
    %c0_134 = arith.constant 0 : index
    %428 = vector.load %arg23[%427, %c0_133, %c0_134] : memref<8x8x128xf32, #tpu.memory_space<vmem>>, vector<1x8x128xf32>
    %429 = vector.shape_cast %428 : vector<1x8x128xf32> to vector<8x128xf32>
    %430 = arith.truncf %384 : vector<8x32xf32> to vector<8x32xbf16>
    %c0_135 = arith.constant 0 : index
    %c0_136 = arith.constant 0 : index
    %431 = vector.load %arg12[%c0_135, %c0_136] : memref<32x128xbf16, #tpu.memory_space<vmem>>, vector<32x128xbf16>
    %cst_137 = arith.constant dense<0.000000e+00> : vector<8x128xf32>
    %432 = tpu.matmul %430, %431, %cst_137 {dimension_numbers = #tpu.dot_dimension_numbers<[1], [0], [0], [1], [0, 0, 1, 1], [], []>} : vector<8x32xbf16>, vector<32x128xbf16>, vector<8x128xf32> -> vector<8x128xf32>
    %433 = arith.addf %429, %432 : vector<8x128xf32>
    %434 = vector.extract_strided_slice %433 {offsets = [0, 0], sizes = [8, 96], strides = [1, 1]} : vector<8x128xf32> to vector<8x96xf32>
    %435 = arith.negf %434 : vector<8x96xf32>
    %436 = math.exp %435 : vector<8x96xf32>
    %cst_138 = arith.constant 1.000000e+00 : f32
    %437 = vector.broadcast %cst_138 : f32 to vector<8x96xf32>
    %438 = arith.addf %437, %436 : vector<8x96xf32>
    %439 = arith.divf %437, %438 : vector<8x96xf32>
    %440 = vector.extract_strided_slice %433 {offsets = [0, 96], sizes = [8, 32], strides = [1, 1]} : vector<8x128xf32> to vector<8x32xf32>
    %441 = math.tanh %440 : vector<8x32xf32>
    %442 = vector.extract_strided_slice %439 {offsets = [0, 0], sizes = [8, 32], strides = [1, 1]} : vector<8x96xf32> to vector<8x32xf32>
    %443 = vector.extract_strided_slice %439 {offsets = [0, 32], sizes = [8, 32], strides = [1, 1]} : vector<8x96xf32> to vector<8x32xf32>
    %444 = vector.extract_strided_slice %439 {offsets = [0, 64], sizes = [8, 32], strides = [1, 1]} : vector<8x96xf32> to vector<8x32xf32>
    %445 = arith.mulf %443, %382 : vector<8x32xf32>
    %446 = arith.mulf %442, %441 : vector<8x32xf32>
    %447 = arith.addf %445, %446 : vector<8x32xf32>
    %448 = math.tanh %447 : vector<8x32xf32>
    %449 = arith.mulf %444, %448 : vector<8x32xf32>
    %450 = tpu.concatenate %449, %407 in 1 : vector<8x32xf32>, vector<8x32xf32> -> vector<8x64xf32>
    %451 = arith.truncf %450 : vector<8x64xf32> to vector<8x64xbf16>
    %c0_139 = arith.constant 0 : index
    %c0_140 = arith.constant 0 : index
    %452 = vector.load %arg13[%c0_139, %c0_140] : memref<64x128xbf16, #tpu.memory_space<vmem>>, vector<64x128xbf16>
    %cst_141 = arith.constant dense<0.000000e+00> : vector<8x128xf32>
    %453 = tpu.matmul %451, %452, %cst_141 {dimension_numbers = #tpu.dot_dimension_numbers<[1], [0], [0], [1], [0, 0, 1, 1], [], []>} : vector<8x64xbf16>, vector<64x128xbf16>, vector<8x128xf32> -> vector<8x128xf32>
    %c0_142 = arith.constant 0 : index
    %c0_143 = arith.constant 0 : index
    %454 = vector.load %arg15[%c0_142, %c0_143] : memref<1x128xf32, #tpu.memory_space<vmem>>, vector<1x128xf32>
    %455 = vector.broadcast %454 : vector<1x128xf32> to vector<8x128xf32>
    %456 = arith.addf %453, %455 : vector<8x128xf32>
    %457 = vector.extract_strided_slice %456 {offsets = [0, 0], sizes = [8, 96], strides = [1, 1]} : vector<8x128xf32> to vector<8x96xf32>
    %458 = arith.negf %457 : vector<8x96xf32>
    %459 = math.exp %458 : vector<8x96xf32>
    %cst_144 = arith.constant 1.000000e+00 : f32
    %460 = vector.broadcast %cst_144 : f32 to vector<8x96xf32>
    %461 = arith.addf %460, %459 : vector<8x96xf32>
    %462 = arith.divf %460, %461 : vector<8x96xf32>
    %463 = vector.extract_strided_slice %456 {offsets = [0, 96], sizes = [8, 32], strides = [1, 1]} : vector<8x128xf32> to vector<8x32xf32>
    %464 = math.tanh %463 : vector<8x32xf32>
    %465 = vector.extract_strided_slice %462 {offsets = [0, 0], sizes = [8, 32], strides = [1, 1]} : vector<8x96xf32> to vector<8x32xf32>
    %466 = vector.extract_strided_slice %462 {offsets = [0, 32], sizes = [8, 32], strides = [1, 1]} : vector<8x96xf32> to vector<8x32xf32>
    %467 = vector.extract_strided_slice %462 {offsets = [0, 64], sizes = [8, 32], strides = [1, 1]} : vector<8x96xf32> to vector<8x32xf32>
    %468 = arith.mulf %466, %405 : vector<8x32xf32>
    %469 = arith.mulf %465, %464 : vector<8x32xf32>
    %470 = arith.addf %468, %469 : vector<8x32xf32>
    %471 = math.tanh %470 : vector<8x32xf32>
    %472 = arith.mulf %467, %471 : vector<8x32xf32>
    %473 = arith.index_cast %c6_i32 : i32 to index
    %c0_145 = arith.constant 0 : index
    %c0_146 = arith.constant 0 : index
    %474 = vector.load %arg3[%473, %c0_145, %c0_146] : memref<8x8x1xf32, #tpu.memory_space<vmem>>, vector<1x8x1xf32>
    %475 = vector.shape_cast %474 : vector<1x8x1xf32> to vector<8x1xf32>
    %cst_147 = arith.constant 1.000000e+00 : f32
    %476 = vector.broadcast %cst_147 : f32 to vector<8x1xf32>
    %477 = arith.subf %476, %475 : vector<8x1xf32>
    %478 = vector.broadcast %477 : vector<8x1xf32> to vector<8x32xf32>
    %479 = arith.mulf %478, %407 : vector<8x32xf32>
    %480 = vector.broadcast %475 : vector<8x1xf32> to vector<8x32xf32>
    %481 = arith.mulf %480, %472 : vector<8x32xf32>
    %482 = arith.addf %479, %481 : vector<8x32xf32>
    %c1_i32_148 = arith.constant 1 : i32
    %483 = vector.broadcast %c1_i32_148 : i32 to vector<8x1xi32>
    %484 = arith.subi %35, %483 : vector<8x1xi32>
    %485 = vector.broadcast %c6_i32 : i32 to vector<8x1xi32>
    %486 = arith.cmpi eq, %484, %485 : vector<8x1xi32>
    %cst_149 = arith.constant 0.000000e+00 : f32
    %487 = vector.shape_cast %486 : vector<8x1xi1> to vector<8x1xi1>
    %488 = vector.broadcast %487 : vector<8x1xi1> to vector<8x32xi1>
    %489 = vector.broadcast %cst_149 : f32 to vector<8x32xf32>
    %490 = arith.select %488, %482, %489 : vector<8x32xi1>, vector<8x32xf32>
    %491 = arith.addf %426, %490 : vector<8x32xf32>
    %c7_i32 = arith.constant 7 : i32
    %492 = arith.index_cast %c7_i32 : i32 to index
    %c0_150 = arith.constant 0 : index
    %c0_151 = arith.constant 0 : index
    %493 = vector.load %arg23[%492, %c0_150, %c0_151] : memref<8x8x128xf32, #tpu.memory_space<vmem>>, vector<1x8x128xf32>
    %494 = vector.shape_cast %493 : vector<1x8x128xf32> to vector<8x128xf32>
    %495 = arith.truncf %449 : vector<8x32xf32> to vector<8x32xbf16>
    %c0_152 = arith.constant 0 : index
    %c0_153 = arith.constant 0 : index
    %496 = vector.load %arg12[%c0_152, %c0_153] : memref<32x128xbf16, #tpu.memory_space<vmem>>, vector<32x128xbf16>
    %cst_154 = arith.constant dense<0.000000e+00> : vector<8x128xf32>
    %497 = tpu.matmul %495, %496, %cst_154 {dimension_numbers = #tpu.dot_dimension_numbers<[1], [0], [0], [1], [0, 0, 1, 1], [], []>} : vector<8x32xbf16>, vector<32x128xbf16>, vector<8x128xf32> -> vector<8x128xf32>
    %498 = arith.addf %494, %497 : vector<8x128xf32>
    %499 = vector.extract_strided_slice %498 {offsets = [0, 0], sizes = [8, 96], strides = [1, 1]} : vector<8x128xf32> to vector<8x96xf32>
    %500 = arith.negf %499 : vector<8x96xf32>
    %501 = math.exp %500 : vector<8x96xf32>
    %cst_155 = arith.constant 1.000000e+00 : f32
    %502 = vector.broadcast %cst_155 : f32 to vector<8x96xf32>
    %503 = arith.addf %502, %501 : vector<8x96xf32>
    %504 = arith.divf %502, %503 : vector<8x96xf32>
    %505 = vector.extract_strided_slice %498 {offsets = [0, 96], sizes = [8, 32], strides = [1, 1]} : vector<8x128xf32> to vector<8x32xf32>
    %506 = math.tanh %505 : vector<8x32xf32>
    %507 = vector.extract_strided_slice %504 {offsets = [0, 0], sizes = [8, 32], strides = [1, 1]} : vector<8x96xf32> to vector<8x32xf32>
    %508 = vector.extract_strided_slice %504 {offsets = [0, 32], sizes = [8, 32], strides = [1, 1]} : vector<8x96xf32> to vector<8x32xf32>
    %509 = vector.extract_strided_slice %504 {offsets = [0, 64], sizes = [8, 32], strides = [1, 1]} : vector<8x96xf32> to vector<8x32xf32>
    %510 = arith.mulf %508, %447 : vector<8x32xf32>
    %511 = arith.mulf %507, %506 : vector<8x32xf32>
    %512 = arith.addf %510, %511 : vector<8x32xf32>
    %513 = math.tanh %512 : vector<8x32xf32>
    %514 = arith.mulf %509, %513 : vector<8x32xf32>
    %515 = tpu.concatenate %514, %472 in 1 : vector<8x32xf32>, vector<8x32xf32> -> vector<8x64xf32>
    %516 = arith.truncf %515 : vector<8x64xf32> to vector<8x64xbf16>
    %c0_156 = arith.constant 0 : index
    %c0_157 = arith.constant 0 : index
    %517 = vector.load %arg13[%c0_156, %c0_157] : memref<64x128xbf16, #tpu.memory_space<vmem>>, vector<64x128xbf16>
    %cst_158 = arith.constant dense<0.000000e+00> : vector<8x128xf32>
    %518 = tpu.matmul %516, %517, %cst_158 {dimension_numbers = #tpu.dot_dimension_numbers<[1], [0], [0], [1], [0, 0, 1, 1], [], []>} : vector<8x64xbf16>, vector<64x128xbf16>, vector<8x128xf32> -> vector<8x128xf32>
    %c0_159 = arith.constant 0 : index
    %c0_160 = arith.constant 0 : index
    %519 = vector.load %arg15[%c0_159, %c0_160] : memref<1x128xf32, #tpu.memory_space<vmem>>, vector<1x128xf32>
    %520 = vector.broadcast %519 : vector<1x128xf32> to vector<8x128xf32>
    %521 = arith.addf %518, %520 : vector<8x128xf32>
    %522 = vector.extract_strided_slice %521 {offsets = [0, 0], sizes = [8, 96], strides = [1, 1]} : vector<8x128xf32> to vector<8x96xf32>
    %523 = arith.negf %522 : vector<8x96xf32>
    %524 = math.exp %523 : vector<8x96xf32>
    %cst_161 = arith.constant 1.000000e+00 : f32
    %525 = vector.broadcast %cst_161 : f32 to vector<8x96xf32>
    %526 = arith.addf %525, %524 : vector<8x96xf32>
    %527 = arith.divf %525, %526 : vector<8x96xf32>
    %528 = vector.extract_strided_slice %521 {offsets = [0, 96], sizes = [8, 32], strides = [1, 1]} : vector<8x128xf32> to vector<8x32xf32>
    %529 = math.tanh %528 : vector<8x32xf32>
    %530 = vector.extract_strided_slice %527 {offsets = [0, 0], sizes = [8, 32], strides = [1, 1]} : vector<8x96xf32> to vector<8x32xf32>
    %531 = vector.extract_strided_slice %527 {offsets = [0, 32], sizes = [8, 32], strides = [1, 1]} : vector<8x96xf32> to vector<8x32xf32>
    %532 = vector.extract_strided_slice %527 {offsets = [0, 64], sizes = [8, 32], strides = [1, 1]} : vector<8x96xf32> to vector<8x32xf32>
    %533 = arith.mulf %531, %470 : vector<8x32xf32>
    %534 = arith.mulf %530, %529 : vector<8x32xf32>
    %535 = arith.addf %533, %534 : vector<8x32xf32>
    %536 = math.tanh %535 : vector<8x32xf32>
    %537 = arith.mulf %532, %536 : vector<8x32xf32>
    %538 = arith.index_cast %c7_i32 : i32 to index
    %c0_162 = arith.constant 0 : index
    %c0_163 = arith.constant 0 : index
    %539 = vector.load %arg3[%538, %c0_162, %c0_163] : memref<8x8x1xf32, #tpu.memory_space<vmem>>, vector<1x8x1xf32>
    %540 = vector.shape_cast %539 : vector<1x8x1xf32> to vector<8x1xf32>
    %cst_164 = arith.constant 1.000000e+00 : f32
    %541 = vector.broadcast %cst_164 : f32 to vector<8x1xf32>
    %542 = arith.subf %541, %540 : vector<8x1xf32>
    %543 = vector.broadcast %542 : vector<8x1xf32> to vector<8x32xf32>
    %544 = arith.mulf %543, %472 : vector<8x32xf32>
    %545 = vector.broadcast %540 : vector<8x1xf32> to vector<8x32xf32>
    %546 = arith.mulf %545, %537 : vector<8x32xf32>
    %547 = arith.addf %544, %546 : vector<8x32xf32>
    %c1_i32_165 = arith.constant 1 : i32
    %548 = vector.broadcast %c1_i32_165 : i32 to vector<8x1xi32>
    %549 = arith.subi %35, %548 : vector<8x1xi32>
    %550 = vector.broadcast %c7_i32 : i32 to vector<8x1xi32>
    %551 = arith.cmpi eq, %549, %550 : vector<8x1xi32>
    %cst_166 = arith.constant 0.000000e+00 : f32
    %552 = vector.shape_cast %551 : vector<8x1xi1> to vector<8x1xi1>
    %553 = vector.broadcast %552 : vector<8x1xi1> to vector<8x32xi1>
    %554 = vector.broadcast %cst_166 : f32 to vector<8x32xf32>
    %555 = arith.select %553, %547, %554 : vector<8x32xi1>, vector<8x32xf32>
    %556 = arith.addf %491, %555 : vector<8x32xf32>
    %c8_i32 = arith.constant 8 : i32
    %557 = arith.truncf %556 : vector<8x32xf32> to vector<8x32xbf16>
    %c0_167 = arith.constant 0 : index
    %c0_168 = arith.constant 0 : index
    %558 = vector.load %arg16[%c0_167, %c0_168] : memref<32x32xbf16, #tpu.memory_space<vmem>>, vector<32x32xbf16>
    %cst_169 = arith.constant dense<0.000000e+00> : vector<8x32xf32>
    %559 = tpu.matmul %557, %558, %cst_169 {dimension_numbers = #tpu.dot_dimension_numbers<[1], [0], [0], [1], [0, 0, 1, 1], [], []>} : vector<8x32xbf16>, vector<32x32xbf16>, vector<8x32xf32> -> vector<8x32xf32>
    %c0_170 = arith.constant 0 : index
    %c0_171 = arith.constant 0 : index
    %560 = vector.load %arg19[%c0_170, %c0_171] : memref<1x32xf32, #tpu.memory_space<vmem>>, vector<1x32xf32>
    %561 = vector.broadcast %560 : vector<1x32xf32> to vector<8x32xf32>
    %562 = arith.addf %559, %561 : vector<8x32xf32>
    %563 = math.tanh %562 : vector<8x32xf32>
    %564 = arith.truncf %563 : vector<8x32xf32> to vector<8x32xbf16>
    %c0_172 = arith.constant 0 : index
    %c0_173 = arith.constant 0 : index
    %565 = vector.load %arg17[%c0_172, %c0_173] : memref<32x32xbf16, #tpu.memory_space<vmem>>, vector<32x32xbf16>
    %cst_174 = arith.constant dense<0.000000e+00> : vector<8x32xf32>
    %566 = tpu.matmul %564, %565, %cst_174 {dimension_numbers = #tpu.dot_dimension_numbers<[1], [0], [0], [1], [0, 0, 1, 1], [], []>} : vector<8x32xbf16>, vector<32x32xbf16>, vector<8x32xf32> -> vector<8x32xf32>
    %c0_175 = arith.constant 0 : index
    %c0_176 = arith.constant 0 : index
    %567 = vector.load %arg20[%c0_175, %c0_176] : memref<1x32xf32, #tpu.memory_space<vmem>>, vector<1x32xf32>
    %568 = vector.broadcast %567 : vector<1x32xf32> to vector<8x32xf32>
    %569 = arith.addf %566, %568 : vector<8x32xf32>
    %570 = math.tanh %569 : vector<8x32xf32>
    %571 = arith.truncf %570 : vector<8x32xf32> to vector<8x32xbf16>
    %c0_177 = arith.constant 0 : index
    %c0_178 = arith.constant 0 : index
    %572 = vector.load %arg18[%c0_177, %c0_178] : memref<32x128xbf16, #tpu.memory_space<vmem>>, vector<32x128xbf16>
    %cst_179 = arith.constant dense<0.000000e+00> : vector<8x128xf32>
    %573 = tpu.matmul %571, %572, %cst_179 {dimension_numbers = #tpu.dot_dimension_numbers<[1], [0], [0], [1], [0, 0, 1, 1], [], []>} : vector<8x32xbf16>, vector<32x128xbf16>, vector<8x128xf32> -> vector<8x128xf32>
    %c0_180 = arith.constant 0 : index
    %c0_181 = arith.constant 0 : index
    %574 = vector.load %arg21[%c0_180, %c0_181] : memref<1x128xf32, #tpu.memory_space<vmem>>, vector<1x128xf32>
    %575 = vector.broadcast %574 : vector<1x128xf32> to vector<8x128xf32>
    %576 = arith.addf %573, %575 : vector<8x128xf32>
    %c0_182 = arith.constant 0 : index
    %c0_183 = arith.constant 0 : index
    %577 = vector.load %arg22[%c0_182, %c0_183] : memref<8x128xf32, #tpu.memory_space<vmem>>, vector<8x128xf32>
    tpu.vector_store %arg22[%c0_182, %c0_183], %576 {strides = array<i32>} : memref<8x128xf32, #tpu.memory_space<vmem>>, vector<8x128xf32>,
    return
  }
  func.func @transform_0(%arg0: i32) -> (i32, i32) {
    %c0_i32 = arith.constant 0 : i32
    %c0_i32_0 = arith.constant 0 : i32
    return %arg0, %c0_i32 : i32, i32
  }
  func.func @transform_1(%arg0: i32) -> (i32, i32, i32) {
    %c0_i32 = arith.constant 0 : i32
    %c0_i32_0 = arith.constant 0 : i32
    %c0_i32_1 = arith.constant 0 : i32
    return %c0_i32, %arg0, %c0_i32_0 : i32, i32, i32
  }
  func.func @transform_2(%arg0: i32) -> (i32, i32, i32) {
    %c0_i32 = arith.constant 0 : i32
    %c0_i32_0 = arith.constant 0 : i32
    %c0_i32_1 = arith.constant 0 : i32
    return %c0_i32, %arg0, %c0_i32_0 : i32, i32, i32
  }
  func.func @transform_3(%arg0: i32) -> (i32, i32) {
    %c0_i32 = arith.constant 0 : i32
    %c0_i32_0 = arith.constant 0 : i32
    return %arg0, %c0_i32 : i32, i32
  }
  func.func @transform_4(%arg0: i32) -> (i32, i32) {
    %c0_i32 = arith.constant 0 : i32
    %c0_i32_0 = arith.constant 0 : i32
    %c0_i32_1 = arith.constant 0 : i32
    return %c0_i32, %c0_i32_0 : i32, i32
  }
  func.func @transform_5(%arg0: i32) -> (i32, i32) {
    %c0_i32 = arith.constant 0 : i32
    %c0_i32_0 = arith.constant 0 : i32
    %c0_i32_1 = arith.constant 0 : i32
    return %c0_i32, %c0_i32_0 : i32, i32
  }
  func.func @transform_6(%arg0: i32) -> (i32, i32) {
    %c0_i32 = arith.constant 0 : i32
    %c0_i32_0 = arith.constant 0 : i32
    %c0_i32_1 = arith.constant 0 : i32
    return %c0_i32, %c0_i32_0 : i32, i32
  }
  func.func @transform_7(%arg0: i32) -> (i32, i32) {
    %c0_i32 = arith.constant 0 : i32
    %c0_i32_0 = arith.constant 0 : i32
    %c0_i32_1 = arith.constant 0 : i32
    return %c0_i32, %c0_i32_0 : i32, i32
  }
  func.func @transform_8(%arg0: i32) -> (i32, i32) {
    %c0_i32 = arith.constant 0 : i32
    %c0_i32_0 = arith.constant 0 : i32
    %c0_i32_1 = arith.constant 0 : i32
    return %c0_i32, %c0_i32_0 : i32, i32
  }
  func.func @transform_9(%arg0: i32) -> (i32, i32) {
    %c0_i32 = arith.constant 0 : i32
    %c0_i32_0 = arith.constant 0 : i32
    %c0_i32_1 = arith.constant 0 : i32
    return %c0_i32, %c0_i32_0 : i32, i32
  }
  func.func @transform_10(%arg0: i32) -> (i32, i32) {
    %c0_i32 = arith.constant 0 : i32
    %c0_i32_0 = arith.constant 0 : i32
    %c0_i32_1 = arith.constant 0 : i32
    return %c0_i32, %c0_i32_0 : i32, i32
  }
  func.func @transform_11(%arg0: i32) -> (i32, i32) {
    %c0_i32 = arith.constant 0 : i32
    %c0_i32_0 = arith.constant 0 : i32
    %c0_i32_1 = arith.constant 0 : i32
    return %c0_i32, %c0_i32_0 : i32, i32
  }
  func.func @transform_12(%arg0: i32) -> (i32, i32) {
    %c0_i32 = arith.constant 0 : i32
    %c0_i32_0 = arith.constant 0 : i32
    %c0_i32_1 = arith.constant 0 : i32
    return %c0_i32, %c0_i32_0 : i32, i32
  }
  func.func @transform_13(%arg0: i32) -> (i32, i32) {
    %c0_i32 = arith.constant 0 : i32
    %c0_i32_0 = arith.constant 0 : i32
    %c0_i32_1 = arith.constant 0 : i32
    return %c0_i32, %c0_i32_0 : i32, i32
  }
  func.func @transform_14(%arg0: i32) -> (i32, i32) {
    %c0_i32 = arith.constant 0 : i32
    %c0_i32_0 = arith.constant 0 : i32
    %c0_i32_1 = arith.constant 0 : i32
    return %c0_i32, %c0_i32_0 : i32, i32
  }
  func.func @transform_15(%arg0: i32) -> (i32, i32) {
    %c0_i32 = arith.constant 0 : i32
    %c0_i32_0 = arith.constant 0 : i32
    %c0_i32_1 = arith.constant 0 : i32
    return %c0_i32, %c0_i32_0 : i32, i32
  }
  func.func @transform_16(%arg0: i32) -> (i32, i32) {
    %c0_i32 = arith.constant 0 : i32
    %c0_i32_0 = arith.constant 0 : i32
    %c0_i32_1 = arith.constant 0 : i32
    return %c0_i32, %c0_i32_0 : i32, i32
  }
  func.func @transform_17(%arg0: i32) -> (i32, i32) {
    %c0_i32 = arith.constant 0 : i32
    %c0_i32_0 = arith.constant 0 : i32
    %c0_i32_1 = arith.constant 0 : i32
    return %c0_i32, %c0_i32_0 : i32, i32
  }
  func.func @transform_18(%arg0: i32) -> (i32, i32) {
    %c0_i32 = arith.constant 0 : i32
    %c0_i32_0 = arith.constant 0 : i32
    %c0_i32_1 = arith.constant 0 : i32
    return %c0_i32, %c0_i32_0 : i32, i32
  }
  func.func @transform_19(%arg0: i32) -> (i32, i32) {
    %c0_i32 = arith.constant 0 : i32
    %c0_i32_0 = arith.constant 0 : i32
    %c0_i32_1 = arith.constant 0 : i32
    return %c0_i32, %c0_i32_0 : i32, i32
  }
  func.func @transform_20(%arg0: i32) -> (i32, i32) {
    %c0_i32 = arith.constant 0 : i32
    %c0_i32_0 = arith.constant 0 : i32
    %c0_i32_1 = arith.constant 0 : i32
    return %c0_i32, %c0_i32_0 : i32, i32
  }
  func.func @transform_21(%arg0: i32) -> (i32, i32) {
    %c0_i32 = arith.constant 0 : i32
    %c0_i32_0 = arith.constant 0 : i32
    return %arg0, %c0_i32 : i32, i32
  }
}

</mosaic_0001>

<llo_original>
// kernel: tpu_custom_call.1
$region0: #{tpu_custom_call.1}
  #allocation0 [shape = 'u32[]', space=smem, size = 0x4, offset = 0x4, fixed_abs, tag = 'smem constant byte address 0x4 - core index']
  #allocation1 [shape = 'u32[144,128]{1,0:T(1,128)}', space=vmem, size = 0x12000, scoped, tag = 'internal scratch']
  #allocation2 [shape = 'f32[8,8,128]{2,1,0:T(8,128)}', space=vmem, size = 0x8000, scoped, tag = 'scratch operand']
  %s0 = inlined_call_operand.vmem [shape: f32[8,4], index: 0, kind: input, shape index: {}]
  %s1 = inlined_call_operand.vmem [shape: f32[8,8,4], index: 1, kind: input, shape index: {}]
  %s2 = inlined_call_operand.vmem [shape: f32[8,8,1], index: 2, kind: input, shape index: {}]
  %s3 = inlined_call_operand.vmem [shape: s32[8,1], index: 3, kind: input, shape index: {}]
  %s4 = inlined_call_operand.vmem [shape: bf16[4,64], index: 4, kind: input, shape index: {}]
  %s5 = inlined_call_operand.vmem [shape: bf16[64,64], index: 5, kind: input, shape index: {}]
  %s6 = inlined_call_operand.vmem [shape: bf16[64,64], index: 6, kind: input, shape index: {}]
  %s7 = inlined_call_operand.vmem [shape: f32[1,64], index: 7, kind: input, shape index: {}]
  %s8 = inlined_call_operand.vmem [shape: f32[1,64], index: 8, kind: input, shape index: {}]
  %s9 = inlined_call_operand.vmem [shape: f32[1,64], index: 9, kind: input, shape index: {}]
  %s10 = inlined_call_operand.vmem [shape: bf16[4,128], index: 10, kind: input, shape index: {}]
  %s11 = inlined_call_operand.vmem [shape: bf16[32,128], index: 11, kind: input, shape index: {}]
  %s12 = inlined_call_operand.vmem [shape: bf16[64,128], index: 12, kind: input, shape index: {}]
  %s13 = inlined_call_operand.vmem [shape: f32[1,128], index: 13, kind: input, shape index: {}]
  %s14 = inlined_call_operand.vmem [shape: f32[1,128], index: 14, kind: input, shape index: {}]
  %s15 = inlined_call_operand.vmem [shape: bf16[32,32], index: 15, kind: input, shape index: {}]
  %s16 = inlined_call_operand.vmem [shape: bf16[32,32], index: 16, kind: input, shape index: {}]
  %s17 = inlined_call_operand.vmem [shape: bf16[32,128], index: 17, kind: input, shape index: {}]
  %s18 = inlined_call_operand.vmem [shape: f32[1,32], index: 18, kind: input, shape index: {}]
  %s19 = inlined_call_operand.vmem [shape: f32[1,32], index: 19, kind: input, shape index: {}]
  %s20 = inlined_call_operand.vmem [shape: f32[1,128], index: 20, kind: input, shape index: {}]
  %s21 = inlined_call_operand.hbm [shape: f32[8,128], index: 21, kind: output, shape index: {}]
  %s22 = sld [smem:[#allocation0]]
  $region94: #{tpu_custom_call.1} parent=0
    _
  %s24 = ssub.s32 1, %s22
  %s25 = scalar_select 0, %s24, %s22
  $region1: #{tpu_custom_call.1} parent=0
    #allocation3 [shape = 'u8[4096]{0}', space=vmem, size = 0x1000, scoped, tag = 'output window, operand 0, single buffered']
    #allocation4 [shape = 's32[1]{0}', space=sflag, size = 0x4, scoped, tag = 'scoped memory for tpu_custom_call.1']
    %26 = vsyncpa [#allocation4], 0
    // Predicated region
    $region2: #{tpu_custom_call.1} parent=1 // pred_check
      _
    $region3: #{tpu_custom_call.1} parent=1 // pred_check_branch
      %28 = sbr.rel (0) target = $region5
    $region4: #{tpu_custom_call.1} parent=1 // pred_region
      _
    $region5: #{tpu_custom_call.1} parent=1 // pred_fallthru
      _
    // Predicated region
    $region6: #{tpu_custom_call.1} parent=1 // pred_check
      _
    $region7: #{tpu_custom_call.1} parent=1 // pred_check_branch
      %30 = sbr.rel (0) target = $region9
    $region8: #{tpu_custom_call.1} parent=1 // pred_region
      _
    $region9: #{tpu_custom_call.1} parent=1 // pred_fallthru
      _
    // Predicated region
    $region10: #{tpu_custom_call.1} parent=1 // pred_check
      _
    $region11: #{tpu_custom_call.1} parent=1 // pred_check_branch
      %32 = sbr.rel (0) target = $region13
    $region12: #{tpu_custom_call.1} parent=1 // pred_region
      _
    $region13: #{tpu_custom_call.1} parent=1 // pred_fallthru
      _
    // Predicated region
    $region14: #{tpu_custom_call.1} parent=1 // pred_check
      _
    $region15: #{tpu_custom_call.1} parent=1 // pred_check_branch
      %34 = sbr.rel (0) target = $region17
    $region16: #{tpu_custom_call.1} parent=1 // pred_region
      _
    $region17: #{tpu_custom_call.1} parent=1 // pred_fallthru
      _
    // Predicated region
    $region18: #{tpu_custom_call.1} parent=1 // pred_check
      _
    $region19: #{tpu_custom_call.1} parent=1 // pred_check_branch
      %36 = sbr.rel (0) target = $region21
    $region20: #{tpu_custom_call.1} parent=1 // pred_region
      _
    $region21: #{tpu_custom_call.1} parent=1 // pred_fallthru
      _
    // Predicated region
    $region22: #{tpu_custom_call.1} parent=1 // pred_check
      _
    $region23: #{tpu_custom_call.1} parent=1 // pred_check_branch
      %38 = sbr.rel (0) target = $region25
    $region24: #{tpu_custom_call.1} parent=1 // pred_region
      _
    $region25: #{tpu_custom_call.1} parent=1 // pred_fallthru
      _
    // Predicated region
    $region26: #{tpu_custom_call.1} parent=1 // pred_check
      _
    $region27: #{tpu_custom_call.1} parent=1 // pred_check_branch
      %40 = sbr.rel (0) target = $region29
    $region28: #{tpu_custom_call.1} parent=1 // pred_region
      _
    $region29: #{tpu_custom_call.1} parent=1 // pred_fallthru
      _
    // Predicated region
    $region30: #{tpu_custom_call.1} parent=1 // pred_check
      _
    $region31: #{tpu_custom_call.1} parent=1 // pred_check_branch
      %42 = sbr.rel (0) target = $region33
    $region32: #{tpu_custom_call.1} parent=1 // pred_region
      _
    $region33: #{tpu_custom_call.1} parent=1 // pred_fallthru
      _
    // Predicated region
    $region34: #{tpu_custom_call.1} parent=1 // pred_check
      _
    $region35: #{tpu_custom_call.1} parent=1 // pred_check_branch
      %44 = sbr.rel (0) target = $region37
    $region36: #{tpu_custom_call.1} parent=1 // pred_region
      _
    $region37: #{tpu_custom_call.1} parent=1 // pred_fallthru
      _
    // Predicated region
    $region38: #{tpu_custom_call.1} parent=1 // pred_check
      _
    $region39: #{tpu_custom_call.1} parent=1 // pred_check_branch
      %46 = sbr.rel (0) target = $region41
    $region40: #{tpu_custom_call.1} parent=1 // pred_region
      _
    $region41: #{tpu_custom_call.1} parent=1 // pred_fallthru
      _
    // Predicated region
    $region42: #{tpu_custom_call.1} parent=1 // pred_check
      _
    $region43: #{tpu_custom_call.1} parent=1 // pred_check_branch
      %48 = sbr.rel (0) target = $region45
    $region44: #{tpu_custom_call.1} parent=1 // pred_region
      _
    $region45: #{tpu_custom_call.1} parent=1 // pred_fallthru
      _
    // Predicated region
    $region46: #{tpu_custom_call.1} parent=1 // pred_check
      _
    $region47: #{tpu_custom_call.1} parent=1 // pred_check_branch
      %50 = sbr.rel (0) target = $region49
    $region48: #{tpu_custom_call.1} parent=1 // pred_region
      _
    $region49: #{tpu_custom_call.1} parent=1 // pred_fallthru
      _
    // Predicated region
    $region50: #{tpu_custom_call.1} parent=1 // pred_check
      _
    $region51: #{tpu_custom_call.1} parent=1 // pred_check_branch
      %52 = sbr.rel (0) target = $region53
    $region52: #{tpu_custom_call.1} parent=1 // pred_region
      _
    $region53: #{tpu_custom_call.1} parent=1 // pred_fallthru
      _
    // Predicated region
    $region54: #{tpu_custom_call.1} parent=1 // pred_check
      _
    $region55: #{tpu_custom_call.1} parent=1 // pred_check_branch
      %54 = sbr.rel (0) target = $region57
    $region56: #{tpu_custom_call.1} parent=1 // pred_region
      _
    $region57: #{tpu_custom_call.1} parent=1 // pred_fallthru
      _
    // Predicated region
    $region58: #{tpu_custom_call.1} parent=1 // pred_check
      _
    $region59: #{tpu_custom_call.1} parent=1 // pred_check_branch
      %56 = sbr.rel (0) target = $region61
    $region60: #{tpu_custom_call.1} parent=1 // pred_region
      _
    $region61: #{tpu_custom_call.1} parent=1 // pred_fallthru
      _
    // Predicated region
    $region62: #{tpu_custom_call.1} parent=1 // pred_check
      _
    $region63: #{tpu_custom_call.1} parent=1 // pred_check_branch
      %58 = sbr.rel (0) target = $region65
    $region64: #{tpu_custom_call.1} parent=1 // pred_region
      _
    $region65: #{tpu_custom_call.1} parent=1 // pred_fallthru
      _
    // Predicated region
    $region66: #{tpu_custom_call.1} parent=1 // pred_check
      _
    $region67: #{tpu_custom_call.1} parent=1 // pred_check_branch
      %60 = sbr.rel (0) target = $region69
    $region68: #{tpu_custom_call.1} parent=1 // pred_region
      _
    $region69: #{tpu_custom_call.1} parent=1 // pred_fallthru
      _
    // Predicated region
    $region70: #{tpu_custom_call.1} parent=1 // pred_check
      _
    $region71: #{tpu_custom_call.1} parent=1 // pred_check_branch
      %62 = sbr.rel (0) target = $region73
    $region72: #{tpu_custom_call.1} parent=1 // pred_region
      _
    $region73: #{tpu_custom_call.1} parent=1 // pred_fallthru
      _
    // Predicated region
    $region74: #{tpu_custom_call.1} parent=1 // pred_check
      _
    $region75: #{tpu_custom_call.1} parent=1 // pred_check_branch
      %64 = sbr.rel (0) target = $region77
    $region76: #{tpu_custom_call.1} parent=1 // pred_region
      _
    $region77: #{tpu_custom_call.1} parent=1 // pred_fallthru
      _
    // Predicated region
    $region78: #{tpu_custom_call.1} parent=1 // pred_check
      _
    $region79: #{tpu_custom_call.1} parent=1 // pred_check_branch
      %66 = sbr.rel (0) target = $region81
    $region80: #{tpu_custom_call.1} parent=1 // pred_region
      _
    $region81: #{tpu_custom_call.1} parent=1 // pred_fallthru
      _
    // Predicated region
    $region82: #{tpu_custom_call.1} parent=1 // pred_check
      _
    $region83: #{tpu_custom_call.1} parent=1 // pred_check_branch
      %68 = sbr.rel (0) target = $region85
    $region84: #{tpu_custom_call.1} parent=1 // pred_region
      _
    $region85: #{tpu_custom_call.1} parent=1 // pred_fallthru
      _
    %v70 = vld [vmem:[%s0] sm:$0xff]
    %v71 = vpack.c.bf16 %v70, %v70
    %v72 = vld [vmem:[%s4] sm:$0x3]
    %v73 = vld [vmem:[%s7] sm:$0x1]
    %v75 = vlaneseq
    %v76 = vshrl.u32 %v75, 7
    %v77 = vsub.s32 0, %v76
    %v78 = vrot.slane %v73, %v77
    %vm80 = vcmask 31744
    %v82 = vsel %vm80, %v71, 0
    %vm84 = vcmask 1041408
    %v86 = vsel %vm84, %v72, 0
    %88 = vmatprep.subr.bf16.mxu0 0
    %89 = vmatpush1.bf16.msra.mxu0 0
    %90 = vmatprep.subr.bf16.mxu0 0
    %91 = vmatpush1.bf16.msra.mxu0 0
    %92 = vmatprep.subr.bf16.mxu0 0
    %93 = vmatpush1.bf16.msra.mxu0 0
    %94 = vmatprep.subr.bf16.mxu0 0
    %95 = vmatpush1.bf16.msra.mxu0 0
    %96 = vmatprep.subr.bf16.mxu0 0
    %97 = vmatpush1.bf16.msra.mxu0 0
    %98 = vmatprep.subr.bf16.mxu0 0
    %99 = vmatpush1.bf16.msra.mxu0 0
    %100 = vmatprep.subr.bf16.mxu0 0
    %101 = vmatpush1.bf16.msra.mxu0 0
    %102 = vmatprep.subr.bf16.mxu0 0
    %103 = vmatpush1.bf16.msra.mxu0 %v86
    %104 = vmatprep.subr.bf16.mxu0 0
    %105 = vmatpush2.bf16.msra.mxu0 0
    %106 = vmatprep.subr.bf16.mxu0 0
    %107 = vmatpush2.bf16.msra.mxu0 0
    %108 = vmatprep.subr.bf16.mxu0 0
    %109 = vmatpush2.bf16.msra.mxu0 0
    %110 = vmatprep.subr.bf16.mxu0 0
    %111 = vmatpush2.bf16.msra.mxu0 0
    %112 = vmatprep.subr.bf16.mxu0 0
    %113 = vmatpush2.bf16.msra.mxu0 0
    %114 = vmatprep.subr.bf16.mxu0 0
    %115 = vmatpush2.bf16.msra.mxu0 0
    %116 = vmatprep.subr.bf16.mxu0 0
    %117 = vmatpush2.bf16.msra.mxu0 0
    %118 = vmatprep.subr.bf16.mxu0 0
    %119 = vmatpush2.bf16.msra.mxu0 0
    %120 = vmatprep.mubr.bf16.mxu0 0
    %121 = vmatmul.mubr.bf16.gmra.mxu0 %v82
    %v122 = vpop.f32.mrf.mxu0
    %v123 = vadd.f32 %v78, %v122
    %v124 = vpop.f32.mrf.mxu0
    %v125 = vpop.f32.mrf.mxu0
    %v126 = vpop.f32.mrf.mxu0
    %127 = vdwg.mxu0
    %v128 = vtanh.pop %v123
    %v129 = vpack.c.bf16 %v128, %v128
    %v130 = vld [vmem:[%s5] sm:$0xf]
    %v131 = vld [vmem:[%s5 + $0x4] sm:$0xf]
    %v132 = vld [vmem:[%s5 + $0x8] sm:$0xf]
    %v133 = vld [vmem:[%s5 + $0xc] sm:$0xf]
    %v134 = vld [vmem:[%s5 + $0x10] sm:$0xf]
    %v135 = vld [vmem:[%s5 + $0x14] sm:$0xf]
    %v136 = vld [vmem:[%s5 + $0x18] sm:$0xf]
    %v137 = vld [vmem:[%s5 + $0x1c] sm:$0xf]
    %v138 = vld [vmem:[%s8] sm:$0x1]
    %v140 = vlaneseq
    %v141 = vshrl.u32 %v140, 7
    %v142 = vsub.s32 0, %v141
    %v143 = vrot.slane %v138, %v142
    %v153 = vunpack.c.l.b16 %v130
    %v154 = vunpack.c.l.b16 %v131
    %v155 = vunpack.c.l.b16 %v132
    %v156 = vunpack.c.l.b16 %v133
    %v157 = vunpack.c.l.b16 %v134
    %v158 = vunpack.c.l.b16 %v135
    %v159 = vunpack.c.l.b16 %v136
    %v160 = vunpack.c.l.b16 %v137
    %v161 = vpack.c.b16 %v154, %v153
    %v162 = vpack.c.b16 %v156, %v155
    %v163 = vpack.c.b16 %v158, %v157
    %v164 = vpack.c.b16 %v160, %v159
    %vm169 = vcmask 523264
    %v171 = vsel %vm169, %v129, 0
    %173 = vmatprep.subr.bf16.mxu0 0
    %174 = vmatpush1.bf16.msra.mxu0 0
    %175 = vmatprep.subr.bf16.mxu0 0
    %176 = vmatpush1.bf16.msra.mxu0 0
    %177 = vmatprep.subr.bf16.mxu0 0
    %178 = vmatpush1.bf16.msra.mxu0 0
    %179 = vmatprep.subr.bf16.mxu0 0
    %180 = vmatpush1.bf16.msra.mxu0 0
    %181 = vmatprep.subr.bf16.mxu0 0
    %182 = vmatpush1.bf16.msra.mxu0 %v164
    %183 = vmatprep.subr.bf16.mxu0 0
    %184 = vmatpush1.bf16.msra.mxu0 %v163
    %185 = vmatprep.subr.bf16.mxu0 0
    %186 = vmatpush1.bf16.msra.mxu0 %v162
    %187 = vmatprep.subr.bf16.mxu0 0
    %188 = vmatpush1.bf16.msra.mxu0 %v161
    %189 = vmatprep.subr.bf16.mxu0 0
    %190 = vmatpush2.bf16.msra.mxu0 0
    %191 = vmatprep.subr.bf16.mxu0 0
    %192 = vmatpush2.bf16.msra.mxu0 0
    %193 = vmatprep.subr.bf16.mxu0 0
    %194 = vmatpush2.bf16.msra.mxu0 0
    %195 = vmatprep.subr.bf16.mxu0 0
    %196 = vmatpush2.bf16.msra.mxu0 0
    %197 = vmatprep.subr.bf16.mxu0 0
    %198 = vmatpush2.bf16.msra.mxu0 0
    %199 = vmatprep.subr.bf16.mxu0 0
    %200 = vmatpush2.bf16.msra.mxu0 0
    %201 = vmatprep.subr.bf16.mxu0 0
    %202 = vmatpush2.bf16.msra.mxu0 0
    %203 = vmatprep.subr.bf16.mxu0 0
    %204 = vmatpush2.bf16.msra.mxu0 0
    %205 = vmatprep.mubr.bf16.mxu0 0
    %206 = vmatmul.mubr.bf16.gmra.mxu0 %v171
    %v207 = vpop.f32.mrf.mxu0
    %v208 = vadd.f32 %v143, %v207
    %v209 = vpop.f32.mrf.mxu0
    %v210 = vpop.f32.mrf.mxu0
    %v211 = vpop.f32.mrf.mxu0
    %212 = vdwg.mxu0
    %v213 = vtanh.pop %v208
    %v214 = vpack.c.bf16 %v213, %v213
    %v215 = vld [vmem:[%s6] sm:$0xf]
    %v216 = vld [vmem:[%s6 + $0x4] sm:$0xf]
    %v217 = vld [vmem:[%s6 + $0x8] sm:$0xf]
    %v218 = vld [vmem:[%s6 + $0xc] sm:$0xf]
    %v219 = vld [vmem:[%s6 + $0x10] sm:$0xf]
    %v220 = vld [vmem:[%s6 + $0x14] sm:$0xf]
    %v221 = vld [vmem:[%s6 + $0x18] sm:$0xf]
    %v222 = vld [vmem:[%s6 + $0x1c] sm:$0xf]
    %v223 = vld [vmem:[%s9] sm:$0x1]
    %v225 = vlaneseq
    %v226 = vshrl.u32 %v225, 7
    %v227 = vsub.s32 0, %v226
    %v228 = vrot.slane %v223, %v227
    %v238 = vunpack.c.l.b16 %v215
    %v239 = vunpack.c.l.b16 %v216
    %v240 = vunpack.c.l.b16 %v217
    %v241 = vunpack.c.l.b16 %v218
    %v242 = vunpack.c.l.b16 %v219
    %v243 = vunpack.c.l.b16 %v220
    %v244 = vunpack.c.l.b16 %v221
    %v245 = vunpack.c.l.b16 %v222
    %v246 = vpack.c.b16 %v239, %v238
    %v247 = vpack.c.b16 %v241, %v240
    %v248 = vpack.c.b16 %v243, %v242
    %v249 = vpack.c.b16 %v245, %v244
    %v255 = vsel %vm169, %v214, 0
    %257 = vmatprep.subr.bf16.mxu0 0
    %258 = vmatpush1.bf16.msra.mxu0 0
    %259 = vmatprep.subr.bf16.mxu0 0
    %260 = vmatpush1.bf16.msra.mxu0 0
    %261 = vmatprep.subr.bf16.mxu0 0
    %262 = vmatpush1.bf16.msra.mxu0 0
    %263 = vmatprep.subr.bf16.mxu0 0
    %264 = vmatpush1.bf16.msra.mxu0 0
    %265 = vmatprep.subr.bf16.mxu0 0
    %266 = vmatpush1.bf16.msra.mxu0 %v249
    %267 = vmatprep.subr.bf16.mxu0 0
    %268 = vmatpush1.bf16.msra.mxu0 %v248
    %269 = vmatprep.subr.bf16.mxu0 0
    %270 = vmatpush1.bf16.msra.mxu0 %v247
    %271 = vmatprep.subr.bf16.mxu0 0
    %272 = vmatpush1.bf16.msra.mxu0 %v246
    %273 = vmatprep.subr.bf16.mxu0 0
    %274 = vmatpush2.bf16.msra.mxu0 0
    %275 = vmatprep.subr.bf16.mxu0 0
    %276 = vmatpush2.bf16.msra.mxu0 0
    %277 = vmatprep.subr.bf16.mxu0 0
    %278 = vmatpush2.bf16.msra.mxu0 0
    %279 = vmatprep.subr.bf16.mxu0 0
    %280 = vmatpush2.bf16.msra.mxu0 0
    %281 = vmatprep.subr.bf16.mxu0 0
    %282 = vmatpush2.bf16.msra.mxu0 0
    %283 = vmatprep.subr.bf16.mxu0 0
    %284 = vmatpush2.bf16.msra.mxu0 0
    %285 = vmatprep.subr.bf16.mxu0 0
    %286 = vmatpush2.bf16.msra.mxu0 0
    %287 = vmatprep.subr.bf16.mxu0 0
    %288 = vmatpush2.bf16.msra.mxu0 0
    %289 = vmatprep.mubr.bf16.mxu0 0
    %290 = vmatmul.mubr.bf16.gmra.mxu0 %v255
    %v291 = vpop.f32.mrf.mxu0
    %v292 = vadd.f32 %v228, %v291
    %v293 = vpop.f32.mrf.mxu0
    %v294 = vpop.f32.mrf.mxu0
    %v295 = vpop.f32.mrf.mxu0
    %296 = vdwg.mxu0
    %v297 = vld [vmem:[%s1] sm:$0xff]
    %v298 = vld [vmem:[%s1 + $0x8] sm:$0xff]
    %v299 = vld [vmem:[%s1 + $0x10] sm:$0xff]
    %v300 = vld [vmem:[%s1 + $0x18] sm:$0xff]
    %v301 = vld [vmem:[%s1 + $0x20] sm:$0xff]
    %v302 = vld [vmem:[%s1 + $0x28] sm:$0xff]
    %v303 = vld [vmem:[%s1 + $0x30] sm:$0xff]
    %v304 = vld [vmem:[%s1 + $0x38] sm:$0xff]
    %v305 = vpack.c.bf16 %v298, %v297
    %v306 = vpack.c.bf16 %v300, %v299
    %v307 = vpack.c.bf16 %v302, %v301
    %v308 = vpack.c.bf16 %v304, %v303
    %v309 = vld [vmem:[%s10] sm:$0x3]
    %v310 = vld [vmem:[%s13] sm:$0x1]
    %v312 = vlaneseq
    %v313 = vshrl.u32 %v312, 7
    %v314 = vsub.s32 0, %v313
    %v315 = vrot.slane %v310, %v314
    %v318 = vsel %vm80, %v305, 0
    %v321 = vsel %vm80, %v306, 0
    %v324 = vsel %vm80, %v307, 0
    %v327 = vsel %vm80, %v308, 0
    %v330 = vsel %vm84, %v309, 0
    %332 = vmatprep.subr.bf16.mxu0 0
    %333 = vmatpush1.bf16.msra.mxu0 0
    %334 = vmatprep.subr.bf16.mxu0 0
    %335 = vmatpush1.bf16.msra.mxu0 0
    %336 = vmatprep.subr.bf16.mxu0 0
    %337 = vmatpush1.bf16.msra.mxu0 0
    %338 = vmatprep.subr.bf16.mxu0 0
    %339 = vmatpush1.bf16.msra.mxu0 0
    %340 = vmatprep.subr.bf16.mxu0 0
    %341 = vmatpush1.bf16.msra.mxu0 0
    %342 = vmatprep.subr.bf16.mxu0 0
    %343 = vmatpush1.bf16.msra.mxu0 0
    %344 = vmatprep.subr.bf16.mxu0 0
    %345 = vmatpush1.bf16.msra.mxu0 0
    %346 = vmatprep.subr.bf16.mxu0 0
    %347 = vmatpush1.bf16.msra.mxu0 %v330
    %348 = vmatprep.subr.bf16.mxu0 0
    %349 = vmatpush2.bf16.msra.mxu0 0
    %350 = vmatprep.subr.bf16.mxu0 0
    %351 = vmatpush2.bf16.msra.mxu0 0
    %352 = vmatprep.subr.bf16.mxu0 0
    %353 = vmatpush2.bf16.msra.mxu0 0
    %354 = vmatprep.subr.bf16.mxu0 0
    %355 = vmatpush2.bf16.msra.mxu0 0
    %356 = vmatprep.subr.bf16.mxu0 0
    %357 = vmatpush2.bf16.msra.mxu0 0
    %358 = vmatprep.subr.bf16.mxu0 0
    %359 = vmatpush2.bf16.msra.mxu0 0
    %360 = vmatprep.subr.bf16.mxu0 0
    %361 = vmatpush2.bf16.msra.mxu0 0
    %362 = vmatprep.subr.bf16.mxu0 0
    %363 = vmatpush2.bf16.msra.mxu0 0
    %364 = vmatprep.mubr.bf16.mxu0 0
    %365 = vmatmul.mubr.bf16.gmra.mxu0 %v318
    %v366 = vpop.f32.mrf.mxu0
    %v367 = vadd.f32 %v315, %v366
    %v368 = vpop.f32.mrf.mxu0
    %v369 = vpop.f32.mrf.mxu0
    %v370 = vadd.f32 %v315, %v369
    %v371 = vpop.f32.mrf.mxu0
    %372 = vmatprep.mubr.bf16.mxu0 0
    %373 = vmatmul.mubr.bf16.gmra.mxu0 %v321
    %v374 = vpop.f32.mrf.mxu0
    %v375 = vadd.f32 %v315, %v374
    %v376 = vpop.f32.mrf.mxu0
    %v377 = vpop.f32.mrf.mxu0
    %v378 = vadd.f32 %v315, %v377
    %v379 = vpop.f32.mrf.mxu0
    %380 = vmatprep.mubr.bf16.mxu0 0
    %381 = vmatmul.mubr.bf16.gmra.mxu0 %v324
    %v382 = vpop.f32.mrf.mxu0
    %v383 = vadd.f32 %v315, %v382
    %v384 = vpop.f32.mrf.mxu0
    %v385 = vpop.f32.mrf.mxu0
    %v386 = vadd.f32 %v315, %v385
    %v387 = vpop.f32.mrf.mxu0
    %388 = vmatprep.mubr.bf16.mxu0 0
    %389 = vmatmul.mubr.bf16.gmra.mxu0 %v327
    %v390 = vpop.f32.mrf.mxu0
    %v391 = vadd.f32 %v315, %v390
    %v392 = vpop.f32.mrf.mxu0
    %v393 = vpop.f32.mrf.mxu0
    %v394 = vadd.f32 %v315, %v393
    %v395 = vpop.f32.mrf.mxu0
    %396 = vdwg.mxu0
    %397 = vst [vmem:[#allocation2] sm:$0xff] %v367
    %398 = vst [vmem:[#allocation2 + $0x8] sm:$0xff] %v370
    %399 = vst [vmem:[#allocation2 + $0x10] sm:$0xff] %v375
    %400 = vst [vmem:[#allocation2 + $0x18] sm:$0xff] %v378
    %401 = vst [vmem:[#allocation2 + $0x20] sm:$0xff] %v383
    %402 = vst [vmem:[#allocation2 + $0x28] sm:$0xff] %v386
    %403 = vst [vmem:[#allocation2 + $0x30] sm:$0xff] %v391
    %404 = vst [vmem:[#allocation2 + $0x38] sm:$0xff] %v394
    %v405 = vld [vmem:[%s3] sm:$0xff]
    %v406 = vld [vmem:[#allocation2] sm:$0xff]
    %v407 = vpack.c.bf16 %v292, %v292
    %v408 = vld [vmem:[%s11] sm:$0xf]
    %v409 = vld [vmem:[%s11 + $0x4] sm:$0xf]
    %v410 = vld [vmem:[%s11 + $0x8] sm:$0xf]
    %v411 = vld [vmem:[%s11 + $0xc] sm:$0xf]
    %v416 = vunpack.c.l.b16 %v408
    %v417 = vunpack.c.l.b16 %v409
    %v418 = vunpack.c.l.b16 %v410
    %v419 = vunpack.c.l.b16 %v411
    %v420 = vpack.c.b16 %v417, %v416
    %v421 = vpack.c.b16 %v419, %v418
    %vm424 = vcmask 261120
    %v426 = vsel %vm424, %v407, 0
    %428 = vmatprep.subr.bf16.mxu0 0
    %429 = vmatpush1.bf16.msra.mxu0 0
    %430 = vmatprep.subr.bf16.mxu0 0
    %431 = vmatpush1.bf16.msra.mxu0 0
    %432 = vmatprep.subr.bf16.mxu0 0
    %433 = vmatpush1.bf16.msra.mxu0 0
    %434 = vmatprep.subr.bf16.mxu0 0
    %435 = vmatpush1.bf16.msra.mxu0 0
    %436 = vmatprep.subr.bf16.mxu0 0
    %437 = vmatpush1.bf16.msra.mxu0 0
    %438 = vmatprep.subr.bf16.mxu0 0
    %439 = vmatpush1.bf16.msra.mxu0 0
    %440 = vmatprep.subr.bf16.mxu0 0
    %441 = vmatpush1.bf16.msra.mxu0 %v421
    %442 = vmatprep.subr.bf16.mxu0 0
    %443 = vmatpush1.bf16.msra.mxu0 %v420
    %444 = vmatprep.subr.bf16.mxu0 0
    %445 = vmatpush2.bf16.msra.mxu0 0
    %446 = vmatprep.subr.bf16.mxu0 0
    %447 = vmatpush2.bf16.msra.mxu0 0
    %448 = vmatprep.subr.bf16.mxu0 0
    %449 = vmatpush2.bf16.msra.mxu0 0
    %450 = vmatprep.subr.bf16.mxu0 0
    %451 = vmatpush2.bf16.msra.mxu0 0
    %452 = vmatprep.subr.bf16.mxu0 0
    %453 = vmatpush2.bf16.msra.mxu0 0
    %454 = vmatprep.subr.bf16.mxu0 0
    %455 = vmatpush2.bf16.msra.mxu0 0
    %456 = vmatprep.subr.bf16.mxu0 0
    %457 = vmatpush2.bf16.msra.mxu0 0
    %458 = vmatprep.subr.bf16.mxu0 0
    %459 = vmatpush2.bf16.msra.mxu0 0
    %460 = vmatprep.mubr.bf16.mxu0 0
    %461 = vmatmul.mubr.bf16.gmra.mxu0 %v426
    %v462 = vpop.f32.mrf.mxu0
    %v463 = vadd.f32 0.0, %v462
    %v464 = vpop.f32.mrf.mxu0
    %v465 = vpop.f32.mrf.mxu0
    %v466 = vpop.f32.mrf.mxu0
    %467 = vdwg.mxu0
    %v468 = vadd.f32 %v406, %v463
    %v469 = vxor.u32 %v468, 2147483648
    %v470 = vmul.f32 %v469, 1.442695
    %v471 = vpow.pop %v470
    %v472 = vadd.f32 %v471, 1.0
    %v473 = vrcp.pop %v472
    %v474 = vmul.f32 1.0, %v473
    %v475 = vtanh.pop %v468
    %v476 = vmul.f32 %v474, 0.0
    %478 = vrot.lane.b32.xlu0 %v475, 32
    %v479 = vpop.permute.xlu0 %478
    %v481 = vmul.f32 %v474, %v479
    %483 = vrot.lane.b32.xlu0 %v481, 32
    %v484 = vpop.permute.xlu0 %483
    %v486 = vadd.f32 %v476, %v484
    %v487 = vtanh.pop %v486
    %489 = vrot.lane.b32.xlu0 %v487, 32
    %v490 = vpop.permute.xlu0 %489
    %v492 = vmul.f32 %v474, %v490
    %494 = vrot.lane.b32.xlu0 %v492, 64
    %v495 = vpop.permute.xlu0 %494
    %v497 = vsel %vm424, %v495, %v292
    %v498 = vpack.c.bf16 %v497, %v497
    %v499 = vld [vmem:[%s12] sm:$0xf]
    %v500 = vld [vmem:[%s12 + $0x4] sm:$0xf]
    %v501 = vld [vmem:[%s12 + $0x8] sm:$0xf]
    %v502 = vld [vmem:[%s12 + $0xc] sm:$0xf]
    %v503 = vld [vmem:[%s12 + $0x10] sm:$0xf]
    %v504 = vld [vmem:[%s12 + $0x14] sm:$0xf]
    %v505 = vld [vmem:[%s12 + $0x18] sm:$0xf]
    %v506 = vld [vmem:[%s12 + $0x1c] sm:$0xf]
    %v507 = vld [vmem:[%s14] sm:$0x1]
    %v509 = vlaneseq
    %v510 = vshrl.u32 %v509, 7
    %v511 = vsub.s32 0, %v510
    %v512 = vrot.slane %v507, %v511
    %v522 = vunpack.c.l.b16 %v499
    %v523 = vunpack.c.l.b16 %v500
    %v524 = vunpack.c.l.b16 %v501
    %v525 = vunpack.c.l.b16 %v502
    %v526 = vunpack.c.l.b16 %v503
    %v527 = vunpack.c.l.b16 %v504
    %v528 = vunpack.c.l.b16 %v505
    %v529 = vunpack.c.l.b16 %v506
    %v530 = vpack.c.b16 %v523, %v522
    %v531 = vpack.c.b16 %v525, %v524
    %v532 = vpack.c.b16 %v527, %v526
    %v533 = vpack.c.b16 %v529, %v528
    %v539 = vsel %vm169, %v498, 0
    %541 = vmatprep.subr.bf16.mxu0 0
    %542 = vmatpush1.bf16.msra.mxu0 0
    %543 = vmatprep.subr.bf16.mxu0 0
    %544 = vmatpush1.bf16.msra.mxu0 0
    %545 = vmatprep.subr.bf16.mxu0 0
    %546 = vmatpush1.bf16.msra.mxu0 0
    %547 = vmatprep.subr.bf16.mxu0 0
    %548 = vmatpush1.bf16.msra.mxu0 0
    %549 = vmatprep.subr.bf16.mxu0 0
    %550 = vmatpush1.bf16.msra.mxu0 %v533
    %551 = vmatprep.subr.bf16.mxu0 0
    %552 = vmatpush1.bf16.msra.mxu0 %v532
    %553 = vmatprep.subr.bf16.mxu0 0
    %554 = vmatpush1.bf16.msra.mxu0 %v531
    %555 = vmatprep.subr.bf16.mxu0 0
    %556 = vmatpush1.bf16.msra.mxu0 %v530
    %557 = vmatprep.subr.bf16.mxu0 0
    %558 = vmatpush2.bf16.msra.mxu0 0
    %559 = vmatprep.subr.bf16.mxu0 0
    %560 = vmatpush2.bf16.msra.mxu0 0
    %561 = vmatprep.subr.bf16.mxu0 0
    %562 = vmatpush2.bf16.msra.mxu0 0
    %563 = vmatprep.subr.bf16.mxu0 0
    %564 = vmatpush2.bf16.msra.mxu0 0
    %565 = vmatprep.subr.bf16.mxu0 0
    %566 = vmatpush2.bf16.msra.mxu0 0
    %567 = vmatprep.subr.bf16.mxu0 0
    %568 = vmatpush2.bf16.msra.mxu0 0
    %569 = vmatprep.subr.bf16.mxu0 0
    %570 = vmatpush2.bf16.msra.mxu0 0
    %571 = vmatprep.subr.bf16.mxu0 0
    %572 = vmatpush2.bf16.msra.mxu0 0
    %573 = vmatprep.mubr.bf16.mxu0 0
    %574 = vmatmul.mubr.bf16.gmra.mxu0 %v539
    %v575 = vpop.f32.mrf.mxu0
    %v576 = vadd.f32 %v512, %v575
    %v577 = vpop.f32.mrf.mxu0
    %v578 = vpop.f32.mrf.mxu0
    %v579 = vpop.f32.mrf.mxu0
    %580 = vdwg.mxu0
    %v581 = vxor.u32 %v576, 2147483648
    %v582 = vmul.f32 %v581, 1.442695
    %v583 = vpow.pop %v582
    %v584 = vadd.f32 %v583, 1.0
    %v585 = vrcp.pop %v584
    %v586 = vmul.f32 1.0, %v585
    %v587 = vtanh.pop %v576
    %v588 = vmul.f32 %v586, 0.0
    %590 = vrot.lane.b32.xlu0 %v587, 32
    %v591 = vpop.permute.xlu0 %590
    %v593 = vmul.f32 %v586, %v591
    %595 = vrot.lane.b32.xlu0 %v593, 32
    %v596 = vpop.permute.xlu0 %595
    %v598 = vadd.f32 %v588, %v596
    %v599 = vtanh.pop %v598
    %601 = vrot.lane.b32.xlu0 %v599, 32
    %v602 = vpop.permute.xlu0 %601
    %v604 = vmul.f32 %v586, %v602
    %v605 = vld [vmem:[%s2] sm:$0xff]
    %v606 = vsub.f32 1.0, %v605
    %608 = vset.pattern.permute.xlu0 0
    %609 = vperm.xlu0 %608, %v606
    %v610 = vpop.permute.xlu0 %609
    %v612 = vmul.f32 %v610, %v292
    %614 = vset.pattern.permute.xlu0 0
    %615 = vperm.xlu0 %614, %v605
    %v616 = vpop.permute.xlu0 %615
    %v618 = vmul.f32 %v616, %v604
    %620 = vrot.lane.b32.xlu0 %v618, 96
    %v621 = vpop.permute.xlu0 %620
    %v623 = vadd.f32 %v612, %v621
    %v624 = vsub.s32 %v405, 1
    %vm625 = vcmp.eq.s32.totalorder %v624, 0
    %v626 = vsel %vm625, 1, 0
    %627 = vset.pattern.permute.xlu0 0
    %628 = vperm.xlu0 %627, %v626
    %v629 = vpop.permute.xlu0 %628
    %vm630 = vcmp.eq.s32.totalorder %v629, 1
    %v631 = vsel %vm630, %v623, 0.0
    %v632 = vadd.f32 %v631, 0.0
    %s633 = scalar_lea.vmem [#allocation2], 8
    %v634 = vld [vmem:[%s633] sm:$0xff]
    %v635 = vpack.c.bf16 %v492, %v492
    %637 = vrot.lane.b32.xlu0 %v635, 64
    %v638 = vpop.permute.xlu0 %637
    %v640 = vsel %vm424, %v638, 0
    %642 = vmatprep.subr.bf16.mxu0 0
    %643 = vmatpush1.bf16.msra.mxu0 0
    %644 = vmatprep.subr.bf16.mxu0 0
    %645 = vmatpush1.bf16.msra.mxu0 0
    %646 = vmatprep.subr.bf16.mxu0 0
    %647 = vmatpush1.bf16.msra.mxu0 0
    %648 = vmatprep.subr.bf16.mxu0 0
    %649 = vmatpush1.bf16.msra.mxu0 0
    %650 = vmatprep.subr.bf16.mxu0 0
    %651 = vmatpush1.bf16.msra.mxu0 0
    %652 = vmatprep.subr.bf16.mxu0 0
    %653 = vmatpush1.bf16.msra.mxu0 0
    %654 = vmatprep.subr.bf16.mxu0 0
    %655 = vmatpush1.bf16.msra.mxu0 %v421
    %656 = vmatprep.subr.bf16.mxu0 0
    %657 = vmatpush1.bf16.msra.mxu0 %v420
    %658 = vmatprep.subr.bf16.mxu0 0
    %659 = vmatpush2.bf16.msra.mxu0 0
    %660 = vmatprep.subr.bf16.mxu0 0
    %661 = vmatpush2.bf16.msra.mxu0 0
    %662 = vmatprep.subr.bf16.mxu0 0
    %663 = vmatpush2.bf16.msra.mxu0 0
    %664 = vmatprep.subr.bf16.mxu0 0
    %665 = vmatpush2.bf16.msra.mxu0 0
    %666 = vmatprep.subr.bf16.mxu0 0
    %667 = vmatpush2.bf16.msra.mxu0 0
    %668 = vmatprep.subr.bf16.mxu0 0
    %669 = vmatpush2.bf16.msra.mxu0 0
    %670 = vmatprep.subr.bf16.mxu0 0
    %671 = vmatpush2.bf16.msra.mxu0 0
    %672 = vmatprep.subr.bf16.mxu0 0
    %673 = vmatpush2.bf16.msra.mxu0 0
    %674 = vmatprep.mubr.bf16.mxu0 0
    %675 = vmatmul.mubr.bf16.gmra.mxu0 %v640
    %v676 = vpop.f32.mrf.mxu0
    %v677 = vadd.f32 0.0, %v676
    %v678 = vpop.f32.mrf.mxu0
    %v679 = vpop.f32.mrf.mxu0
    %v680 = vpop.f32.mrf.mxu0
    %681 = vdwg.mxu0
    %v682 = vadd.f32 %v634, %v677
    %v683 = vxor.u32 %v682, 2147483648
    %v684 = vmul.f32 %v683, 1.442695
    %v685 = vpow.pop %v684
    %v686 = vadd.f32 %v685, 1.0
    %v687 = vrcp.pop %v686
    %v688 = vmul.f32 1.0, %v687
    %v689 = vtanh.pop %v682
    %v690 = vmul.f32 %v688, %v486
    %692 = vrot.lane.b32.xlu0 %v689, 32
    %v693 = vpop.permute.xlu0 %692
    %v695 = vmul.f32 %v688, %v693
    %697 = vrot.lane.b32.xlu0 %v695, 32
    %v698 = vpop.permute.xlu0 %697
    %v700 = vadd.f32 %v690, %v698
    %v701 = vtanh.pop %v700
    %703 = vrot.lane.b32.xlu0 %v701, 32
    %v704 = vpop.permute.xlu0 %703
    %v706 = vmul.f32 %v688, %v704
    %708 = vrot.lane.b32.xlu0 %v706, 64
    %v709 = vpop.permute.xlu0 %708
    %712 = vrot.lane.b32.xlu0 %v604, 96
    %v713 = vpop.permute.xlu0 %712
    %v715 = vsel %vm424, %v709, %v713
    %v716 = vpack.c.bf16 %v715, %v715
    %v718 = vsel %vm169, %v716, 0
    %720 = vmatprep.subr.bf16.mxu0 0
    %721 = vmatpush1.bf16.msra.mxu0 0
    %722 = vmatprep.subr.bf16.mxu0 0
    %723 = vmatpush1.bf16.msra.mxu0 0
    %724 = vmatprep.subr.bf16.mxu0 0
    %725 = vmatpush1.bf16.msra.mxu0 0
    %726 = vmatprep.subr.bf16.mxu0 0
    %727 = vmatpush1.bf16.msra.mxu0 0
    %728 = vmatprep.subr.bf16.mxu0 0
    %729 = vmatpush1.bf16.msra.mxu0 %v533
    %730 = vmatprep.subr.bf16.mxu0 0
    %731 = vmatpush1.bf16.msra.mxu0 %v532
    %732 = vmatprep.subr.bf16.mxu0 0
    %733 = vmatpush1.bf16.msra.mxu0 %v531
    %734 = vmatprep.subr.bf16.mxu0 0
    %735 = vmatpush1.bf16.msra.mxu0 %v530
    %736 = vmatprep.subr.bf16.mxu0 0
    %737 = vmatpush2.bf16.msra.mxu0 0
    %738 = vmatprep.subr.bf16.mxu0 0
    %739 = vmatpush2.bf16.msra.mxu0 0
    %740 = vmatprep.subr.bf16.mxu0 0
    %741 = vmatpush2.bf16.msra.mxu0 0
    %742 = vmatprep.subr.bf16.mxu0 0
    %743 = vmatpush2.bf16.msra.mxu0 0
    %744 = vmatprep.subr.bf16.mxu0 0
    %745 = vmatpush2.bf16.msra.mxu0 0
    %746 = vmatprep.subr.bf16.mxu0 0
    %747 = vmatpush2.bf16.msra.mxu0 0
    %748 = vmatprep.subr.bf16.mxu0 0
    %749 = vmatpush2.bf16.msra.mxu0 0
    %750 = vmatprep.subr.bf16.mxu0 0
    %751 = vmatpush2.bf16.msra.mxu0 0
    %752 = vmatprep.mubr.bf16.mxu0 0
    %753 = vmatmul.mubr.bf16.gmra.mxu0 %v718
    %v754 = vpop.f32.mrf.mxu0
    %v755 = vadd.f32 %v512, %v754
    %v756 = vpop.f32.mrf.mxu0
    %v757 = vpop.f32.mrf.mxu0
    %v758 = vpop.f32.mrf.mxu0
    %759 = vdwg.mxu0
    %v760 = vxor.u32 %v755, 2147483648
    %v761 = vmul.f32 %v760, 1.442695
    %v762 = vpow.pop %v761
    %v763 = vadd.f32 %v762, 1.0
    %v764 = vrcp.pop %v763
    %v765 = vmul.f32 1.0, %v764
    %v766 = vtanh.pop %v755
    %v767 = vmul.f32 %v765, %v598
    %769 = vrot.lane.b32.xlu0 %v766, 32
    %v770 = vpop.permute.xlu0 %769
    %v772 = vmul.f32 %v765, %v770
    %774 = vrot.lane.b32.xlu0 %v772, 32
    %v775 = vpop.permute.xlu0 %774
    %v777 = vadd.f32 %v767, %v775
    %v778 = vtanh.pop %v777
    %780 = vrot.lane.b32.xlu0 %v778, 32
    %v781 = vpop.permute.xlu0 %780
    %v783 = vmul.f32 %v765, %v781
    %s784 = scalar_lea.vmem %s2, 8
    %v785 = vld [vmem:[%s784] sm:$0xff]
    %v786 = vsub.f32 1.0, %v785
    %788 = vset.pattern.permute.xlu0 0
    %789 = vperm.xlu0 %788, %v786
    %v790 = vpop.permute.xlu0 %789
    %v792 = vmul.f32 %v790, %v604
    %794 = vset.pattern.permute.xlu0 0
    %795 = vperm.xlu0 %794, %v785
    %v796 = vpop.permute.xlu0 %795
    %v798 = vmul.f32 %v796, %v783
    %v799 = vadd.f32 %v792, %v798
    %vm800 = vcmp.eq.s32.totalorder %v624, 1
    %v801 = vsel %vm800, 1, 0
    %802 = vset.pattern.permute.xlu0 0
    %803 = vperm.xlu0 %802, %v801
    %v804 = vpop.permute.xlu0 %803
    %vm805 = vcmp.eq.s32.totalorder %v804, 1
    %v806 = vsel %vm805, %v799, 0.0
    %808 = vrot.lane.b32.xlu0 %v806, 96
    %v809 = vpop.permute.xlu0 %808
    %v811 = vadd.f32 %v632, %v809
    %s812 = scalar_lea.vmem [#allocation2], 16
    %v813 = vld [vmem:[%s812] sm:$0xff]
    %v814 = vpack.c.bf16 %v706, %v706
    %816 = vrot.lane.b32.xlu0 %v814, 64
    %v817 = vpop.permute.xlu0 %816
    %v819 = vsel %vm424, %v817, 0
    %821 = vmatprep.subr.bf16.mxu0 0
    %822 = vmatpush1.bf16.msra.mxu0 0
    %823 = vmatprep.subr.bf16.mxu0 0
    %824 = vmatpush1.bf16.msra.mxu0 0
    %825 = vmatprep.subr.bf16.mxu0 0
    %826 = vmatpush1.bf16.msra.mxu0 0
    %827 = vmatprep.subr.bf16.mxu0 0
    %828 = vmatpush1.bf16.msra.mxu0 0
    %829 = vmatprep.subr.bf16.mxu0 0
    %830 = vmatpush1.bf16.msra.mxu0 0
    %831 = vmatprep.subr.bf16.mxu0 0
    %832 = vmatpush1.bf16.msra.mxu0 0
    %833 = vmatprep.subr.bf16.mxu0 0
    %834 = vmatpush1.bf16.msra.mxu0 %v421
    %835 = vmatprep.subr.bf16.mxu0 0
    %836 = vmatpush1.bf16.msra.mxu0 %v420
    %837 = vmatprep.subr.bf16.mxu0 0
    %838 = vmatpush2.bf16.msra.mxu0 0
    %839 = vmatprep.subr.bf16.mxu0 0
    %840 = vmatpush2.bf16.msra.mxu0 0
    %841 = vmatprep.subr.bf16.mxu0 0
    %842 = vmatpush2.bf16.msra.mxu0 0
    %843 = vmatprep.subr.bf16.mxu0 0
    %844 = vmatpush2.bf16.msra.mxu0 0
    %845 = vmatprep.subr.bf16.mxu0 0
    %846 = vmatpush2.bf16.msra.mxu0 0
    %847 = vmatprep.subr.bf16.mxu0 0
    %848 = vmatpush2.bf16.msra.mxu0 0
    %849 = vmatprep.subr.bf16.mxu0 0
    %850 = vmatpush2.bf16.msra.mxu0 0
    %851 = vmatprep.subr.bf16.mxu0 0
    %852 = vmatpush2.bf16.msra.mxu0 0
    %853 = vmatprep.mubr.bf16.mxu0 0
    %854 = vmatmul.mubr.bf16.gmra.mxu0 %v819
    %v855 = vpop.f32.mrf.mxu0
    %v856 = vadd.f32 0.0, %v855
    %v857 = vpop.f32.mrf.mxu0
    %v858 = vpop.f32.mrf.mxu0
    %v859 = vpop.f32.mrf.mxu0
    %860 = vdwg.mxu0
    %v861 = vadd.f32 %v813, %v856
    %v862 = vxor.u32 %v861, 2147483648
    %v863 = vmul.f32 %v862, 1.442695
    %v864 = vpow.pop %v863
    %v865 = vadd.f32 %v864, 1.0
    %v866 = vrcp.pop %v865
    %v867 = vmul.f32 1.0, %v866
    %v868 = vtanh.pop %v861
    %v869 = vmul.f32 %v867, %v700
    %871 = vrot.lane.b32.xlu0 %v868, 32
    %v872 = vpop.permute.xlu0 %871
    %v874 = vmul.f32 %v867, %v872
    %876 = vrot.lane.b32.xlu0 %v874, 32
    %v877 = vpop.permute.xlu0 %876
    %v879 = vadd.f32 %v869, %v877
    %v880 = vtanh.pop %v879
    %882 = vrot.lane.b32.xlu0 %v880, 32
    %v883 = vpop.permute.xlu0 %882
    %v885 = vmul.f32 %v867, %v883
    %887 = vrot.lane.b32.xlu0 %v885, 64
    %v888 = vpop.permute.xlu0 %887
    %891 = vrot.lane.b32.xlu0 %v783, 96
    %v892 = vpop.permute.xlu0 %891
    %v894 = vsel %vm424, %v888, %v892
    %v895 = vpack.c.bf16 %v894, %v894
    %v897 = vsel %vm169, %v895, 0
    %899 = vmatprep.subr.bf16.mxu0 0
    %900 = vmatpush1.bf16.msra.mxu0 0
    %901 = vmatprep.subr.bf16.mxu0 0
    %902 = vmatpush1.bf16.msra.mxu0 0
    %903 = vmatprep.subr.bf16.mxu0 0
    %904 = vmatpush1.bf16.msra.mxu0 0
    %905 = vmatprep.subr.bf16.mxu0 0
    %906 = vmatpush1.bf16.msra.mxu0 0
    %907 = vmatprep.subr.bf16.mxu0 0
    %908 = vmatpush1.bf16.msra.mxu0 %v533
    %909 = vmatprep.subr.bf16.mxu0 0
    %910 = vmatpush1.bf16.msra.mxu0 %v532
    %911 = vmatprep.subr.bf16.mxu0 0
    %912 = vmatpush1.bf16.msra.mxu0 %v531
    %913 = vmatprep.subr.bf16.mxu0 0
    %914 = vmatpush1.bf16.msra.mxu0 %v530
    %915 = vmatprep.subr.bf16.mxu0 0
    %916 = vmatpush2.bf16.msra.mxu0 0
    %917 = vmatprep.subr.bf16.mxu0 0
    %918 = vmatpush2.bf16.msra.mxu0 0
    %919 = vmatprep.subr.bf16.mxu0 0
    %920 = vmatpush2.bf16.msra.mxu0 0
    %921 = vmatprep.subr.bf16.mxu0 0
    %922 = vmatpush2.bf16.msra.mxu0 0
    %923 = vmatprep.subr.bf16.mxu0 0
    %924 = vmatpush2.bf16.msra.mxu0 0
    %925 = vmatprep.subr.bf16.mxu0 0
    %926 = vmatpush2.bf16.msra.mxu0 0
    %927 = vmatprep.subr.bf16.mxu0 0
    %928 = vmatpush2.bf16.msra.mxu0 0
    %929 = vmatprep.subr.bf16.mxu0 0
    %930 = vmatpush2.bf16.msra.mxu0 0
    %931 = vmatprep.mubr.bf16.mxu0 0
    %932 = vmatmul.mubr.bf16.gmra.mxu0 %v897
    %v933 = vpop.f32.mrf.mxu0
    %v934 = vadd.f32 %v512, %v933
    %v935 = vpop.f32.mrf.mxu0
    %v936 = vpop.f32.mrf.mxu0
    %v937 = vpop.f32.mrf.mxu0
    %938 = vdwg.mxu0
    %v939 = vxor.u32 %v934, 2147483648
    %v940 = vmul.f32 %v939, 1.442695
    %v941 = vpow.pop %v940
    %v942 = vadd.f32 %v941, 1.0
    %v943 = vrcp.pop %v942
    %v944 = vmul.f32 1.0, %v943
    %v945 = vtanh.pop %v934
    %v946 = vmul.f32 %v944, %v777
    %948 = vrot.lane.b32.xlu0 %v945, 32
    %v949 = vpop.permute.xlu0 %948
    %v951 = vmul.f32 %v944, %v949
    %953 = vrot.lane.b32.xlu0 %v951, 32
    %v954 = vpop.permute.xlu0 %953
    %v956 = vadd.f32 %v946, %v954
    %v957 = vtanh.pop %v956
    %959 = vrot.lane.b32.xlu0 %v957, 32
    %v960 = vpop.permute.xlu0 %959
    %v962 = vmul.f32 %v944, %v960
    %s963 = scalar_lea.vmem %s2, 16
    %v964 = vld [vmem:[%s963] sm:$0xff]
    %v965 = vsub.f32 1.0, %v964
    %967 = vset.pattern.permute.xlu0 0
    %968 = vperm.xlu0 %967, %v965
    %v969 = vpop.permute.xlu0 %968
    %v971 = vmul.f32 %v969, %v783
    %973 = vset.pattern.permute.xlu0 0
    %974 = vperm.xlu0 %973, %v964
    %v975 = vpop.permute.xlu0 %974
    %v977 = vmul.f32 %v975, %v962
    %v978 = vadd.f32 %v971, %v977
    %vm979 = vcmp.eq.s32.totalorder %v624, 2
    %v980 = vsel %vm979, 1, 0
    %981 = vset.pattern.permute.xlu0 0
    %982 = vperm.xlu0 %981, %v980
    %v983 = vpop.permute.xlu0 %982
    %vm984 = vcmp.eq.s32.totalorder %v983, 1
    %v985 = vsel %vm984, %v978, 0.0
    %987 = vrot.lane.b32.xlu0 %v985, 96
    %v988 = vpop.permute.xlu0 %987
    %v990 = vadd.f32 %v811, %v988
    %s991 = scalar_lea.vmem [#allocation2], 24
    %v992 = vld [vmem:[%s991] sm:$0xff]
    %v993 = vpack.c.bf16 %v885, %v885
    %995 = vrot.lane.b32.xlu0 %v993, 64
    %v996 = vpop.permute.xlu0 %995
    %v998 = vsel %vm424, %v996, 0
    %1000 = vmatprep.subr.bf16.mxu0 0
    %1001 = vmatpush1.bf16.msra.mxu0 0
    %1002 = vmatprep.subr.bf16.mxu0 0
    %1003 = vmatpush1.bf16.msra.mxu0 0
    %1004 = vmatprep.subr.bf16.mxu0 0
    %1005 = vmatpush1.bf16.msra.mxu0 0
    %1006 = vmatprep.subr.bf16.mxu0 0
    %1007 = vmatpush1.bf16.msra.mxu0 0
    %1008 = vmatprep.subr.bf16.mxu0 0
    %1009 = vmatpush1.bf16.msra.mxu0 0
    %1010 = vmatprep.subr.bf16.mxu0 0
    %1011 = vmatpush1.bf16.msra.mxu0 0
    %1012 = vmatprep.subr.bf16.mxu0 0
    %1013 = vmatpush1.bf16.msra.mxu0 %v421
    %1014 = vmatprep.subr.bf16.mxu0 0
    %1015 = vmatpush1.bf16.msra.mxu0 %v420
    %1016 = vmatprep.subr.bf16.mxu0 0
    %1017 = vmatpush2.bf16.msra.mxu0 0
    %1018 = vmatprep.subr.bf16.mxu0 0
    %1019 = vmatpush2.bf16.msra.mxu0 0
    %1020 = vmatprep.subr.bf16.mxu0 0
    %1021 = vmatpush2.bf16.msra.mxu0 0
    %1022 = vmatprep.subr.bf16.mxu0 0
    %1023 = vmatpush2.bf16.msra.mxu0 0
    %1024 = vmatprep.subr.bf16.mxu0 0
    %1025 = vmatpush2.bf16.msra.mxu0 0
    %1026 = vmatprep.subr.bf16.mxu0 0
    %1027 = vmatpush2.bf16.msra.mxu0 0
    %1028 = vmatprep.subr.bf16.mxu0 0
    %1029 = vmatpush2.bf16.msra.mxu0 0
    %1030 = vmatprep.subr.bf16.mxu0 0
    %1031 = vmatpush2.bf16.msra.mxu0 0
    %1032 = vmatprep.mubr.bf16.mxu0 0
    %1033 = vmatmul.mubr.bf16.gmra.mxu0 %v998
    %v1034 = vpop.f32.mrf.mxu0
    %v1035 = vadd.f32 0.0, %v1034
    %v1036 = vpop.f32.mrf.mxu0
    %v1037 = vpop.f32.mrf.mxu0
    %v1038 = vpop.f32.mrf.mxu0
    %1039 = vdwg.mxu0
    %v1040 = vadd.f32 %v992, %v1035
    %v1041 = vxor.u32 %v1040, 2147483648
    %v1042 = vmul.f32 %v1041, 1.442695
    %v1043 = vpow.pop %v1042
    %v1044 = vadd.f32 %v1043, 1.0
    %v1045 = vrcp.pop %v1044
    %v1046 = vmul.f32 1.0, %v1045
    %v1047 = vtanh.pop %v1040
    %v1048 = vmul.f32 %v1046, %v879
    %1050 = vrot.lane.b32.xlu0 %v1047, 32
    %v1051 = vpop.permute.xlu0 %1050
    %v1053 = vmul.f32 %v1046, %v1051
    %1055 = vrot.lane.b32.xlu0 %v1053, 32
    %v1056 = vpop.permute.xlu0 %1055
    %v1058 = vadd.f32 %v1048, %v1056
    %v1059 = vtanh.pop %v1058
    %1061 = vrot.lane.b32.xlu0 %v1059, 32
    %v1062 = vpop.permute.xlu0 %1061
    %v1064 = vmul.f32 %v1046, %v1062
    %1066 = vrot.lane.b32.xlu0 %v1064, 64
    %v1067 = vpop.permute.xlu0 %1066
    %1070 = vrot.lane.b32.xlu0 %v962, 96
    %v1071 = vpop.permute.xlu0 %1070
    %v1073 = vsel %vm424, %v1067, %v1071
    %v1074 = vpack.c.bf16 %v1073, %v1073
    %v1076 = vsel %vm169, %v1074, 0
    %1078 = vmatprep.subr.bf16.mxu0 0
    %1079 = vmatpush1.bf16.msra.mxu0 0
    %1080 = vmatprep.subr.bf16.mxu0 0
    %1081 = vmatpush1.bf16.msra.mxu0 0
    %1082 = vmatprep.subr.bf16.mxu0 0
    %1083 = vmatpush1.bf16.msra.mxu0 0
    %1084 = vmatprep.subr.bf16.mxu0 0
    %1085 = vmatpush1.bf16.msra.mxu0 0
    %1086 = vmatprep.subr.bf16.mxu0 0
    %1087 = vmatpush1.bf16.msra.mxu0 %v533
    %1088 = vmatprep.subr.bf16.mxu0 0
    %1089 = vmatpush1.bf16.msra.mxu0 %v532
    %1090 = vmatprep.subr.bf16.mxu0 0
    %1091 = vmatpush1.bf16.msra.mxu0 %v531
    %1092 = vmatprep.subr.bf16.mxu0 0
    %1093 = vmatpush1.bf16.msra.mxu0 %v530
    %1094 = vmatprep.subr.bf16.mxu0 0
    %1095 = vmatpush2.bf16.msra.mxu0 0
    %1096 = vmatprep.subr.bf16.mxu0 0
    %1097 = vmatpush2.bf16.msra.mxu0 0
    %1098 = vmatprep.subr.bf16.mxu0 0
    %1099 = vmatpush2.bf16.msra.mxu0 0
    %1100 = vmatprep.subr.bf16.mxu0 0
    %1101 = vmatpush2.bf16.msra.mxu0 0
    %1102 = vmatprep.subr.bf16.mxu0 0
    %1103 = vmatpush2.bf16.msra.mxu0 0
    %1104 = vmatprep.subr.bf16.mxu0 0
    %1105 = vmatpush2.bf16.msra.mxu0 0
    %1106 = vmatprep.subr.bf16.mxu0 0
    %1107 = vmatpush2.bf16.msra.mxu0 0
    %1108 = vmatprep.subr.bf16.mxu0 0
    %1109 = vmatpush2.bf16.msra.mxu0 0
    %1110 = vmatprep.mubr.bf16.mxu0 0
    %1111 = vmatmul.mubr.bf16.gmra.mxu0 %v1076
    %v1112 = vpop.f32.mrf.mxu0
    %v1113 = vadd.f32 %v512, %v1112
    %v1114 = vpop.f32.mrf.mxu0
    %v1115 = vpop.f32.mrf.mxu0
    %v1116 = vpop.f32.mrf.mxu0
    %1117 = vdwg.mxu0
    %v1118 = vxor.u32 %v1113, 2147483648
    %v1119 = vmul.f32 %v1118, 1.442695
    %v1120 = vpow.pop %v1119
    %v1121 = vadd.f32 %v1120, 1.0
    %v1122 = vrcp.pop %v1121
    %v1123 = vmul.f32 1.0, %v1122
    %v1124 = vtanh.pop %v1113
    %v1125 = vmul.f32 %v1123, %v956
    %1127 = vrot.lane.b32.xlu0 %v1124, 32
    %v1128 = vpop.permute.xlu0 %1127
    %v1130 = vmul.f32 %v1123, %v1128
    %1132 = vrot.lane.b32.xlu0 %v1130, 32
    %v1133 = vpop.permute.xlu0 %1132
    %v1135 = vadd.f32 %v1125, %v1133
    %v1136 = vtanh.pop %v1135
    %1138 = vrot.lane.b32.xlu0 %v1136, 32
    %v1139 = vpop.permute.xlu0 %1138
    %v1141 = vmul.f32 %v1123, %v1139
    %s1142 = scalar_lea.vmem %s2, 24
    %v1143 = vld [vmem:[%s1142] sm:$0xff]
    %v1144 = vsub.f32 1.0, %v1143
    %1146 = vset.pattern.permute.xlu0 0
    %1147 = vperm.xlu0 %1146, %v1144
    %v1148 = vpop.permute.xlu0 %1147
    %v1150 = vmul.f32 %v1148, %v962
    %1152 = vset.pattern.permute.xlu0 0
    %1153 = vperm.xlu0 %1152, %v1143
    %v1154 = vpop.permute.xlu0 %1153
    %v1156 = vmul.f32 %v1154, %v1141
    %v1157 = vadd.f32 %v1150, %v1156
    %vm1158 = vcmp.eq.s32.totalorder %v624, 3
    %v1159 = vsel %vm1158, 1, 0
    %1160 = vset.pattern.permute.xlu0 0
    %1161 = vperm.xlu0 %1160, %v1159
    %v1162 = vpop.permute.xlu0 %1161
    %vm1163 = vcmp.eq.s32.totalorder %v1162, 1
    %v1164 = vsel %vm1163, %v1157, 0.0
    %1166 = vrot.lane.b32.xlu0 %v1164, 96
    %v1167 = vpop.permute.xlu0 %1166
    %v1169 = vadd.f32 %v990, %v1167
    %s1170 = scalar_lea.vmem [#allocation2], 32
    %v1171 = vld [vmem:[%s1170] sm:$0xff]
    %v1172 = vpack.c.bf16 %v1064, %v1064
    %1174 = vrot.lane.b32.xlu0 %v1172, 64
    %v1175 = vpop.permute.xlu0 %1174
    %v1177 = vsel %vm424, %v1175, 0
    %1179 = vmatprep.subr.bf16.mxu0 0
    %1180 = vmatpush1.bf16.msra.mxu0 0
    %1181 = vmatprep.subr.bf16.mxu0 0
    %1182 = vmatpush1.bf16.msra.mxu0 0
    %1183 = vmatprep.subr.bf16.mxu0 0
    %1184 = vmatpush1.bf16.msra.mxu0 0
    %1185 = vmatprep.subr.bf16.mxu0 0
    %1186 = vmatpush1.bf16.msra.mxu0 0
    %1187 = vmatprep.subr.bf16.mxu0 0
    %1188 = vmatpush1.bf16.msra.mxu0 0
    %1189 = vmatprep.subr.bf16.mxu0 0
    %1190 = vmatpush1.bf16.msra.mxu0 0
    %1191 = vmatprep.subr.bf16.mxu0 0
    %1192 = vmatpush1.bf16.msra.mxu0 %v421
    %1193 = vmatprep.subr.bf16.mxu0 0
    %1194 = vmatpush1.bf16.msra.mxu0 %v420
    %1195 = vmatprep.subr.bf16.mxu0 0
    %1196 = vmatpush2.bf16.msra.mxu0 0
    %1197 = vmatprep.subr.bf16.mxu0 0
    %1198 = vmatpush2.bf16.msra.mxu0 0
    %1199 = vmatprep.subr.bf16.mxu0 0
    %1200 = vmatpush2.bf16.msra.mxu0 0
    %1201 = vmatprep.subr.bf16.mxu0 0
    %1202 = vmatpush2.bf16.msra.mxu0 0
    %1203 = vmatprep.subr.bf16.mxu0 0
    %1204 = vmatpush2.bf16.msra.mxu0 0
    %1205 = vmatprep.subr.bf16.mxu0 0
    %1206 = vmatpush2.bf16.msra.mxu0 0
    %1207 = vmatprep.subr.bf16.mxu0 0
    %1208 = vmatpush2.bf16.msra.mxu0 0
    %1209 = vmatprep.subr.bf16.mxu0 0
    %1210 = vmatpush2.bf16.msra.mxu0 0
    %1211 = vmatprep.mubr.bf16.mxu0 0
    %1212 = vmatmul.mubr.bf16.gmra.mxu0 %v1177
    %v1213 = vpop.f32.mrf.mxu0
    %v1214 = vadd.f32 0.0, %v1213
    %v1215 = vpop.f32.mrf.mxu0
    %v1216 = vpop.f32.mrf.mxu0
    %v1217 = vpop.f32.mrf.mxu0
    %1218 = vdwg.mxu0
    %v1219 = vadd.f32 %v1171, %v1214
    %v1220 = vxor.u32 %v1219, 2147483648
    %v1221 = vmul.f32 %v1220, 1.442695
    %v1222 = vpow.pop %v1221
    %v1223 = vadd.f32 %v1222, 1.0
    %v1224 = vrcp.pop %v1223
    %v1225 = vmul.f32 1.0, %v1224
    %v1226 = vtanh.pop %v1219
    %v1227 = vmul.f32 %v1225, %v1058
    %1229 = vrot.lane.b32.xlu0 %v1226, 32
    %v1230 = vpop.permute.xlu0 %1229
    %v1232 = vmul.f32 %v1225, %v1230
    %1234 = vrot.lane.b32.xlu0 %v1232, 32
    %v1235 = vpop.permute.xlu0 %1234
    %v1237 = vadd.f32 %v1227, %v1235
    %v1238 = vtanh.pop %v1237
    %1240 = vrot.lane.b32.xlu0 %v1238, 32
    %v1241 = vpop.permute.xlu0 %1240
    %v1243 = vmul.f32 %v1225, %v1241
    %1245 = vrot.lane.b32.xlu0 %v1243, 64
    %v1246 = vpop.permute.xlu0 %1245
    %1249 = vrot.lane.b32.xlu0 %v1141, 96
    %v1250 = vpop.permute.xlu0 %1249
    %v1252 = vsel %vm424, %v1246, %v1250
    %v1253 = vpack.c.bf16 %v1252, %v1252
    %v1255 = vsel %vm169, %v1253, 0
    %1257 = vmatprep.subr.bf16.mxu0 0
    %1258 = vmatpush1.bf16.msra.mxu0 0
    %1259 = vmatprep.subr.bf16.mxu0 0
    %1260 = vmatpush1.bf16.msra.mxu0 0
    %1261 = vmatprep.subr.bf16.mxu0 0
    %1262 = vmatpush1.bf16.msra.mxu0 0
    %1263 = vmatprep.subr.bf16.mxu0 0
    %1264 = vmatpush1.bf16.msra.mxu0 0
    %1265 = vmatprep.subr.bf16.mxu0 0
    %1266 = vmatpush1.bf16.msra.mxu0 %v533
    %1267 = vmatprep.subr.bf16.mxu0 0
    %1268 = vmatpush1.bf16.msra.mxu0 %v532
    %1269 = vmatprep.subr.bf16.mxu0 0
    %1270 = vmatpush1.bf16.msra.mxu0 %v531
    %1271 = vmatprep.subr.bf16.mxu0 0
    %1272 = vmatpush1.bf16.msra.mxu0 %v530
    %1273 = vmatprep.subr.bf16.mxu0 0
    %1274 = vmatpush2.bf16.msra.mxu0 0
    %1275 = vmatprep.subr.bf16.mxu0 0
    %1276 = vmatpush2.bf16.msra.mxu0 0
    %1277 = vmatprep.subr.bf16.mxu0 0
    %1278 = vmatpush2.bf16.msra.mxu0 0
    %1279 = vmatprep.subr.bf16.mxu0 0
    %1280 = vmatpush2.bf16.msra.mxu0 0
    %1281 = vmatprep.subr.bf16.mxu0 0
    %1282 = vmatpush2.bf16.msra.mxu0 0
    %1283 = vmatprep.subr.bf16.mxu0 0
    %1284 = vmatpush2.bf16.msra.mxu0 0
    %1285 = vmatprep.subr.bf16.mxu0 0
    %1286 = vmatpush2.bf16.msra.mxu0 0
    %1287 = vmatprep.subr.bf16.mxu0 0
    %1288 = vmatpush2.bf16.msra.mxu0 0
    %1289 = vmatprep.mubr.bf16.mxu0 0
    %1290 = vmatmul.mubr.bf16.gmra.mxu0 %v1255
    %v1291 = vpop.f32.mrf.mxu0
    %v1292 = vadd.f32 %v512, %v1291
    %v1293 = vpop.f32.mrf.mxu0
    %v1294 = vpop.f32.mrf.mxu0
    %v1295 = vpop.f32.mrf.mxu0
    %1296 = vdwg.mxu0
    %v1297 = vxor.u32 %v1292, 2147483648
    %v1298 = vmul.f32 %v1297, 1.442695
    %v1299 = vpow.pop %v1298
    %v1300 = vadd.f32 %v1299, 1.0
    %v1301 = vrcp.pop %v1300
    %v1302 = vmul.f32 1.0, %v1301
    %v1303 = vtanh.pop %v1292
    %v1304 = vmul.f32 %v1302, %v1135
    %1306 = vrot.lane.b32.xlu0 %v1303, 32
    %v1307 = vpop.permute.xlu0 %1306
    %v1309 = vmul.f32 %v1302, %v1307
    %1311 = vrot.lane.b32.xlu0 %v1309, 32
    %v1312 = vpop.permute.xlu0 %1311
    %v1314 = vadd.f32 %v1304, %v1312
    %v1315 = vtanh.pop %v1314
    %1317 = vrot.lane.b32.xlu0 %v1315, 32
    %v1318 = vpop.permute.xlu0 %1317
    %v1320 = vmul.f32 %v1302, %v1318
    %s1321 = scalar_lea.vmem %s2, 32
    %v1322 = vld [vmem:[%s1321] sm:$0xff]
    %v1323 = vsub.f32 1.0, %v1322
    %1325 = vset.pattern.permute.xlu0 0
    %1326 = vperm.xlu0 %1325, %v1323
    %v1327 = vpop.permute.xlu0 %1326
    %v1329 = vmul.f32 %v1327, %v1141
    %1331 = vset.pattern.permute.xlu0 0
    %1332 = vperm.xlu0 %1331, %v1322
    %v1333 = vpop.permute.xlu0 %1332
    %v1335 = vmul.f32 %v1333, %v1320
    %v1336 = vadd.f32 %v1329, %v1335
    %vm1337 = vcmp.eq.s32.totalorder %v624, 4
    %v1338 = vsel %vm1337, 1, 0
    %1339 = vset.pattern.permute.xlu0 0
    %1340 = vperm.xlu0 %1339, %v1338
    %v1341 = vpop.permute.xlu0 %1340
    %vm1342 = vcmp.eq.s32.totalorder %v1341, 1
    %v1343 = vsel %vm1342, %v1336, 0.0
    %1345 = vrot.lane.b32.xlu0 %v1343, 96
    %v1346 = vpop.permute.xlu0 %1345
    %v1348 = vadd.f32 %v1169, %v1346
    %s1349 = scalar_lea.vmem [#allocation2], 40
    %v1350 = vld [vmem:[%s1349] sm:$0xff]
    %v1351 = vpack.c.bf16 %v1243, %v1243
    %1353 = vrot.lane.b32.xlu0 %v1351, 64
    %v1354 = vpop.permute.xlu0 %1353
    %v1356 = vsel %vm424, %v1354, 0
    %1358 = vmatprep.subr.bf16.mxu0 0
    %1359 = vmatpush1.bf16.msra.mxu0 0
    %1360 = vmatprep.subr.bf16.mxu0 0
    %1361 = vmatpush1.bf16.msra.mxu0 0
    %1362 = vmatprep.subr.bf16.mxu0 0
    %1363 = vmatpush1.bf16.msra.mxu0 0
    %1364 = vmatprep.subr.bf16.mxu0 0
    %1365 = vmatpush1.bf16.msra.mxu0 0
    %1366 = vmatprep.subr.bf16.mxu0 0
    %1367 = vmatpush1.bf16.msra.mxu0 0
    %1368 = vmatprep.subr.bf16.mxu0 0
    %1369 = vmatpush1.bf16.msra.mxu0 0
    %1370 = vmatprep.subr.bf16.mxu0 0
    %1371 = vmatpush1.bf16.msra.mxu0 %v421
    %1372 = vmatprep.subr.bf16.mxu0 0
    %1373 = vmatpush1.bf16.msra.mxu0 %v420
    %1374 = vmatprep.subr.bf16.mxu0 0
    %1375 = vmatpush2.bf16.msra.mxu0 0
    %1376 = vmatprep.subr.bf16.mxu0 0
    %1377 = vmatpush2.bf16.msra.mxu0 0
    %1378 = vmatprep.subr.bf16.mxu0 0
    %1379 = vmatpush2.bf16.msra.mxu0 0
    %1380 = vmatprep.subr.bf16.mxu0 0
    %1381 = vmatpush2.bf16.msra.mxu0 0
    %1382 = vmatprep.subr.bf16.mxu0 0
    %1383 = vmatpush2.bf16.msra.mxu0 0
    %1384 = vmatprep.subr.bf16.mxu0 0
    %1385 = vmatpush2.bf16.msra.mxu0 0
    %1386 = vmatprep.subr.bf16.mxu0 0
    %1387 = vmatpush2.bf16.msra.mxu0 0
    %1388 = vmatprep.subr.bf16.mxu0 0
    %1389 = vmatpush2.bf16.msra.mxu0 0
    %1390 = vmatprep.mubr.bf16.mxu0 0
    %1391 = vmatmul.mubr.bf16.gmra.mxu0 %v1356
    %v1392 = vpop.f32.mrf.mxu0
    %v1393 = vadd.f32 0.0, %v1392
    %v1394 = vpop.f32.mrf.mxu0
    %v1395 = vpop.f32.mrf.mxu0
    %v1396 = vpop.f32.mrf.mxu0
    %1397 = vdwg.mxu0
    %v1398 = vadd.f32 %v1350, %v1393
    %v1399 = vxor.u32 %v1398, 2147483648
    %v1400 = vmul.f32 %v1399, 1.442695
    %v1401 = vpow.pop %v1400
    %v1402 = vadd.f32 %v1401, 1.0
    %v1403 = vrcp.pop %v1402
    %v1404 = vmul.f32 1.0, %v1403
    %v1405 = vtanh.pop %v1398
    %v1406 = vmul.f32 %v1404, %v1237
    %1408 = vrot.lane.b32.xlu0 %v1405, 32
    %v1409 = vpop.permute.xlu0 %1408
    %v1411 = vmul.f32 %v1404, %v1409
    %1413 = vrot.lane.b32.xlu0 %v1411, 32
    %v1414 = vpop.permute.xlu0 %1413
    %v1416 = vadd.f32 %v1406, %v1414
    %v1417 = vtanh.pop %v1416
    %1419 = vrot.lane.b32.xlu0 %v1417, 32
    %v1420 = vpop.permute.xlu0 %1419
    %v1422 = vmul.f32 %v1404, %v1420
    %1424 = vrot.lane.b32.xlu0 %v1422, 64
    %v1425 = vpop.permute.xlu0 %1424
    %1428 = vrot.lane.b32.xlu0 %v1320, 96
    %v1429 = vpop.permute.xlu0 %1428
    %v1431 = vsel %vm424, %v1425, %v1429
    %v1432 = vpack.c.bf16 %v1431, %v1431
    %v1434 = vsel %vm169, %v1432, 0
    %1436 = vmatprep.subr.bf16.mxu0 0
    %1437 = vmatpush1.bf16.msra.mxu0 0
    %1438 = vmatprep.subr.bf16.mxu0 0
    %1439 = vmatpush1.bf16.msra.mxu0 0
    %1440 = vmatprep.subr.bf16.mxu0 0
    %1441 = vmatpush1.bf16.msra.mxu0 0
    %1442 = vmatprep.subr.bf16.mxu0 0
    %1443 = vmatpush1.bf16.msra.mxu0 0
    %1444 = vmatprep.subr.bf16.mxu0 0
    %1445 = vmatpush1.bf16.msra.mxu0 %v533
    %1446 = vmatprep.subr.bf16.mxu0 0
    %1447 = vmatpush1.bf16.msra.mxu0 %v532
    %1448 = vmatprep.subr.bf16.mxu0 0
    %1449 = vmatpush1.bf16.msra.mxu0 %v531
    %1450 = vmatprep.subr.bf16.mxu0 0
    %1451 = vmatpush1.bf16.msra.mxu0 %v530
    %1452 = vmatprep.subr.bf16.mxu0 0
    %1453 = vmatpush2.bf16.msra.mxu0 0
    %1454 = vmatprep.subr.bf16.mxu0 0
    %1455 = vmatpush2.bf16.msra.mxu0 0
    %1456 = vmatprep.subr.bf16.mxu0 0
    %1457 = vmatpush2.bf16.msra.mxu0 0
    %1458 = vmatprep.subr.bf16.mxu0 0
    %1459 = vmatpush2.bf16.msra.mxu0 0
    %1460 = vmatprep.subr.bf16.mxu0 0
    %1461 = vmatpush2.bf16.msra.mxu0 0
    %1462 = vmatprep.subr.bf16.mxu0 0
    %1463 = vmatpush2.bf16.msra.mxu0 0
    %1464 = vmatprep.subr.bf16.mxu0 0
    %1465 = vmatpush2.bf16.msra.mxu0 0
    %1466 = vmatprep.subr.bf16.mxu0 0
    %1467 = vmatpush2.bf16.msra.mxu0 0
    %1468 = vmatprep.mubr.bf16.mxu0 0
    %1469 = vmatmul.mubr.bf16.gmra.mxu0 %v1434
    %v1470 = vpop.f32.mrf.mxu0
    %v1471 = vadd.f32 %v512, %v1470
    %v1472 = vpop.f32.mrf.mxu0
    %v1473 = vpop.f32.mrf.mxu0
    %v1474 = vpop.f32.mrf.mxu0
    %1475 = vdwg.mxu0
    %v1476 = vxor.u32 %v1471, 2147483648
    %v1477 = vmul.f32 %v1476, 1.442695
    %v1478 = vpow.pop %v1477
    %v1479 = vadd.f32 %v1478, 1.0
    %v1480 = vrcp.pop %v1479
    %v1481 = vmul.f32 1.0, %v1480
    %v1482 = vtanh.pop %v1471
    %v1483 = vmul.f32 %v1481, %v1314
    %1485 = vrot.lane.b32.xlu0 %v1482, 32
    %v1486 = vpop.permute.xlu0 %1485
    %v1488 = vmul.f32 %v1481, %v1486
    %1490 = vrot.lane.b32.xlu0 %v1488, 32
    %v1491 = vpop.permute.xlu0 %1490
    %v1493 = vadd.f32 %v1483, %v1491
    %v1494 = vtanh.pop %v1493
    %1496 = vrot.lane.b32.xlu0 %v1494, 32
    %v1497 = vpop.permute.xlu0 %1496
    %v1499 = vmul.f32 %v1481, %v1497
    %s1500 = scalar_lea.vmem %s2, 40
    %v1501 = vld [vmem:[%s1500] sm:$0xff]
    %v1502 = vsub.f32 1.0, %v1501
    %1504 = vset.pattern.permute.xlu0 0
    %1505 = vperm.xlu0 %1504, %v1502
    %v1506 = vpop.permute.xlu0 %1505
    %v1508 = vmul.f32 %v1506, %v1320
    %1510 = vset.pattern.permute.xlu0 0
    %1511 = vperm.xlu0 %1510, %v1501
    %v1512 = vpop.permute.xlu0 %1511
    %v1514 = vmul.f32 %v1512, %v1499
    %v1515 = vadd.f32 %v1508, %v1514
    %vm1516 = vcmp.eq.s32.totalorder %v624, 5
    %v1517 = vsel %vm1516, 1, 0
    %1518 = vset.pattern.permute.xlu0 0
    %1519 = vperm.xlu0 %1518, %v1517
    %v1520 = vpop.permute.xlu0 %1519
    %vm1521 = vcmp.eq.s32.totalorder %v1520, 1
    %v1522 = vsel %vm1521, %v1515, 0.0
    %1524 = vrot.lane.b32.xlu0 %v1522, 96
    %v1525 = vpop.permute.xlu0 %1524
    %v1527 = vadd.f32 %v1348, %v1525
    %s1528 = scalar_lea.vmem [#allocation2], 48
    %v1529 = vld [vmem:[%s1528] sm:$0xff]
    %v1530 = vpack.c.bf16 %v1422, %v1422
    %1532 = vrot.lane.b32.xlu0 %v1530, 64
    %v1533 = vpop.permute.xlu0 %1532
    %v1535 = vsel %vm424, %v1533, 0
    %1537 = vmatprep.subr.bf16.mxu0 0
    %1538 = vmatpush1.bf16.msra.mxu0 0
    %1539 = vmatprep.subr.bf16.mxu0 0
    %1540 = vmatpush1.bf16.msra.mxu0 0
    %1541 = vmatprep.subr.bf16.mxu0 0
    %1542 = vmatpush1.bf16.msra.mxu0 0
    %1543 = vmatprep.subr.bf16.mxu0 0
    %1544 = vmatpush1.bf16.msra.mxu0 0
    %1545 = vmatprep.subr.bf16.mxu0 0
    %1546 = vmatpush1.bf16.msra.mxu0 0
    %1547 = vmatprep.subr.bf16.mxu0 0
    %1548 = vmatpush1.bf16.msra.mxu0 0
    %1549 = vmatprep.subr.bf16.mxu0 0
    %1550 = vmatpush1.bf16.msra.mxu0 %v421
    %1551 = vmatprep.subr.bf16.mxu0 0
    %1552 = vmatpush1.bf16.msra.mxu0 %v420
    %1553 = vmatprep.subr.bf16.mxu0 0
    %1554 = vmatpush2.bf16.msra.mxu0 0
    %1555 = vmatprep.subr.bf16.mxu0 0
    %1556 = vmatpush2.bf16.msra.mxu0 0
    %1557 = vmatprep.subr.bf16.mxu0 0
    %1558 = vmatpush2.bf16.msra.mxu0 0
    %1559 = vmatprep.subr.bf16.mxu0 0
    %1560 = vmatpush2.bf16.msra.mxu0 0
    %1561 = vmatprep.subr.bf16.mxu0 0
    %1562 = vmatpush2.bf16.msra.mxu0 0
    %1563 = vmatprep.subr.bf16.mxu0 0
    %1564 = vmatpush2.bf16.msra.mxu0 0
    %1565 = vmatprep.subr.bf16.mxu0 0
    %1566 = vmatpush2.bf16.msra.mxu0 0
    %1567 = vmatprep.subr.bf16.mxu0 0
    %1568 = vmatpush2.bf16.msra.mxu0 0
    %1569 = vmatprep.mubr.bf16.mxu0 0
    %1570 = vmatmul.mubr.bf16.gmra.mxu0 %v1535
    %v1571 = vpop.f32.mrf.mxu0
    %v1572 = vadd.f32 0.0, %v1571
    %v1573 = vpop.f32.mrf.mxu0
    %v1574 = vpop.f32.mrf.mxu0
    %v1575 = vpop.f32.mrf.mxu0
    %1576 = vdwg.mxu0
    %v1577 = vadd.f32 %v1529, %v1572
    %v1578 = vxor.u32 %v1577, 2147483648
    %v1579 = vmul.f32 %v1578, 1.442695
    %v1580 = vpow.pop %v1579
    %v1581 = vadd.f32 %v1580, 1.0
    %v1582 = vrcp.pop %v1581
    %v1583 = vmul.f32 1.0, %v1582
    %v1584 = vtanh.pop %v1577
    %v1585 = vmul.f32 %v1583, %v1416
    %1587 = vrot.lane.b32.xlu0 %v1584, 32
    %v1588 = vpop.permute.xlu0 %1587
    %v1590 = vmul.f32 %v1583, %v1588
    %1592 = vrot.lane.b32.xlu0 %v1590, 32
    %v1593 = vpop.permute.xlu0 %1592
    %v1595 = vadd.f32 %v1585, %v1593
    %v1596 = vtanh.pop %v1595
    %1598 = vrot.lane.b32.xlu0 %v1596, 32
    %v1599 = vpop.permute.xlu0 %1598
    %v1601 = vmul.f32 %v1583, %v1599
    %1603 = vrot.lane.b32.xlu0 %v1601, 64
    %v1604 = vpop.permute.xlu0 %1603
    %1607 = vrot.lane.b32.xlu0 %v1499, 96
    %v1608 = vpop.permute.xlu0 %1607
    %v1610 = vsel %vm424, %v1604, %v1608
    %v1611 = vpack.c.bf16 %v1610, %v1610
    %v1613 = vsel %vm169, %v1611, 0
    %1615 = vmatprep.subr.bf16.mxu0 0
    %1616 = vmatpush1.bf16.msra.mxu0 0
    %1617 = vmatprep.subr.bf16.mxu0 0
    %1618 = vmatpush1.bf16.msra.mxu0 0
    %1619 = vmatprep.subr.bf16.mxu0 0
    %1620 = vmatpush1.bf16.msra.mxu0 0
    %1621 = vmatprep.subr.bf16.mxu0 0
    %1622 = vmatpush1.bf16.msra.mxu0 0
    %1623 = vmatprep.subr.bf16.mxu0 0
    %1624 = vmatpush1.bf16.msra.mxu0 %v533
    %1625 = vmatprep.subr.bf16.mxu0 0
    %1626 = vmatpush1.bf16.msra.mxu0 %v532
    %1627 = vmatprep.subr.bf16.mxu0 0
    %1628 = vmatpush1.bf16.msra.mxu0 %v531
    %1629 = vmatprep.subr.bf16.mxu0 0
    %1630 = vmatpush1.bf16.msra.mxu0 %v530
    %1631 = vmatprep.subr.bf16.mxu0 0
    %1632 = vmatpush2.bf16.msra.mxu0 0
    %1633 = vmatprep.subr.bf16.mxu0 0
    %1634 = vmatpush2.bf16.msra.mxu0 0
    %1635 = vmatprep.subr.bf16.mxu0 0
    %1636 = vmatpush2.bf16.msra.mxu0 0
    %1637 = vmatprep.subr.bf16.mxu0 0
    %1638 = vmatpush2.bf16.msra.mxu0 0
    %1639 = vmatprep.subr.bf16.mxu0 0
    %1640 = vmatpush2.bf16.msra.mxu0 0
    %1641 = vmatprep.subr.bf16.mxu0 0
    %1642 = vmatpush2.bf16.msra.mxu0 0
    %1643 = vmatprep.subr.bf16.mxu0 0
    %1644 = vmatpush2.bf16.msra.mxu0 0
    %1645 = vmatprep.subr.bf16.mxu0 0
    %1646 = vmatpush2.bf16.msra.mxu0 0
    %1647 = vmatprep.mubr.bf16.mxu0 0
    %1648 = vmatmul.mubr.bf16.gmra.mxu0 %v1613
    %v1649 = vpop.f32.mrf.mxu0
    %v1650 = vadd.f32 %v512, %v1649
    %v1651 = vpop.f32.mrf.mxu0
    %v1652 = vpop.f32.mrf.mxu0
    %v1653 = vpop.f32.mrf.mxu0
    %1654 = vdwg.mxu0
    %v1655 = vxor.u32 %v1650, 2147483648
    %v1656 = vmul.f32 %v1655, 1.442695
    %v1657 = vpow.pop %v1656
    %v1658 = vadd.f32 %v1657, 1.0
    %v1659 = vrcp.pop %v1658
    %v1660 = vmul.f32 1.0, %v1659
    %v1661 = vtanh.pop %v1650
    %v1662 = vmul.f32 %v1660, %v1493
    %1664 = vrot.lane.b32.xlu0 %v1661, 32
    %v1665 = vpop.permute.xlu0 %1664
    %v1667 = vmul.f32 %v1660, %v1665
    %1669 = vrot.lane.b32.xlu0 %v1667, 32
    %v1670 = vpop.permute.xlu0 %1669
    %v1672 = vadd.f32 %v1662, %v1670
    %v1673 = vtanh.pop %v1672
    %1675 = vrot.lane.b32.xlu0 %v1673, 32
    %v1676 = vpop.permute.xlu0 %1675
    %v1678 = vmul.f32 %v1660, %v1676
    %s1679 = scalar_lea.vmem %s2, 48
    %v1680 = vld [vmem:[%s1679] sm:$0xff]
    %v1681 = vsub.f32 1.0, %v1680
    %1683 = vset.pattern.permute.xlu0 0
    %1684 = vperm.xlu0 %1683, %v1681
    %v1685 = vpop.permute.xlu0 %1684
    %v1687 = vmul.f32 %v1685, %v1499
    %1689 = vset.pattern.permute.xlu0 0
    %1690 = vperm.xlu0 %1689, %v1680
    %v1691 = vpop.permute.xlu0 %1690
    %v1693 = vmul.f32 %v1691, %v1678
    %v1694 = vadd.f32 %v1687, %v1693
    %vm1695 = vcmp.eq.s32.totalorder %v624, 6
    %v1696 = vsel %vm1695, 1, 0
    %1697 = vset.pattern.permute.xlu0 0
    %1698 = vperm.xlu0 %1697, %v1696
    %v1699 = vpop.permute.xlu0 %1698
    %vm1700 = vcmp.eq.s32.totalorder %v1699, 1
    %v1701 = vsel %vm1700, %v1694, 0.0
    %1703 = vrot.lane.b32.xlu0 %v1701, 96
    %v1704 = vpop.permute.xlu0 %1703
    %v1706 = vadd.f32 %v1527, %v1704
    %s1707 = scalar_lea.vmem [#allocation2], 56
    %v1708 = vld [vmem:[%s1707] sm:$0xff]
    %v1709 = vpack.c.bf16 %v1601, %v1601
    %1711 = vrot.lane.b32.xlu0 %v1709, 64
    %v1712 = vpop.permute.xlu0 %1711
    %v1714 = vsel %vm424, %v1712, 0
    %1716 = vmatprep.subr.bf16.mxu0 0
    %1717 = vmatpush1.bf16.msra.mxu0 0
    %1718 = vmatprep.subr.bf16.mxu0 0
    %1719 = vmatpush1.bf16.msra.mxu0 0
    %1720 = vmatprep.subr.bf16.mxu0 0
    %1721 = vmatpush1.bf16.msra.mxu0 0
    %1722 = vmatprep.subr.bf16.mxu0 0
    %1723 = vmatpush1.bf16.msra.mxu0 0
    %1724 = vmatprep.subr.bf16.mxu0 0
    %1725 = vmatpush1.bf16.msra.mxu0 0
    %1726 = vmatprep.subr.bf16.mxu0 0
    %1727 = vmatpush1.bf16.msra.mxu0 0
    %1728 = vmatprep.subr.bf16.mxu0 0
    %1729 = vmatpush1.bf16.msra.mxu0 %v421
    %1730 = vmatprep.subr.bf16.mxu0 0
    %1731 = vmatpush1.bf16.msra.mxu0 %v420
    %1732 = vmatprep.subr.bf16.mxu0 0
    %1733 = vmatpush2.bf16.msra.mxu0 0
    %1734 = vmatprep.subr.bf16.mxu0 0
    %1735 = vmatpush2.bf16.msra.mxu0 0
    %1736 = vmatprep.subr.bf16.mxu0 0
    %1737 = vmatpush2.bf16.msra.mxu0 0
    %1738 = vmatprep.subr.bf16.mxu0 0
    %1739 = vmatpush2.bf16.msra.mxu0 0
    %1740 = vmatprep.subr.bf16.mxu0 0
    %1741 = vmatpush2.bf16.msra.mxu0 0
    %1742 = vmatprep.subr.bf16.mxu0 0
    %1743 = vmatpush2.bf16.msra.mxu0 0
    %1744 = vmatprep.subr.bf16.mxu0 0
    %1745 = vmatpush2.bf16.msra.mxu0 0
    %1746 = vmatprep.subr.bf16.mxu0 0
    %1747 = vmatpush2.bf16.msra.mxu0 0
    %1748 = vmatprep.mubr.bf16.mxu0 0
    %1749 = vmatmul.mubr.bf16.gmra.mxu0 %v1714
    %v1750 = vpop.f32.mrf.mxu0
    %v1751 = vadd.f32 0.0, %v1750
    %v1752 = vpop.f32.mrf.mxu0
    %v1753 = vpop.f32.mrf.mxu0
    %v1754 = vpop.f32.mrf.mxu0
    %1755 = vdwg.mxu0
    %v1756 = vadd.f32 %v1708, %v1751
    %v1757 = vxor.u32 %v1756, 2147483648
    %v1758 = vmul.f32 %v1757, 1.442695
    %v1759 = vpow.pop %v1758
    %v1760 = vadd.f32 %v1759, 1.0
    %v1761 = vrcp.pop %v1760
    %v1762 = vmul.f32 1.0, %v1761
    %v1763 = vtanh.pop %v1756
    %v1764 = vmul.f32 %v1762, %v1595
    %1766 = vrot.lane.b32.xlu0 %v1763, 32
    %v1767 = vpop.permute.xlu0 %1766
    %v1769 = vmul.f32 %v1762, %v1767
    %1771 = vrot.lane.b32.xlu0 %v1769, 32
    %v1772 = vpop.permute.xlu0 %1771
    %v1774 = vadd.f32 %v1764, %v1772
    %v1775 = vtanh.pop %v1774
    %1777 = vrot.lane.b32.xlu0 %v1775, 32
    %v1778 = vpop.permute.xlu0 %1777
    %v1780 = vmul.f32 %v1762, %v1778
    %1782 = vrot.lane.b32.xlu0 %v1780, 64
    %v1783 = vpop.permute.xlu0 %1782
    %1786 = vrot.lane.b32.xlu0 %v1678, 96
    %v1787 = vpop.permute.xlu0 %1786
    %v1789 = vsel %vm424, %v1783, %v1787
    %v1790 = vpack.c.bf16 %v1789, %v1789
    %v1792 = vsel %vm169, %v1790, 0
    %1794 = vmatprep.subr.bf16.mxu0 0
    %1795 = vmatpush1.bf16.msra.mxu0 0
    %1796 = vmatprep.subr.bf16.mxu0 0
    %1797 = vmatpush1.bf16.msra.mxu0 0
    %1798 = vmatprep.subr.bf16.mxu0 0
    %1799 = vmatpush1.bf16.msra.mxu0 0
    %1800 = vmatprep.subr.bf16.mxu0 0
    %1801 = vmatpush1.bf16.msra.mxu0 0
    %1802 = vmatprep.subr.bf16.mxu0 0
    %1803 = vmatpush1.bf16.msra.mxu0 %v533
    %1804 = vmatprep.subr.bf16.mxu0 0
    %1805 = vmatpush1.bf16.msra.mxu0 %v532
    %1806 = vmatprep.subr.bf16.mxu0 0
    %1807 = vmatpush1.bf16.msra.mxu0 %v531
    %1808 = vmatprep.subr.bf16.mxu0 0
    %1809 = vmatpush1.bf16.msra.mxu0 %v530
    %1810 = vmatprep.subr.bf16.mxu0 0
    %1811 = vmatpush2.bf16.msra.mxu0 0
    %1812 = vmatprep.subr.bf16.mxu0 0
    %1813 = vmatpush2.bf16.msra.mxu0 0
    %1814 = vmatprep.subr.bf16.mxu0 0
    %1815 = vmatpush2.bf16.msra.mxu0 0
    %1816 = vmatprep.subr.bf16.mxu0 0
    %1817 = vmatpush2.bf16.msra.mxu0 0
    %1818 = vmatprep.subr.bf16.mxu0 0
    %1819 = vmatpush2.bf16.msra.mxu0 0
    %1820 = vmatprep.subr.bf16.mxu0 0
    %1821 = vmatpush2.bf16.msra.mxu0 0
    %1822 = vmatprep.subr.bf16.mxu0 0
    %1823 = vmatpush2.bf16.msra.mxu0 0
    %1824 = vmatprep.subr.bf16.mxu0 0
    %1825 = vmatpush2.bf16.msra.mxu0 0
    %1826 = vmatprep.mubr.bf16.mxu0 0
    %1827 = vmatmul.mubr.bf16.gmra.mxu0 %v1792
    %v1828 = vpop.f32.mrf.mxu0
    %v1829 = vadd.f32 %v512, %v1828
    %v1830 = vpop.f32.mrf.mxu0
    %v1831 = vpop.f32.mrf.mxu0
    %v1832 = vpop.f32.mrf.mxu0
    %1833 = vdwg.mxu0
    %v1834 = vxor.u32 %v1829, 2147483648
    %v1835 = vmul.f32 %v1834, 1.442695
    %v1836 = vpow.pop %v1835
    %v1837 = vadd.f32 %v1836, 1.0
    %v1838 = vrcp.pop %v1837
    %v1839 = vmul.f32 1.0, %v1838
    %v1840 = vtanh.pop %v1829
    %v1841 = vmul.f32 %v1839, %v1672
    %1843 = vrot.lane.b32.xlu0 %v1840, 32
    %v1844 = vpop.permute.xlu0 %1843
    %v1846 = vmul.f32 %v1839, %v1844
    %1848 = vrot.lane.b32.xlu0 %v1846, 32
    %v1849 = vpop.permute.xlu0 %1848
    %v1851 = vadd.f32 %v1841, %v1849
    %v1852 = vtanh.pop %v1851
    %1854 = vrot.lane.b32.xlu0 %v1852, 32
    %v1855 = vpop.permute.xlu0 %1854
    %v1857 = vmul.f32 %v1839, %v1855
    %s1858 = scalar_lea.vmem %s2, 56
    %v1859 = vld [vmem:[%s1858] sm:$0xff]
    %v1860 = vsub.f32 1.0, %v1859
    %1862 = vset.pattern.permute.xlu0 0
    %1863 = vperm.xlu0 %1862, %v1860
    %v1864 = vpop.permute.xlu0 %1863
    %v1866 = vmul.f32 %v1864, %v1678
    %1868 = vset.pattern.permute.xlu0 0
    %1869 = vperm.xlu0 %1868, %v1859
    %v1870 = vpop.permute.xlu0 %1869
    %v1872 = vmul.f32 %v1870, %v1857
    %v1873 = vadd.f32 %v1866, %v1872
    %vm1874 = vcmp.eq.s32.totalorder %v624, 7
    %v1875 = vsel %vm1874, 1, 0
    %1876 = vset.pattern.permute.xlu0 0
    %1877 = vperm.xlu0 %1876, %v1875
    %v1878 = vpop.permute.xlu0 %1877
    %vm1879 = vcmp.eq.s32.totalorder %v1878, 1
    %v1880 = vsel %vm1879, %v1873, 0.0
    %1882 = vrot.lane.b32.xlu0 %v1880, 96
    %v1883 = vpop.permute.xlu0 %1882
    %v1885 = vadd.f32 %v1706, %v1883
    %v1886 = vpack.c.bf16 %v1885, %v1885
    %v1887 = vld [vmem:[%s15] sm:$0xf]
    %v1888 = vld [vmem:[%s15 + $0x4] sm:$0xf]
    %v1889 = vld [vmem:[%s15 + $0x8] sm:$0xf]
    %v1890 = vld [vmem:[%s15 + $0xc] sm:$0xf]
    %v1891 = vld [vmem:[%s18] sm:$0x1]
    %v1893 = vlaneseq
    %v1894 = vshrl.u32 %v1893, 7
    %v1895 = vsub.s32 0, %v1894
    %v1896 = vrot.slane %v1891, %v1895
    %1899 = vrot.lane.b32.xlu0 %v1886, 96
    %v1900 = vpop.permute.xlu0 %1899
    %v1905 = vunpack.c.l.b16 %v1887
    %v1906 = vunpack.c.l.b16 %v1888
    %v1907 = vunpack.c.l.b16 %v1889
    %v1908 = vunpack.c.l.b16 %v1890
    %v1909 = vpack.c.b16 %v1906, %v1905
    %v1910 = vpack.c.b16 %v1908, %v1907
    %v1914 = vsel %vm424, %v1900, 0
    %1916 = vmatprep.subr.bf16.mxu0 0
    %1917 = vmatpush1.bf16.msra.mxu0 0
    %1918 = vmatprep.subr.bf16.mxu0 0
    %1919 = vmatpush1.bf16.msra.mxu0 0
    %1920 = vmatprep.subr.bf16.mxu0 0
    %1921 = vmatpush1.bf16.msra.mxu0 0
    %1922 = vmatprep.subr.bf16.mxu0 0
    %1923 = vmatpush1.bf16.msra.mxu0 0
    %1924 = vmatprep.subr.bf16.mxu0 0
    %1925 = vmatpush1.bf16.msra.mxu0 0
    %1926 = vmatprep.subr.bf16.mxu0 0
    %1927 = vmatpush1.bf16.msra.mxu0 0
    %1928 = vmatprep.subr.bf16.mxu0 0
    %1929 = vmatpush1.bf16.msra.mxu0 %v1910
    %1930 = vmatprep.subr.bf16.mxu0 0
    %1931 = vmatpush1.bf16.msra.mxu0 %v1909
    %1932 = vmatprep.subr.bf16.mxu0 0
    %1933 = vmatpush2.bf16.msra.mxu0 0
    %1934 = vmatprep.subr.bf16.mxu0 0
    %1935 = vmatpush2.bf16.msra.mxu0 0
    %1936 = vmatprep.subr.bf16.mxu0 0
    %1937 = vmatpush2.bf16.msra.mxu0 0
    %1938 = vmatprep.subr.bf16.mxu0 0
    %1939 = vmatpush2.bf16.msra.mxu0 0
    %1940 = vmatprep.subr.bf16.mxu0 0
    %1941 = vmatpush2.bf16.msra.mxu0 0
    %1942 = vmatprep.subr.bf16.mxu0 0
    %1943 = vmatpush2.bf16.msra.mxu0 0
    %1944 = vmatprep.subr.bf16.mxu0 0
    %1945 = vmatpush2.bf16.msra.mxu0 0
    %1946 = vmatprep.subr.bf16.mxu0 0
    %1947 = vmatpush2.bf16.msra.mxu0 0
    %1948 = vmatprep.mubr.bf16.mxu0 0
    %1949 = vmatmul.mubr.bf16.gmra.mxu0 %v1914
    %v1950 = vpop.f32.mrf.mxu0
    %v1951 = vadd.f32 %v1896, %v1950
    %v1952 = vpop.f32.mrf.mxu0
    %v1953 = vpop.f32.mrf.mxu0
    %v1954 = vpop.f32.mrf.mxu0
    %1955 = vdwg.mxu0
    %v1956 = vtanh.pop %v1951
    %v1957 = vpack.c.bf16 %v1956, %v1956
    %v1958 = vld [vmem:[%s16] sm:$0xf]
    %v1959 = vld [vmem:[%s16 + $0x4] sm:$0xf]
    %v1960 = vld [vmem:[%s16 + $0x8] sm:$0xf]
    %v1961 = vld [vmem:[%s16 + $0xc] sm:$0xf]
    %v1962 = vld [vmem:[%s19] sm:$0x1]
    %v1964 = vlaneseq
    %v1965 = vshrl.u32 %v1964, 7
    %v1966 = vsub.s32 0, %v1965
    %v1967 = vrot.slane %v1962, %v1966
    %v1973 = vunpack.c.l.b16 %v1958
    %v1974 = vunpack.c.l.b16 %v1959
    %v1975 = vunpack.c.l.b16 %v1960
    %v1976 = vunpack.c.l.b16 %v1961
    %v1977 = vpack.c.b16 %v1974, %v1973
    %v1978 = vpack.c.b16 %v1976, %v1975
    %v1982 = vsel %vm424, %v1957, 0
    %1984 = vmatprep.subr.bf16.mxu0 0
    %1985 = vmatpush1.bf16.msra.mxu0 0
    %1986 = vmatprep.subr.bf16.mxu0 0
    %1987 = vmatpush1.bf16.msra.mxu0 0
    %1988 = vmatprep.subr.bf16.mxu0 0
    %1989 = vmatpush1.bf16.msra.mxu0 0
    %1990 = vmatprep.subr.bf16.mxu0 0
    %1991 = vmatpush1.bf16.msra.mxu0 0
    %1992 = vmatprep.subr.bf16.mxu0 0
    %1993 = vmatpush1.bf16.msra.mxu0 0
    %1994 = vmatprep.subr.bf16.mxu0 0
    %1995 = vmatpush1.bf16.msra.mxu0 0
    %1996 = vmatprep.subr.bf16.mxu0 0
    %1997 = vmatpush1.bf16.msra.mxu0 %v1978
    %1998 = vmatprep.subr.bf16.mxu0 0
    %1999 = vmatpush1.bf16.msra.mxu0 %v1977
    %2000 = vmatprep.subr.bf16.mxu0 0
    %2001 = vmatpush2.bf16.msra.mxu0 0
    %2002 = vmatprep.subr.bf16.mxu0 0
    %2003 = vmatpush2.bf16.msra.mxu0 0
    %2004 = vmatprep.subr.bf16.mxu0 0
    %2005 = vmatpush2.bf16.msra.mxu0 0
    %2006 = vmatprep.subr.bf16.mxu0 0
    %2007 = vmatpush2.bf16.msra.mxu0 0
    %2008 = vmatprep.subr.bf16.mxu0 0
    %2009 = vmatpush2.bf16.msra.mxu0 0
    %2010 = vmatprep.subr.bf16.mxu0 0
    %2011 = vmatpush2.bf16.msra.mxu0 0
    %2012 = vmatprep.subr.bf16.mxu0 0
    %2013 = vmatpush2.bf16.msra.mxu0 0
    %2014 = vmatprep.subr.bf16.mxu0 0
    %2015 = vmatpush2.bf16.msra.mxu0 0
    %2016 = vmatprep.mubr.bf16.mxu0 0
    %2017 = vmatmul.mubr.bf16.gmra.mxu0 %v1982
    %v2018 = vpop.f32.mrf.mxu0
    %v2019 = vadd.f32 %v1967, %v2018
    %v2020 = vpop.f32.mrf.mxu0
    %v2021 = vpop.f32.mrf.mxu0
    %v2022 = vpop.f32.mrf.mxu0
    %2023 = vdwg.mxu0
    %v2024 = vtanh.pop %v2019
    %v2025 = vpack.c.bf16 %v2024, %v2024
    %v2026 = vld [vmem:[%s17] sm:$0xf]
    %v2027 = vld [vmem:[%s17 + $0x4] sm:$0xf]
    %v2028 = vld [vmem:[%s17 + $0x8] sm:$0xf]
    %v2029 = vld [vmem:[%s17 + $0xc] sm:$0xf]
    %v2030 = vld [vmem:[%s20] sm:$0x1]
    %v2032 = vlaneseq
    %v2033 = vshrl.u32 %v2032, 7
    %v2034 = vsub.s32 0, %v2033
    %v2035 = vrot.slane %v2030, %v2034
    %v2041 = vunpack.c.l.b16 %v2026
    %v2042 = vunpack.c.l.b16 %v2027
    %v2043 = vunpack.c.l.b16 %v2028
    %v2044 = vunpack.c.l.b16 %v2029
    %v2045 = vpack.c.b16 %v2042, %v2041
    %v2046 = vpack.c.b16 %v2044, %v2043
    %v2050 = vsel %vm424, %v2025, 0
    %2052 = vmatprep.subr.bf16.mxu0 0
    %2053 = vmatpush1.bf16.msra.mxu0 0
    %2054 = vmatprep.subr.bf16.mxu0 0
    %2055 = vmatpush1.bf16.msra.mxu0 0
    %2056 = vmatprep.subr.bf16.mxu0 0
    %2057 = vmatpush1.bf16.msra.mxu0 0
    %2058 = vmatprep.subr.bf16.mxu0 0
    %2059 = vmatpush1.bf16.msra.mxu0 0
    %2060 = vmatprep.subr.bf16.mxu0 0
    %2061 = vmatpush1.bf16.msra.mxu0 0
    %2062 = vmatprep.subr.bf16.mxu0 0
    %2063 = vmatpush1.bf16.msra.mxu0 0
    %2064 = vmatprep.subr.bf16.mxu0 0
    %2065 = vmatpush1.bf16.msra.mxu0 %v2046
    %2066 = vmatprep.subr.bf16.mxu0 0
    %2067 = vmatpush1.bf16.msra.mxu0 %v2045
    %2068 = vmatprep.subr.bf16.mxu0 0
    %2069 = vmatpush2.bf16.msra.mxu0 0
    %2070 = vmatprep.subr.bf16.mxu0 0
    %2071 = vmatpush2.bf16.msra.mxu0 0
    %2072 = vmatprep.subr.bf16.mxu0 0
    %2073 = vmatpush2.bf16.msra.mxu0 0
    %2074 = vmatprep.subr.bf16.mxu0 0
    %2075 = vmatpush2.bf16.msra.mxu0 0
    %2076 = vmatprep.subr.bf16.mxu0 0
    %2077 = vmatpush2.bf16.msra.mxu0 0
    %2078 = vmatprep.subr.bf16.mxu0 0
    %2079 = vmatpush2.bf16.msra.mxu0 0
    %2080 = vmatprep.subr.bf16.mxu0 0
    %2081 = vmatpush2.bf16.msra.mxu0 0
    %2082 = vmatprep.subr.bf16.mxu0 0
    %2083 = vmatpush2.bf16.msra.mxu0 0
    %2084 = vmatprep.mubr.bf16.mxu0 0
    %2085 = vmatmul.mubr.bf16.gmra.mxu0 %v2050
    %v2086 = vpop.f32.mrf.mxu0
    %v2087 = vadd.f32 %v2035, %v2086
    %v2088 = vpop.f32.mrf.mxu0
    %v2089 = vpop.f32.mrf.mxu0
    %v2090 = vpop.f32.mrf.mxu0
    %2091 = vdwg.mxu0
    %2092 = vst [vmem:[#allocation3] sm:$0xff] %v2087
    // Predicated region
    $region86: #{tpu_custom_call.1} parent=1 // pred_check
      _
    $region87: #{tpu_custom_call.1} parent=1 // pred_check_branch
      %2094 = sbr.rel (0) target = $region89
    $region88: #{tpu_custom_call.1} parent=1 // pred_region
      %s2096 = ssub.s32 128, 128
      %2097 = vsyncadd [#allocation4], %s2096
      %s2099 = sshll.u32 [#allocation3], 4
      %s2100 = int_to_ptr.vmem [resolvable:$true] %s2099
      %2102 = dma.vmem_to_hbm [thread:$0]  %s2100, 128, %s21, [#allocation4]
    $region89: #{tpu_custom_call.1} parent=1 // pred_fallthru
      _
    // Predicated region
    $region90: #{tpu_custom_call.1} parent=1 // pred_check
      _
    $region91: #{tpu_custom_call.1} parent=1 // pred_check_branch
      %2104 = sbr.rel (0) target = $region93
    $region92: #{tpu_custom_call.1} parent=1 // pred_region
      %2105 = dma.done [#allocation4], 128
    $region93: #{tpu_custom_call.1} parent=1 // pred_fallthru
      _
    %2106 = vsyncpa [#allocation4], 1

</llo_original>
